<compile_context>
chip_gen: v6e
topology: v6e:2x2x1
jax: 0.10.0
libtpu: 0.0.40
codegen_flags: <defaults>
</compile_context>

<pallas_src>
import jax
import jax.numpy as jnp
from jax.experimental import pallas as pl
from jax.experimental.pallas import tpu as pltpu

IN_DIM = 28 * 28        # 784
HID = 512
OUT_DIM = 10
OUT_PAD = 128           # lane-dense padded fc3 width


def mnist_mlp_kernel(x_ref, w1_ref, b1_ref, w2_ref, b2_ref, w3_ref, b3_ref, o_ref):
    # fc1 + relu   (bf16 inputs, f32 MXU accumulation)
    h1 = jnp.dot(x_ref[...], w1_ref[...], preferred_element_type=jnp.float32)
    h1 = jnp.maximum(h1 + b1_ref[...], 0.0).astype(jnp.bfloat16)
    # fc2 + relu
    h2 = jnp.dot(h1, w2_ref[...], preferred_element_type=jnp.float32)
    h2 = jnp.maximum(h2 + b2_ref[...], 0.0).astype(jnp.bfloat16)
    # fc3 (padded to 128 lanes) + softmax over dim=1
    logits = jnp.dot(h2, w3_ref[...], preferred_element_type=jnp.float32) + b3_ref[...]
    m = jnp.max(logits, axis=1, keepdims=True)
    e = jnp.exp(logits - m)
    inv = pl.reciprocal(jnp.sum(e, axis=1, keepdims=True), approx=True)
    o_ref[...] = e * inv


def mnist_net_forward(x_nchw, params, *, tm=256):
    """x_nchw: (N, 1, 28, 28) float32.  Returns softmax probabilities (N, 10)."""
    w1, b1, w2, b2, w3, b3 = params
    n = x_nchw.shape[0]

    # Same semantics as torch .view(-1, 784); cast activations to bf16.
    x = x_nchw.reshape(n, IN_DIM).astype(jnp.bfloat16)

    # Pad batch up to a multiple of the tile so the grid is exact.
    n_pad = ((n + tm - 1) // tm) * tm
    if n_pad != n:
        x = jnp.pad(x, ((0, n_pad - n), (0, 0)))

    # bf16 weights; biases stay f32 (added to f32 accumulators).
    w1b = w1.astype(jnp.bfloat16)
    w2b = w2.astype(jnp.bfloat16)

    # Lane-dense fc3: zero-pad weights to 128 columns, bias pad = -1e30 so the
    # extra columns exp() to 0 and do not perturb the softmax.
    w3p = jnp.zeros((HID, OUT_PAD), jnp.float32).at[:, :OUT_DIM].set(w3).astype(jnp.bfloat16)
    b3p = jnp.full((1, OUT_PAD), -1e30, jnp.float32).at[:, :OUT_DIM].set(b3)

    grid = (n_pad // tm,)

    flops = 2 * n_pad * (IN_DIM * HID + HID * HID + HID * OUT_PAD)
    bytes_accessed = (
        n_pad * IN_DIM * 2                                   # x (bf16)
        + (IN_DIM * HID + HID * HID + HID * OUT_PAD) * 2     # weights (bf16)
        + (HID + HID + OUT_PAD) * 4                          # biases (f32)
        + n_pad * OUT_PAD * 4                                # output (f32)
    )
    cost = pl.CostEstimate(flops=flops,
                           transcendentals=n_pad * OUT_PAD,
                           bytes_accessed=bytes_accessed)

    probs_pad = pl.pallas_call(
        mnist_mlp_kernel,
        out_shape=jax.ShapeDtypeStruct((n_pad, OUT_PAD), jnp.float32),
        grid=grid,
        in_specs=[
            pl.BlockSpec((tm, IN_DIM), lambda i: (i, 0)),       # x tile (pipelined)
            pl.BlockSpec((IN_DIM, HID), lambda i: (0, 0)),      # w1 (VMEM-resident)
            pl.BlockSpec((1, HID), lambda i: (0, 0)),           # b1
            pl.BlockSpec((HID, HID), lambda i: (0, 0)),         # w2
            pl.BlockSpec((1, HID), lambda i: (0, 0)),           # b2
            pl.BlockSpec((HID, OUT_PAD), lambda i: (0, 0)),     # w3 (padded)
            pl.BlockSpec((1, OUT_PAD), lambda i: (0, 0)),       # b3 (padded)
        ],
        out_specs=pl.BlockSpec((tm, OUT_PAD), lambda i: (i, 0)),
        compiler_params=pltpu.CompilerParams(
            dimension_semantics=("parallel",),
            vmem_limit_bytes=16 << 20,
        ),
        cost_estimate=cost,
    )(x, w1b, b1, w2b, b2, w3p, b3p)

    return probs_pad[:n, :OUT_DIM]


def init_params(key):
    """Deterministic init mimicking torch.nn.Linear default (uniform +/- 1/sqrt(fan_in)).
    Weights stored as (in_features, out_features)."""
    dims = [(IN_DIM, HID), (HID, HID), (HID, OUT_DIM)]
    params = []
    for i, (fan_in, fan_out) in enumerate(dims):
        kw, kb = jax.random.split(jax.random.fold_in(key, i))
        bound = 1.0 / (fan_in ** 0.5)
        w = jax.random.uniform(kw, (fan_in, fan_out), jnp.float32, -bound, bound)
        b = jax.random.uniform(kb, (1, fan_out), jnp.float32, -bound, bound)
        params += [w, b]
    return tuple(params)


if __name__ == "__main__":
    key = jax.random.PRNGKey(0)
    k_x, k_p = jax.random.split(key)

    # Small batch of MNIST-shaped inputs (NCHW like PyTorch).
    x = jax.random.normal(k_x, (8, 1, 28, 28), jnp.float32)
    params = init_params(k_p)

    probs = mnist_net_forward(x, params)
    probs = jax.block_until_ready(probs)

    # Sanity: correct shape, finite, softmax rows sum to ~1 (bf16 weights +
    # approx reciprocal => loose tolerance).
    assert probs.shape == (8, 10)
    assert bool(jnp.all(jnp.isfinite(probs)))
    assert bool(jnp.all(jnp.abs(jnp.sum(probs, axis=1) - 1.0) < 1e-2))

    print("KERNEL_OK")
</pallas_src>

<mosaic_0001>
module attributes {stable_mosaic.version = 11 : i64} {
  func.func @mnist_mlp_kernel(%arg0: i32, %arg1: memref<256x784xbf16, #tpu.memory_space<vmem>>, %arg2: memref<784x512xbf16, #tpu.memory_space<vmem>>, %arg3: memref<1x512xf32, #tpu.memory_space<vmem>>, %arg4: memref<512x512xbf16, #tpu.memory_space<vmem>>, %arg5: memref<1x512xf32, #tpu.memory_space<vmem>>, %arg6: memref<512x128xbf16, #tpu.memory_space<vmem>>, %arg7: memref<1x128xf32, #tpu.memory_space<vmem>>, %arg8: memref<256x128xf32, #tpu.memory_space<vmem>>) attributes {dimension_semantics = [#tpu.dimension_semantics<parallel>], iteration_bounds = array<i64: 1>, scalar_prefetch = 0 : i64, scratch_operands = 0 : i64, tpu.core_type = #tpu.core_type<tc>, window_params = [{transform_indices = @transform_0, window_bounds = array<i64: 256, 784>}, {pipeline_mode = #tpu.pipeline_mode<synchronous>, transform_indices = @transform_1, window_bounds = array<i64: 784, 512>}, {pipeline_mode = #tpu.pipeline_mode<synchronous>, transform_indices = @transform_2, window_bounds = array<i64: 1, 512>}, {pipeline_mode = #tpu.pipeline_mode<synchronous>, transform_indices = @transform_3, window_bounds = array<i64: 512, 512>}, {pipeline_mode = #tpu.pipeline_mode<synchronous>, transform_indices = @transform_4, window_bounds = array<i64: 1, 512>}, {pipeline_mode = #tpu.pipeline_mode<synchronous>, transform_indices = @transform_5, window_bounds = array<i64: 512, 128>}, {pipeline_mode = #tpu.pipeline_mode<synchronous>, transform_indices = @transform_6, window_bounds = array<i64: 1, 128>}, {transform_indices = @transform_7, window_bounds = array<i64: 256, 128>}]} {
    %c0 = arith.constant 0 : index
    %c0_0 = arith.constant 0 : index
    %0 = vector.load %arg1[%c0, %c0_0] : memref<256x784xbf16, #tpu.memory_space<vmem>>, vector<256x784xbf16>
    %c0_1 = arith.constant 0 : index
    %c0_2 = arith.constant 0 : index
    %1 = vector.load %arg2[%c0_1, %c0_2] : memref<784x512xbf16, #tpu.memory_space<vmem>>, vector<784x512xbf16>
    %cst = arith.constant dense<0.000000e+00> : vector<256x512xf32>
    %2 = tpu.matmul %0, %1, %cst {dimension_numbers = #tpu.dot_dimension_numbers<[1], [0], [0], [1], [0, 0, 1, 1], [], []>} : vector<256x784xbf16>, vector<784x512xbf16>, vector<256x512xf32> -> vector<256x512xf32>
    %c0_3 = arith.constant 0 : index
    %c0_4 = arith.constant 0 : index
    %3 = vector.load %arg3[%c0_3, %c0_4] : memref<1x512xf32, #tpu.memory_space<vmem>>, vector<1x512xf32>
    %4 = vector.broadcast %3 : vector<1x512xf32> to vector<256x512xf32>
    %5 = arith.addf %2, %4 : vector<256x512xf32>
    %cst_5 = arith.constant 0.000000e+00 : f32
    %6 = vector.broadcast %cst_5 : f32 to vector<256x512xf32>
    %7 = arith.maximumf %5, %6 : vector<256x512xf32>
    %8 = arith.truncf %7 : vector<256x512xf32> to vector<256x512xbf16>
    %c0_6 = arith.constant 0 : index
    %c0_7 = arith.constant 0 : index
    %9 = vector.load %arg4[%c0_6, %c0_7] : memref<512x512xbf16, #tpu.memory_space<vmem>>, vector<512x512xbf16>
    %cst_8 = arith.constant dense<0.000000e+00> : vector<256x512xf32>
    %10 = tpu.matmul %8, %9, %cst_8 {dimension_numbers = #tpu.dot_dimension_numbers<[1], [0], [0], [1], [0, 0, 1, 1], [], []>} : vector<256x512xbf16>, vector<512x512xbf16>, vector<256x512xf32> -> vector<256x512xf32>
    %c0_9 = arith.constant 0 : index
    %c0_10 = arith.constant 0 : index
    %11 = vector.load %arg5[%c0_9, %c0_10] : memref<1x512xf32, #tpu.memory_space<vmem>>, vector<1x512xf32>
    %12 = vector.broadcast %11 : vector<1x512xf32> to vector<256x512xf32>
    %13 = arith.addf %10, %12 : vector<256x512xf32>
    %cst_11 = arith.constant 0.000000e+00 : f32
    %14 = vector.broadcast %cst_11 : f32 to vector<256x512xf32>
    %15 = arith.maximumf %13, %14 : vector<256x512xf32>
    %16 = arith.truncf %15 : vector<256x512xf32> to vector<256x512xbf16>
    %c0_12 = arith.constant 0 : index
    %c0_13 = arith.constant 0 : index
    %17 = vector.load %arg6[%c0_12, %c0_13] : memref<512x128xbf16, #tpu.memory_space<vmem>>, vector<512x128xbf16>
    %cst_14 = arith.constant dense<0.000000e+00> : vector<256x128xf32>
    %18 = tpu.matmul %16, %17, %cst_14 {dimension_numbers = #tpu.dot_dimension_numbers<[1], [0], [0], [1], [0, 0, 1, 1], [], []>} : vector<256x512xbf16>, vector<512x128xbf16>, vector<256x128xf32> -> vector<256x128xf32>
    %c0_15 = arith.constant 0 : index
    %c0_16 = arith.constant 0 : index
    %19 = vector.load %arg7[%c0_15, %c0_16] : memref<1x128xf32, #tpu.memory_space<vmem>>, vector<1x128xf32>
    %20 = vector.broadcast %19 : vector<1x128xf32> to vector<256x128xf32>
    %21 = arith.addf %18, %20 : vector<256x128xf32>
    %cst_17 = arith.constant dense<0xFF800000> : vector<256xf32>
    %22 = vector.multi_reduction <maximumf>, %21, %cst_17 [1] : vector<256x128xf32> to vector<256xf32>
    %23 = vector.shape_cast %22 : vector<256xf32> to vector<256x1xf32>
    %24 = vector.broadcast %23 : vector<256x1xf32> to vector<256x128xf32>
    %25 = arith.subf %21, %24 : vector<256x128xf32>
    %26 = math.exp %25 : vector<256x128xf32>
    %cst_18 = arith.constant dense<0.000000e+00> : vector<256xf32>
    %27 = vector.multi_reduction <add>, %26, %cst_18 [1] : vector<256x128xf32> to vector<256xf32>
    %28 = vector.shape_cast %27 : vector<256xf32> to vector<256x1xf32>
    %29 = tpu.reciprocal %28 {approx = true} : vector<256x1xf32> -> vector<256x1xf32>
    %30 = vector.broadcast %29 : vector<256x1xf32> to vector<256x128xf32>
    %31 = arith.mulf %26, %30 : vector<256x128xf32>
    %c0_19 = arith.constant 0 : index
    %c0_20 = arith.constant 0 : index
    %32 = vector.load %arg8[%c0_19, %c0_20] : memref<256x128xf32, #tpu.memory_space<vmem>>, vector<256x128xf32>
    tpu.vector_store %arg8[%c0_19, %c0_20], %31 {strides = array<i32>} : memref<256x128xf32, #tpu.memory_space<vmem>>, vector<256x128xf32>,
    return
  }
  func.func @transform_0(%arg0: i32) -> (i32, i32) {
    %c0_i32 = arith.constant 0 : i32
    %c0_i32_0 = arith.constant 0 : i32
    return %arg0, %c0_i32 : i32, i32
  }
  func.func @transform_1(%arg0: i32) -> (i32, i32) {
    %c0_i32 = arith.constant 0 : i32
    %c0_i32_0 = arith.constant 0 : i32
    %c0_i32_1 = arith.constant 0 : i32
    return %c0_i32, %c0_i32_0 : i32, i32
  }
  func.func @transform_2(%arg0: i32) -> (i32, i32) {
    %c0_i32 = arith.constant 0 : i32
    %c0_i32_0 = arith.constant 0 : i32
    %c0_i32_1 = arith.constant 0 : i32
    return %c0_i32, %c0_i32_0 : i32, i32
  }
  func.func @transform_3(%arg0: i32) -> (i32, i32) {
    %c0_i32 = arith.constant 0 : i32
    %c0_i32_0 = arith.constant 0 : i32
    %c0_i32_1 = arith.constant 0 : i32
    return %c0_i32, %c0_i32_0 : i32, i32
  }
  func.func @transform_4(%arg0: i32) -> (i32, i32) {
    %c0_i32 = arith.constant 0 : i32
    %c0_i32_0 = arith.constant 0 : i32
    %c0_i32_1 = arith.constant 0 : i32
    return %c0_i32, %c0_i32_0 : i32, i32
  }
  func.func @transform_5(%arg0: i32) -> (i32, i32) {
    %c0_i32 = arith.constant 0 : i32
    %c0_i32_0 = arith.constant 0 : i32
    %c0_i32_1 = arith.constant 0 : i32
    return %c0_i32, %c0_i32_0 : i32, i32
  }
  func.func @transform_6(%arg0: i32) -> (i32, i32) {
    %c0_i32 = arith.constant 0 : i32
    %c0_i32_0 = arith.constant 0 : i32
    %c0_i32_1 = arith.constant 0 : i32
    return %c0_i32, %c0_i32_0 : i32, i32
  }
  func.func @transform_7(%arg0: i32) -> (i32, i32) {
    %c0_i32 = arith.constant 0 : i32
    %c0_i32_0 = arith.constant 0 : i32
    return %arg0, %c0_i32 : i32, i32
  }
}

</mosaic_0001>

<llo_original>
// kernel: tpu_custom_call.1
$region0: #{tpu_custom_call.1}
  #allocation0 [shape = 'u32[]', space=smem, size = 0x4, offset = 0x4, fixed_abs, tag = 'smem constant byte address 0x4 - core index']
  #allocation1 [shape = 'u32[144,128]{1,0:T(1,128)}', space=vmem, size = 0x12000, scoped, tag = 'internal scratch']
  %s0 = inlined_call_operand.vmem [shape: bf16[256,784], index: 0, kind: input, shape index: {}]
  %s1 = inlined_call_operand.vmem [shape: bf16[784,512], index: 1, kind: input, shape index: {}]
  %s2 = inlined_call_operand.vmem [shape: f32[1,512], index: 2, kind: input, shape index: {}]
  %s3 = inlined_call_operand.hbm [shape: bf16[512,512], index: 3, kind: input, shape index: {}]
  %s4 = inlined_call_operand.vmem [shape: f32[1,512], index: 4, kind: input, shape index: {}]
  %s5 = inlined_call_operand.hbm [shape: bf16[512,128], index: 5, kind: input, shape index: {}]
  %s6 = inlined_call_operand.vmem [shape: f32[1,128], index: 6, kind: input, shape index: {}]
  %s7 = inlined_call_operand.hbm [shape: f32[256,128], index: 7, kind: output, shape index: {}]
  %s8 = sld [smem:[#allocation0]]
  $region46: #{tpu_custom_call.1} parent=0
    _
  %s10 = ssub.s32 1, %s8
  %s11 = scalar_select 0, %s10, %s8
  $region1: #{tpu_custom_call.1} parent=0
    #allocation2 [shape = 'u8[524288]{0}', space=vmem, size = 0x80000, scoped, tag = 'input window, operand 3, single buffered']
    #allocation3 [shape = 's32[1]{0}', space=sflag, size = 0x4, scoped, tag = 'scoped memory for tpu_custom_call.1']
    #allocation4 [shape = 's32[1]{0}', space=sflag, size = 0x4, scoped, tag = 'scoped memory for tpu_custom_call.1']
    #allocation5 [shape = 'u8[131072]{0}', space=vmem, size = 0x20000, scoped, tag = 'input window, operand 5, single buffered']
    #allocation6 [shape = 's32[1]{0}', space=sflag, size = 0x4, scoped, tag = 'scoped memory for tpu_custom_call.1']
    #allocation7 [shape = 'u8[131072]{0}', space=vmem, size = 0x20000, scoped, tag = 'output window, operand 0, single buffered']
    %12 = vsyncpa [#allocation3], 0
    %13 = vsyncpa [#allocation6], 0
    %14 = vsyncpa [#allocation4], 0
    // Predicated region
    $region2: #{tpu_custom_call.1} parent=1 // pred_check
      _
    $region3: #{tpu_custom_call.1} parent=1 // pred_check_branch
      %16 = sbr.rel (0) target = $region5
    $region4: #{tpu_custom_call.1} parent=1 // pred_region
      _
    $region5: #{tpu_custom_call.1} parent=1 // pred_fallthru
      _
    // Predicated region
    $region6: #{tpu_custom_call.1} parent=1 // pred_check
      _
    $region7: #{tpu_custom_call.1} parent=1 // pred_check_branch
      %18 = sbr.rel (0) target = $region9
    $region8: #{tpu_custom_call.1} parent=1 // pred_region
      _
    $region9: #{tpu_custom_call.1} parent=1 // pred_fallthru
      _
    // Predicated region
    $region10: #{tpu_custom_call.1} parent=1 // pred_check
      _
    $region11: #{tpu_custom_call.1} parent=1 // pred_check_branch
      %20 = sbr.rel (0) target = $region13
    $region12: #{tpu_custom_call.1} parent=1 // pred_region
      _
    $region13: #{tpu_custom_call.1} parent=1 // pred_fallthru
      _
    // Predicated region
    $region14: #{tpu_custom_call.1} parent=1 // pred_check
      _
    $region15: #{tpu_custom_call.1} parent=1 // pred_check_branch
      %22 = sbr.rel (0) target = $region17
    $region16: #{tpu_custom_call.1} parent=1 // pred_region
      %s24 = ssub.s32 16384, 16384
      %25 = vsyncadd [#allocation3], %s24
      %s26 = sshll.u32 [#allocation2], 4
      %s27 = int_to_ptr.vmem [resolvable:$true] %s26
      %32 = dma.hbm_to_vmem [thread:$0]  %s3, 16384, %s27, [#allocation3], 256, 256, 16
    $region17: #{tpu_custom_call.1} parent=1 // pred_fallthru
      _
    // Predicated region
    $region18: #{tpu_custom_call.1} parent=1 // pred_check
      _
    $region19: #{tpu_custom_call.1} parent=1 // pred_check_branch
      %34 = sbr.rel (0) target = $region21
    $region20: #{tpu_custom_call.1} parent=1 // pred_region
      _
    $region21: #{tpu_custom_call.1} parent=1 // pred_fallthru
      _
    // Predicated region
    $region22: #{tpu_custom_call.1} parent=1 // pred_check
      _
    $region23: #{tpu_custom_call.1} parent=1 // pred_check_branch
      %36 = sbr.rel (0) target = $region25
    $region24: #{tpu_custom_call.1} parent=1 // pred_region
      %s38 = ssub.s32 4096, 4096
      %39 = vsyncadd [#allocation6], %s38
      %s40 = sshll.u32 [#allocation5], 4
      %s41 = int_to_ptr.vmem [resolvable:$true] %s40
      %46 = dma.hbm_to_vmem [thread:$0]  %s5, 4096, %s41, [#allocation6], 64, 64, 4
    $region25: #{tpu_custom_call.1} parent=1 // pred_fallthru
      _
    // Predicated region
    $region26: #{tpu_custom_call.1} parent=1 // pred_check
      _
    $region27: #{tpu_custom_call.1} parent=1 // pred_check_branch
      %48 = sbr.rel (0) target = $region29
    $region28: #{tpu_custom_call.1} parent=1 // pred_region
      _
    $region29: #{tpu_custom_call.1} parent=1 // pred_fallthru
      _
    // Predicated region
    $region30: #{tpu_custom_call.1} parent=1 // pred_check
      _
    $region31: #{tpu_custom_call.1} parent=1 // pred_check_branch
      %50 = sbr.rel (0) target = $region33
    $region32: #{tpu_custom_call.1} parent=1 // pred_region
      %51 = dma.done [#allocation3], 16384
    $region33: #{tpu_custom_call.1} parent=1 // pred_fallthru
      _
    // Predicated region
    $region34: #{tpu_custom_call.1} parent=1 // pred_check
      _
    $region35: #{tpu_custom_call.1} parent=1 // pred_check_branch
      %53 = sbr.rel (0) target = $region37
    $region36: #{tpu_custom_call.1} parent=1 // pred_region
      %54 = dma.done [#allocation6], 4096
    $region37: #{tpu_custom_call.1} parent=1 // pred_fallthru
      _
    %v56 = vld [vmem:[%s0] sm:$0xff]
    %v57 = vld [vmem:[%s0 + $0x8] sm:$0xff]
    %v58 = vld [vmem:[%s0 + $0x10] sm:$0xff]
    %v59 = vld [vmem:[%s0 + $0x18] sm:$0xf]
    %v60 = vld [vmem:[%s0 + $0x1c] sm:$0xff]
    %v61 = vld [vmem:[%s0 + $0x24] sm:$0xff]
    %v62 = vld [vmem:[%s0 + $0x2c] sm:$0xff]
    %v63 = vld [vmem:[%s0 + $0x34] sm:$0xf]
    %v64 = vld [vmem:[%s0 + $0x38] sm:$0xff]
    %v65 = vld [vmem:[%s0 + $0x40] sm:$0xff]
    %v66 = vld [vmem:[%s0 + $0x48] sm:$0xff]
    %v67 = vld [vmem:[%s0 + $0x50] sm:$0xf]
    %v68 = vld [vmem:[%s0 + $0x54] sm:$0xff]
    %v69 = vld [vmem:[%s0 + $0x5c] sm:$0xff]
    %v70 = vld [vmem:[%s0 + $0x64] sm:$0xff]
    %v71 = vld [vmem:[%s0 + $0x6c] sm:$0xf]
    %v72 = vld [vmem:[%s0 + $0x70] sm:$0xff]
    %v73 = vld [vmem:[%s0 + $0x78] sm:$0xff]
    %v74 = vld [vmem:[%s0 + $0x80] sm:$0xff]
    %v75 = vld [vmem:[%s0 + $0x88] sm:$0xf]
    %v76 = vld [vmem:[%s0 + $0x8c] sm:$0xff]
    %v77 = vld [vmem:[%s0 + $0x94] sm:$0xff]
    %v78 = vld [vmem:[%s0 + $0x9c] sm:$0xff]
    %v79 = vld [vmem:[%s0 + $0xa4] sm:$0xf]
    %v80 = vld [vmem:[%s0 + $0xa8] sm:$0xff]
    %v81 = vld [vmem:[%s0 + $0xb0] sm:$0xff]
    %v82 = vld [vmem:[%s0 + $0xb8] sm:$0xff]
    %v83 = vld [vmem:[%s0 + $0xc0] sm:$0xf]
    %v84 = vld [vmem:[%s0 + $0xc4] sm:$0xff]
    %v85 = vld [vmem:[%s0 + $0xcc] sm:$0xff]
    %v86 = vld [vmem:[%s0 + $0xd4] sm:$0xff]
    %v87 = vld [vmem:[%s0 + $0xdc] sm:$0xf]
    %v88 = vld [vmem:[%s0 + $0xe0] sm:$0xff]
    %v89 = vld [vmem:[%s0 + $0xe8] sm:$0xff]
    %v90 = vld [vmem:[%s0 + $0xf0] sm:$0xff]
    %v91 = vld [vmem:[%s0 + $0xf8] sm:$0xf]
    %v92 = vld [vmem:[%s0 + $0xfc] sm:$0xff]
    %v93 = vld [vmem:[%s0 + $0x104] sm:$0xff]
    %v94 = vld [vmem:[%s0 + $0x10c] sm:$0xff]
    %v95 = vld [vmem:[%s0 + $0x114] sm:$0xf]
    %v96 = vld [vmem:[%s0 + $0x118] sm:$0xff]
    %v97 = vld [vmem:[%s0 + $0x120] sm:$0xff]
    %v98 = vld [vmem:[%s0 + $0x128] sm:$0xff]
    %v99 = vld [vmem:[%s0 + $0x130] sm:$0xf]
    %v100 = vld [vmem:[%s0 + $0x134] sm:$0xff]
    %v101 = vld [vmem:[%s0 + $0x13c] sm:$0xff]
    %v102 = vld [vmem:[%s0 + $0x144] sm:$0xff]
    %v103 = vld [vmem:[%s0 + $0x14c] sm:$0xf]
    %v104 = vld [vmem:[%s0 + $0x150] sm:$0xff]
    %v105 = vld [vmem:[%s0 + $0x158] sm:$0xff]
    %v106 = vld [vmem:[%s0 + $0x160] sm:$0xff]
    %v107 = vld [vmem:[%s0 + $0x168] sm:$0xf]
    %v108 = vld [vmem:[%s0 + $0x16c] sm:$0xff]
    %v109 = vld [vmem:[%s0 + $0x174] sm:$0xff]
    %v110 = vld [vmem:[%s0 + $0x17c] sm:$0xff]
    %v111 = vld [vmem:[%s0 + $0x184] sm:$0xf]
    %v112 = vld [vmem:[%s0 + $0x188] sm:$0xff]
    %v113 = vld [vmem:[%s0 + $0x190] sm:$0xff]
    %v114 = vld [vmem:[%s0 + $0x198] sm:$0xff]
    %v115 = vld [vmem:[%s0 + $0x1a0] sm:$0xf]
    %v116 = vld [vmem:[%s0 + $0x1a4] sm:$0xff]
    %v117 = vld [vmem:[%s0 + $0x1ac] sm:$0xff]
    %v118 = vld [vmem:[%s0 + $0x1b4] sm:$0xff]
    %v119 = vld [vmem:[%s0 + $0x1bc] sm:$0xf]
    %v120 = vld [vmem:[%s0 + $0x1c0] sm:$0xff]
    %v121 = vld [vmem:[%s0 + $0x1c8] sm:$0xff]
    %v122 = vld [vmem:[%s0 + $0x1d0] sm:$0xff]
    %v123 = vld [vmem:[%s0 + $0x1d8] sm:$0xf]
    %v124 = vld [vmem:[%s0 + $0x1dc] sm:$0xff]
    %v125 = vld [vmem:[%s0 + $0x1e4] sm:$0xff]
    %v126 = vld [vmem:[%s0 + $0x1ec] sm:$0xff]
    %v127 = vld [vmem:[%s0 + $0x1f4] sm:$0xf]
    %v128 = vld [vmem:[%s0 + $0x1f8] sm:$0xff]
    %v129 = vld [vmem:[%s0 + $0x200] sm:$0xff]
    %v130 = vld [vmem:[%s0 + $0x208] sm:$0xff]
    %v131 = vld [vmem:[%s0 + $0x210] sm:$0xf]
    %v132 = vld [vmem:[%s0 + $0x214] sm:$0xff]
    %v133 = vld [vmem:[%s0 + $0x21c] sm:$0xff]
    %v134 = vld [vmem:[%s0 + $0x224] sm:$0xff]
    %v135 = vld [vmem:[%s0 + $0x22c] sm:$0xf]
    %v136 = vld [vmem:[%s0 + $0x230] sm:$0xff]
    %v137 = vld [vmem:[%s0 + $0x238] sm:$0xff]
    %v138 = vld [vmem:[%s0 + $0x240] sm:$0xff]
    %v139 = vld [vmem:[%s0 + $0x248] sm:$0xf]
    %v140 = vld [vmem:[%s0 + $0x24c] sm:$0xff]
    %v141 = vld [vmem:[%s0 + $0x254] sm:$0xff]
    %v142 = vld [vmem:[%s0 + $0x25c] sm:$0xff]
    %v143 = vld [vmem:[%s0 + $0x264] sm:$0xf]
    %v144 = vld [vmem:[%s0 + $0x268] sm:$0xff]
    %v145 = vld [vmem:[%s0 + $0x270] sm:$0xff]
    %v146 = vld [vmem:[%s0 + $0x278] sm:$0xff]
    %v147 = vld [vmem:[%s0 + $0x280] sm:$0xf]
    %v148 = vld [vmem:[%s0 + $0x284] sm:$0xff]
    %v149 = vld [vmem:[%s0 + $0x28c] sm:$0xff]
    %v150 = vld [vmem:[%s0 + $0x294] sm:$0xff]
    %v151 = vld [vmem:[%s0 + $0x29c] sm:$0xf]
    %v152 = vld [vmem:[%s0 + $0x2a0] sm:$0xff]
    %v153 = vld [vmem:[%s0 + $0x2a8] sm:$0xff]
    %v154 = vld [vmem:[%s0 + $0x2b0] sm:$0xff]
    %v155 = vld [vmem:[%s0 + $0x2b8] sm:$0xf]
    %v156 = vld [vmem:[%s0 + $0x2bc] sm:$0xff]
    %v157 = vld [vmem:[%s0 + $0x2c4] sm:$0xff]
    %v158 = vld [vmem:[%s0 + $0x2cc] sm:$0xff]
    %v159 = vld [vmem:[%s0 + $0x2d4] sm:$0xf]
    %v160 = vld [vmem:[%s0 + $0x2d8] sm:$0xff]
    %v161 = vld [vmem:[%s0 + $0x2e0] sm:$0xff]
    %v162 = vld [vmem:[%s0 + $0x2e8] sm:$0xff]
    %v163 = vld [vmem:[%s0 + $0x2f0] sm:$0xf]
    %v164 = vld [vmem:[%s0 + $0x2f4] sm:$0xff]
    %v165 = vld [vmem:[%s0 + $0x2fc] sm:$0xff]
    %v166 = vld [vmem:[%s0 + $0x304] sm:$0xff]
    %v167 = vld [vmem:[%s0 + $0x30c] sm:$0xf]
    %v168 = vld [vmem:[%s0 + $0x310] sm:$0xff]
    %v169 = vld [vmem:[%s0 + $0x318] sm:$0xff]
    %v170 = vld [vmem:[%s0 + $0x320] sm:$0xff]
    %v171 = vld [vmem:[%s0 + $0x328] sm:$0xf]
    %v172 = vld [vmem:[%s0 + $0x32c] sm:$0xff]
    %v173 = vld [vmem:[%s0 + $0x334] sm:$0xff]
    %v174 = vld [vmem:[%s0 + $0x33c] sm:$0xff]
    %v175 = vld [vmem:[%s0 + $0x344] sm:$0xf]
    %v176 = vld [vmem:[%s0 + $0x348] sm:$0xff]
    %v177 = vld [vmem:[%s0 + $0x350] sm:$0xff]
    %v178 = vld [vmem:[%s0 + $0x358] sm:$0xff]
    %v179 = vld [vmem:[%s0 + $0x360] sm:$0xf]
    %v180 = vld [vmem:[%s0 + $0x364] sm:$0xff]
    %v181 = vld [vmem:[%s0 + $0x36c] sm:$0xff]
    %v182 = vld [vmem:[%s0 + $0x374] sm:$0xff]
    %v183 = vld [vmem:[%s0 + $0x37c] sm:$0xf]
    %v184 = vld [vmem:[%s1] sm:$0xff]
    %v185 = vld [vmem:[%s1 + $0x8] sm:$0xff]
    %v186 = vld [vmem:[%s1 + $0x10] sm:$0xff]
    %v187 = vld [vmem:[%s1 + $0x18] sm:$0xff]
    %v188 = vld [vmem:[%s1 + $0x20] sm:$0xff]
    %v189 = vld [vmem:[%s1 + $0x28] sm:$0xff]
    %v190 = vld [vmem:[%s1 + $0x30] sm:$0xff]
    %v191 = vld [vmem:[%s1 + $0x38] sm:$0xff]
    %v192 = vld [vmem:[%s1 + $0x40] sm:$0xff]
    %v193 = vld [vmem:[%s1 + $0x48] sm:$0xff]
    %v194 = vld [vmem:[%s1 + $0x50] sm:$0xff]
    %v195 = vld [vmem:[%s1 + $0x58] sm:$0xff]
    %v196 = vld [vmem:[%s1 + $0x60] sm:$0xff]
    %v197 = vld [vmem:[%s1 + $0x68] sm:$0xff]
    %v198 = vld [vmem:[%s1 + $0x70] sm:$0xff]
    %v199 = vld [vmem:[%s1 + $0x78] sm:$0xff]
    %v200 = vld [vmem:[%s1 + $0x80] sm:$0xff]
    %v201 = vld [vmem:[%s1 + $0x88] sm:$0xff]
    %v202 = vld [vmem:[%s1 + $0x90] sm:$0xff]
    %v203 = vld [vmem:[%s1 + $0x98] sm:$0xff]
    %v204 = vld [vmem:[%s1 + $0xa0] sm:$0xff]
    %v205 = vld [vmem:[%s1 + $0xa8] sm:$0xff]
    %v206 = vld [vmem:[%s1 + $0xb0] sm:$0xff]
    %v207 = vld [vmem:[%s1 + $0xb8] sm:$0xff]
    %v208 = vld [vmem:[%s1 + $0xc0] sm:$0xff]
    %v209 = vld [vmem:[%s1 + $0xc8] sm:$0xff]
    %v210 = vld [vmem:[%s1 + $0xd0] sm:$0xff]
    %v211 = vld [vmem:[%s1 + $0xd8] sm:$0xff]
    %v212 = vld [vmem:[%s1 + $0xe0] sm:$0xff]
    %v213 = vld [vmem:[%s1 + $0xe8] sm:$0xff]
    %v214 = vld [vmem:[%s1 + $0xf0] sm:$0xff]
    %v215 = vld [vmem:[%s1 + $0xf8] sm:$0xff]
    %v216 = vld [vmem:[%s1 + $0x100] sm:$0xff]
    %v217 = vld [vmem:[%s1 + $0x108] sm:$0xff]
    %v218 = vld [vmem:[%s1 + $0x110] sm:$0xff]
    %v219 = vld [vmem:[%s1 + $0x118] sm:$0xff]
    %v220 = vld [vmem:[%s1 + $0x120] sm:$0xff]
    %v221 = vld [vmem:[%s1 + $0x128] sm:$0xff]
    %v222 = vld [vmem:[%s1 + $0x130] sm:$0xff]
    %v223 = vld [vmem:[%s1 + $0x138] sm:$0xff]
    %v224 = vld [vmem:[%s1 + $0x140] sm:$0xff]
    %v225 = vld [vmem:[%s1 + $0x148] sm:$0xff]
    %v226 = vld [vmem:[%s1 + $0x150] sm:$0xff]
    %v227 = vld [vmem:[%s1 + $0x158] sm:$0xff]
    %v228 = vld [vmem:[%s1 + $0x160] sm:$0xff]
    %v229 = vld [vmem:[%s1 + $0x168] sm:$0xff]
    %v230 = vld [vmem:[%s1 + $0x170] sm:$0xff]
    %v231 = vld [vmem:[%s1 + $0x178] sm:$0xff]
    %v232 = vld [vmem:[%s1 + $0x180] sm:$0xff]
    %v233 = vld [vmem:[%s1 + $0x188] sm:$0xff]
    %v234 = vld [vmem:[%s1 + $0x190] sm:$0xff]
    %v235 = vld [vmem:[%s1 + $0x198] sm:$0xff]
    %v236 = vld [vmem:[%s1 + $0x1a0] sm:$0xff]
    %v237 = vld [vmem:[%s1 + $0x1a8] sm:$0xff]
    %v238 = vld [vmem:[%s1 + $0x1b0] sm:$0xff]
    %v239 = vld [vmem:[%s1 + $0x1b8] sm:$0xff]
    %v240 = vld [vmem:[%s1 + $0x1c0] sm:$0xff]
    %v241 = vld [vmem:[%s1 + $0x1c8] sm:$0xff]
    %v242 = vld [vmem:[%s1 + $0x1d0] sm:$0xff]
    %v243 = vld [vmem:[%s1 + $0x1d8] sm:$0xff]
    %v244 = vld [vmem:[%s1 + $0x1e0] sm:$0xff]
    %v245 = vld [vmem:[%s1 + $0x1e8] sm:$0xff]
    %v246 = vld [vmem:[%s1 + $0x1f0] sm:$0xff]
    %v247 = vld [vmem:[%s1 + $0x1f8] sm:$0xff]
    %v248 = vld [vmem:[%s1 + $0x200] sm:$0xff]
    %v249 = vld [vmem:[%s1 + $0x208] sm:$0xff]
    %v250 = vld [vmem:[%s1 + $0x210] sm:$0xff]
    %v251 = vld [vmem:[%s1 + $0x218] sm:$0xff]
    %v252 = vld [vmem:[%s1 + $0x220] sm:$0xff]
    %v253 = vld [vmem:[%s1 + $0x228] sm:$0xff]
    %v254 = vld [vmem:[%s1 + $0x230] sm:$0xff]
    %v255 = vld [vmem:[%s1 + $0x238] sm:$0xff]
    %v256 = vld [vmem:[%s1 + $0x240] sm:$0xff]
    %v257 = vld [vmem:[%s1 + $0x248] sm:$0xff]
    %v258 = vld [vmem:[%s1 + $0x250] sm:$0xff]
    %v259 = vld [vmem:[%s1 + $0x258] sm:$0xff]
    %v260 = vld [vmem:[%s1 + $0x260] sm:$0xff]
    %v261 = vld [vmem:[%s1 + $0x268] sm:$0xff]
    %v262 = vld [vmem:[%s1 + $0x270] sm:$0xff]
    %v263 = vld [vmem:[%s1 + $0x278] sm:$0xff]
    %v264 = vld [vmem:[%s1 + $0x280] sm:$0xff]
    %v265 = vld [vmem:[%s1 + $0x288] sm:$0xff]
    %v266 = vld [vmem:[%s1 + $0x290] sm:$0xff]
    %v267 = vld [vmem:[%s1 + $0x298] sm:$0xff]
    %v268 = vld [vmem:[%s1 + $0x2a0] sm:$0xff]
    %v269 = vld [vmem:[%s1 + $0x2a8] sm:$0xff]
    %v270 = vld [vmem:[%s1 + $0x2b0] sm:$0xff]
    %v271 = vld [vmem:[%s1 + $0x2b8] sm:$0xff]
    %v272 = vld [vmem:[%s1 + $0x2c0] sm:$0xff]
    %v273 = vld [vmem:[%s1 + $0x2c8] sm:$0xff]
    %v274 = vld [vmem:[%s1 + $0x2d0] sm:$0xff]
    %v275 = vld [vmem:[%s1 + $0x2d8] sm:$0xff]
    %v276 = vld [vmem:[%s1 + $0x2e0] sm:$0xff]
    %v277 = vld [vmem:[%s1 + $0x2e8] sm:$0xff]
    %v278 = vld [vmem:[%s1 + $0x2f0] sm:$0xff]
    %v279 = vld [vmem:[%s1 + $0x2f8] sm:$0xff]
    %v280 = vld [vmem:[%s1 + $0x300] sm:$0xff]
    %v281 = vld [vmem:[%s1 + $0x308] sm:$0xff]
    %v282 = vld [vmem:[%s1 + $0x310] sm:$0xff]
    %v283 = vld [vmem:[%s1 + $0x318] sm:$0xff]
    %v284 = vld [vmem:[%s1 + $0x320] sm:$0xff]
    %v285 = vld [vmem:[%s1 + $0x328] sm:$0xff]
    %v286 = vld [vmem:[%s1 + $0x330] sm:$0xff]
    %v287 = vld [vmem:[%s1 + $0x338] sm:$0xff]
    %v288 = vld [vmem:[%s1 + $0x340] sm:$0xff]
    %v289 = vld [vmem:[%s1 + $0x348] sm:$0xff]
    %v290 = vld [vmem:[%s1 + $0x350] sm:$0xff]
    %v291 = vld [vmem:[%s1 + $0x358] sm:$0xff]
    %v292 = vld [vmem:[%s1 + $0x360] sm:$0xff]
    %v293 = vld [vmem:[%s1 + $0x368] sm:$0xff]
    %v294 = vld [vmem:[%s1 + $0x370] sm:$0xff]
    %v295 = vld [vmem:[%s1 + $0x378] sm:$0xff]
    %v296 = vld [vmem:[%s1 + $0x380] sm:$0xff]
    %v297 = vld [vmem:[%s1 + $0x388] sm:$0xff]
    %v298 = vld [vmem:[%s1 + $0x390] sm:$0xff]
    %v299 = vld [vmem:[%s1 + $0x398] sm:$0xff]
    %v300 = vld [vmem:[%s1 + $0x3a0] sm:$0xff]
    %v301 = vld [vmem:[%s1 + $0x3a8] sm:$0xff]
    %v302 = vld [vmem:[%s1 + $0x3b0] sm:$0xff]
    %v303 = vld [vmem:[%s1 + $0x3b8] sm:$0xff]
    %v304 = vld [vmem:[%s1 + $0x3c0] sm:$0xff]
    %v305 = vld [vmem:[%s1 + $0x3c8] sm:$0xff]
    %v306 = vld [vmem:[%s1 + $0x3d0] sm:$0xff]
    %v307 = vld [vmem:[%s1 + $0x3d8] sm:$0xff]
    %v308 = vld [vmem:[%s1 + $0x3e0] sm:$0xff]
    %v309 = vld [vmem:[%s1 + $0x3e8] sm:$0xff]
    %v310 = vld [vmem:[%s1 + $0x3f0] sm:$0xff]
    %v311 = vld [vmem:[%s1 + $0x3f8] sm:$0xff]
    %v312 = vld [vmem:[%s1 + $0x400] sm:$0xff]
    %v313 = vld [vmem:[%s1 + $0x408] sm:$0xff]
    %v314 = vld [vmem:[%s1 + $0x410] sm:$0xff]
    %v315 = vld [vmem:[%s1 + $0x418] sm:$0xff]
    %v316 = vld [vmem:[%s1 + $0x420] sm:$0xff]
    %v317 = vld [vmem:[%s1 + $0x428] sm:$0xff]
    %v318 = vld [vmem:[%s1 + $0x430] sm:$0xff]
    %v319 = vld [vmem:[%s1 + $0x438] sm:$0xff]
    %v320 = vld [vmem:[%s1 + $0x440] sm:$0xff]
    %v321 = vld [vmem:[%s1 + $0x448] sm:$0xff]
    %v322 = vld [vmem:[%s1 + $0x450] sm:$0xff]
    %v323 = vld [vmem:[%s1 + $0x458] sm:$0xff]
    %v324 = vld [vmem:[%s1 + $0x460] sm:$0xff]
    %v325 = vld [vmem:[%s1 + $0x468] sm:$0xff]
    %v326 = vld [vmem:[%s1 + $0x470] sm:$0xff]
    %v327 = vld [vmem:[%s1 + $0x478] sm:$0xff]
    %v328 = vld [vmem:[%s1 + $0x480] sm:$0xff]
    %v329 = vld [vmem:[%s1 + $0x488] sm:$0xff]
    %v330 = vld [vmem:[%s1 + $0x490] sm:$0xff]
    %v331 = vld [vmem:[%s1 + $0x498] sm:$0xff]
    %v332 = vld [vmem:[%s1 + $0x4a0] sm:$0xff]
    %v333 = vld [vmem:[%s1 + $0x4a8] sm:$0xff]
    %v334 = vld [vmem:[%s1 + $0x4b0] sm:$0xff]
    %v335 = vld [vmem:[%s1 + $0x4b8] sm:$0xff]
    %v336 = vld [vmem:[%s1 + $0x4c0] sm:$0xff]
    %v337 = vld [vmem:[%s1 + $0x4c8] sm:$0xff]
    %v338 = vld [vmem:[%s1 + $0x4d0] sm:$0xff]
    %v339 = vld [vmem:[%s1 + $0x4d8] sm:$0xff]
    %v340 = vld [vmem:[%s1 + $0x4e0] sm:$0xff]
    %v341 = vld [vmem:[%s1 + $0x4e8] sm:$0xff]
    %v342 = vld [vmem:[%s1 + $0x4f0] sm:$0xff]
    %v343 = vld [vmem:[%s1 + $0x4f8] sm:$0xff]
    %v344 = vld [vmem:[%s1 + $0x500] sm:$0xff]
    %v345 = vld [vmem:[%s1 + $0x508] sm:$0xff]
    %v346 = vld [vmem:[%s1 + $0x510] sm:$0xff]
    %v347 = vld [vmem:[%s1 + $0x518] sm:$0xff]
    %v348 = vld [vmem:[%s1 + $0x520] sm:$0xff]
    %v349 = vld [vmem:[%s1 + $0x528] sm:$0xff]
    %v350 = vld [vmem:[%s1 + $0x530] sm:$0xff]
    %v351 = vld [vmem:[%s1 + $0x538] sm:$0xff]
    %v352 = vld [vmem:[%s1 + $0x540] sm:$0xff]
    %v353 = vld [vmem:[%s1 + $0x548] sm:$0xff]
    %v354 = vld [vmem:[%s1 + $0x550] sm:$0xff]
    %v355 = vld [vmem:[%s1 + $0x558] sm:$0xff]
    %v356 = vld [vmem:[%s1 + $0x560] sm:$0xff]
    %v357 = vld [vmem:[%s1 + $0x568] sm:$0xff]
    %v358 = vld [vmem:[%s1 + $0x570] sm:$0xff]
    %v359 = vld [vmem:[%s1 + $0x578] sm:$0xff]
    %v360 = vld [vmem:[%s1 + $0x580] sm:$0xff]
    %v361 = vld [vmem:[%s1 + $0x588] sm:$0xff]
    %v362 = vld [vmem:[%s1 + $0x590] sm:$0xff]
    %v363 = vld [vmem:[%s1 + $0x598] sm:$0xff]
    %v364 = vld [vmem:[%s1 + $0x5a0] sm:$0xff]
    %v365 = vld [vmem:[%s1 + $0x5a8] sm:$0xff]
    %v366 = vld [vmem:[%s1 + $0x5b0] sm:$0xff]
    %v367 = vld [vmem:[%s1 + $0x5b8] sm:$0xff]
    %v368 = vld [vmem:[%s1 + $0x5c0] sm:$0xff]
    %v369 = vld [vmem:[%s1 + $0x5c8] sm:$0xff]
    %v370 = vld [vmem:[%s1 + $0x5d0] sm:$0xff]
    %v371 = vld [vmem:[%s1 + $0x5d8] sm:$0xff]
    %v372 = vld [vmem:[%s1 + $0x5e0] sm:$0xff]
    %v373 = vld [vmem:[%s1 + $0x5e8] sm:$0xff]
    %v374 = vld [vmem:[%s1 + $0x5f0] sm:$0xff]
    %v375 = vld [vmem:[%s1 + $0x5f8] sm:$0xff]
    %v376 = vld [vmem:[%s1 + $0x600] sm:$0xff]
    %v377 = vld [vmem:[%s1 + $0x608] sm:$0xff]
    %v378 = vld [vmem:[%s1 + $0x610] sm:$0xff]
    %v379 = vld [vmem:[%s1 + $0x618] sm:$0xff]
    %v380 = vld [vmem:[%s2] sm:$0xf]
    %v382 = vlaneseq
    %v383 = vshrl.u32 %v382, 7
    %v384 = vsub.s32 0, %v383
    %v385 = vrot.slane %v380, %v384
    %v386 = vlaneseq
    %v387 = vshrl.u32 %v386, 7
    %v388 = vsub.s32 1, %v387
    %v389 = vrot.slane %v380, %v388
    %v390 = vlaneseq
    %v391 = vshrl.u32 %v390, 7
    %v392 = vsub.s32 2, %v391
    %v393 = vrot.slane %v380, %v392
    %v394 = vlaneseq
    %v395 = vshrl.u32 %v394, 7
    %v396 = vsub.s32 3, %v395
    %v397 = vrot.slane %v380, %v396
    %v530 = vunpack.c.l.b16 %v56
    %v531 = vunpack.c.h.b16 %v56
    %v532 = vunpack.c.l.b16 %v57
    %v533 = vunpack.c.h.b16 %v57
    %v534 = vunpack.c.l.b16 %v58
    %v535 = vunpack.c.h.b16 %v58
    %v536 = vunpack.c.l.b16 %v59
    %v537 = vunpack.c.l.b16 %v60
    %v538 = vunpack.c.h.b16 %v60
    %v539 = vunpack.c.l.b16 %v61
    %v540 = vunpack.c.h.b16 %v61
    %v541 = vunpack.c.l.b16 %v62
    %v542 = vunpack.c.h.b16 %v62
    %v543 = vunpack.c.l.b16 %v63
    %v544 = vunpack.c.l.b16 %v64
    %v545 = vunpack.c.h.b16 %v64
    %v546 = vunpack.c.l.b16 %v65
    %v547 = vunpack.c.h.b16 %v65
    %v548 = vunpack.c.l.b16 %v66
    %v549 = vunpack.c.h.b16 %v66
    %v550 = vunpack.c.l.b16 %v67
    %v551 = vunpack.c.l.b16 %v68
    %v552 = vunpack.c.h.b16 %v68
    %v553 = vunpack.c.l.b16 %v69
    %v554 = vunpack.c.h.b16 %v69
    %v555 = vunpack.c.l.b16 %v70
    %v556 = vunpack.c.h.b16 %v70
    %v557 = vunpack.c.l.b16 %v71
    %v558 = vunpack.c.l.b16 %v72
    %v559 = vunpack.c.h.b16 %v72
    %v560 = vunpack.c.l.b16 %v73
    %v561 = vunpack.c.h.b16 %v73
    %v562 = vunpack.c.l.b16 %v74
    %v563 = vunpack.c.h.b16 %v74
    %v564 = vunpack.c.l.b16 %v75
    %v565 = vunpack.c.l.b16 %v76
    %v566 = vunpack.c.h.b16 %v76
    %v567 = vunpack.c.l.b16 %v77
    %v568 = vunpack.c.h.b16 %v77
    %v569 = vunpack.c.l.b16 %v78
    %v570 = vunpack.c.h.b16 %v78
    %v571 = vunpack.c.l.b16 %v79
    %v572 = vunpack.c.l.b16 %v80
    %v573 = vunpack.c.h.b16 %v80
    %v574 = vunpack.c.l.b16 %v81
    %v575 = vunpack.c.h.b16 %v81
    %v576 = vunpack.c.l.b16 %v82
    %v577 = vunpack.c.h.b16 %v82
    %v578 = vunpack.c.l.b16 %v83
    %v579 = vunpack.c.l.b16 %v84
    %v580 = vunpack.c.h.b16 %v84
    %v581 = vunpack.c.l.b16 %v85
    %v582 = vunpack.c.h.b16 %v85
    %v583 = vunpack.c.l.b16 %v86
    %v584 = vunpack.c.h.b16 %v86
    %v585 = vunpack.c.l.b16 %v87
    %v586 = vunpack.c.l.b16 %v88
    %v587 = vunpack.c.h.b16 %v88
    %v588 = vunpack.c.l.b16 %v89
    %v589 = vunpack.c.h.b16 %v89
    %v590 = vunpack.c.l.b16 %v90
    %v591 = vunpack.c.h.b16 %v90
    %v592 = vunpack.c.l.b16 %v91
    %v593 = vunpack.c.l.b16 %v92
    %v594 = vunpack.c.h.b16 %v92
    %v595 = vunpack.c.l.b16 %v93
    %v596 = vunpack.c.h.b16 %v93
    %v597 = vunpack.c.l.b16 %v94
    %v598 = vunpack.c.h.b16 %v94
    %v599 = vunpack.c.l.b16 %v95
    %v600 = vunpack.c.l.b16 %v96
    %v601 = vunpack.c.h.b16 %v96
    %v602 = vunpack.c.l.b16 %v97
    %v603 = vunpack.c.h.b16 %v97
    %v604 = vunpack.c.l.b16 %v98
    %v605 = vunpack.c.h.b16 %v98
    %v606 = vunpack.c.l.b16 %v99
    %v607 = vunpack.c.l.b16 %v100
    %v608 = vunpack.c.h.b16 %v100
    %v609 = vunpack.c.l.b16 %v101
    %v610 = vunpack.c.h.b16 %v101
    %v611 = vunpack.c.l.b16 %v102
    %v612 = vunpack.c.h.b16 %v102
    %v613 = vunpack.c.l.b16 %v103
    %v614 = vunpack.c.l.b16 %v104
    %v615 = vunpack.c.h.b16 %v104
    %v616 = vunpack.c.l.b16 %v105
    %v617 = vunpack.c.h.b16 %v105
    %v618 = vunpack.c.l.b16 %v106
    %v619 = vunpack.c.h.b16 %v106
    %v620 = vunpack.c.l.b16 %v107
    %v621 = vunpack.c.l.b16 %v108
    %v622 = vunpack.c.h.b16 %v108
    %v623 = vunpack.c.l.b16 %v109
    %v624 = vunpack.c.h.b16 %v109
    %v625 = vunpack.c.l.b16 %v110
    %v626 = vunpack.c.h.b16 %v110
    %v627 = vunpack.c.l.b16 %v111
    %v628 = vunpack.c.l.b16 %v112
    %v629 = vunpack.c.h.b16 %v112
    %v630 = vunpack.c.l.b16 %v113
    %v631 = vunpack.c.h.b16 %v113
    %v632 = vunpack.c.l.b16 %v114
    %v633 = vunpack.c.h.b16 %v114
    %v634 = vunpack.c.l.b16 %v115
    %v635 = vunpack.c.l.b16 %v116
    %v636 = vunpack.c.h.b16 %v116
    %v637 = vunpack.c.l.b16 %v117
    %v638 = vunpack.c.h.b16 %v117
    %v639 = vunpack.c.l.b16 %v118
    %v640 = vunpack.c.h.b16 %v118
    %v641 = vunpack.c.l.b16 %v119
    %v642 = vunpack.c.l.b16 %v120
    %v643 = vunpack.c.h.b16 %v120
    %v644 = vunpack.c.l.b16 %v121
    %v645 = vunpack.c.h.b16 %v121
    %v646 = vunpack.c.l.b16 %v122
    %v647 = vunpack.c.h.b16 %v122
    %v648 = vunpack.c.l.b16 %v123
    %v649 = vunpack.c.l.b16 %v124
    %v650 = vunpack.c.h.b16 %v124
    %v651 = vunpack.c.l.b16 %v125
    %v652 = vunpack.c.h.b16 %v125
    %v653 = vunpack.c.l.b16 %v126
    %v654 = vunpack.c.h.b16 %v126
    %v655 = vunpack.c.l.b16 %v127
    %v656 = vunpack.c.l.b16 %v128
    %v657 = vunpack.c.h.b16 %v128
    %v658 = vunpack.c.l.b16 %v129
    %v659 = vunpack.c.h.b16 %v129
    %v660 = vunpack.c.l.b16 %v130
    %v661 = vunpack.c.h.b16 %v130
    %v662 = vunpack.c.l.b16 %v131
    %v663 = vunpack.c.l.b16 %v132
    %v664 = vunpack.c.h.b16 %v132
    %v665 = vunpack.c.l.b16 %v133
    %v666 = vunpack.c.h.b16 %v133
    %v667 = vunpack.c.l.b16 %v134
    %v668 = vunpack.c.h.b16 %v134
    %v669 = vunpack.c.l.b16 %v135
    %v670 = vunpack.c.l.b16 %v136
    %v671 = vunpack.c.h.b16 %v136
    %v672 = vunpack.c.l.b16 %v137
    %v673 = vunpack.c.h.b16 %v137
    %v674 = vunpack.c.l.b16 %v138
    %v675 = vunpack.c.h.b16 %v138
    %v676 = vunpack.c.l.b16 %v139
    %v677 = vunpack.c.l.b16 %v140
    %v678 = vunpack.c.h.b16 %v140
    %v679 = vunpack.c.l.b16 %v141
    %v680 = vunpack.c.h.b16 %v141
    %v681 = vunpack.c.l.b16 %v142
    %v682 = vunpack.c.h.b16 %v142
    %v683 = vunpack.c.l.b16 %v143
    %v684 = vunpack.c.l.b16 %v144
    %v685 = vunpack.c.h.b16 %v144
    %v686 = vunpack.c.l.b16 %v145
    %v687 = vunpack.c.h.b16 %v145
    %v688 = vunpack.c.l.b16 %v146
    %v689 = vunpack.c.h.b16 %v146
    %v690 = vunpack.c.l.b16 %v147
    %v691 = vunpack.c.l.b16 %v148
    %v692 = vunpack.c.h.b16 %v148
    %v693 = vunpack.c.l.b16 %v149
    %v694 = vunpack.c.h.b16 %v149
    %v695 = vunpack.c.l.b16 %v150
    %v696 = vunpack.c.h.b16 %v150
    %v697 = vunpack.c.l.b16 %v151
    %v698 = vunpack.c.l.b16 %v152
    %v699 = vunpack.c.h.b16 %v152
    %v700 = vunpack.c.l.b16 %v153
    %v701 = vunpack.c.h.b16 %v153
    %v702 = vunpack.c.l.b16 %v154
    %v703 = vunpack.c.h.b16 %v154
    %v704 = vunpack.c.l.b16 %v155
    %v705 = vunpack.c.l.b16 %v156
    %v706 = vunpack.c.h.b16 %v156
    %v707 = vunpack.c.l.b16 %v157
    %v708 = vunpack.c.h.b16 %v157
    %v709 = vunpack.c.l.b16 %v158
    %v710 = vunpack.c.h.b16 %v158
    %v711 = vunpack.c.l.b16 %v159
    %v712 = vunpack.c.l.b16 %v160
    %v713 = vunpack.c.h.b16 %v160
    %v714 = vunpack.c.l.b16 %v161
    %v715 = vunpack.c.h.b16 %v161
    %v716 = vunpack.c.l.b16 %v162
    %v717 = vunpack.c.h.b16 %v162
    %v718 = vunpack.c.l.b16 %v163
    %v719 = vunpack.c.l.b16 %v164
    %v720 = vunpack.c.h.b16 %v164
    %v721 = vunpack.c.l.b16 %v165
    %v722 = vunpack.c.h.b16 %v165
    %v723 = vunpack.c.l.b16 %v166
    %v724 = vunpack.c.h.b16 %v166
    %v725 = vunpack.c.l.b16 %v167
    %v726 = vunpack.c.l.b16 %v168
    %v727 = vunpack.c.h.b16 %v168
    %v728 = vunpack.c.l.b16 %v169
    %v729 = vunpack.c.h.b16 %v169
    %v730 = vunpack.c.l.b16 %v170
    %v731 = vunpack.c.h.b16 %v170
    %v732 = vunpack.c.l.b16 %v171
    %v733 = vunpack.c.l.b16 %v172
    %v734 = vunpack.c.h.b16 %v172
    %v735 = vunpack.c.l.b16 %v173
    %v736 = vunpack.c.h.b16 %v173
    %v737 = vunpack.c.l.b16 %v174
    %v738 = vunpack.c.h.b16 %v174
    %v739 = vunpack.c.l.b16 %v175
    %v740 = vunpack.c.l.b16 %v176
    %v741 = vunpack.c.h.b16 %v176
    %v742 = vunpack.c.l.b16 %v177
    %v743 = vunpack.c.h.b16 %v177
    %v744 = vunpack.c.l.b16 %v178
    %v745 = vunpack.c.h.b16 %v178
    %v746 = vunpack.c.l.b16 %v179
    %v747 = vunpack.c.l.b16 %v180
    %v748 = vunpack.c.h.b16 %v180
    %v749 = vunpack.c.l.b16 %v181
    %v750 = vunpack.c.h.b16 %v181
    %v751 = vunpack.c.l.b16 %v182
    %v752 = vunpack.c.h.b16 %v182
    %v753 = vunpack.c.l.b16 %v183
    %v754 = vpack.c.b16 %v537, %v530
    %v755 = vpack.c.b16 %v538, %v531
    %v756 = vpack.c.b16 %v539, %v532
    %v757 = vpack.c.b16 %v540, %v533
    %v758 = vpack.c.b16 %v541, %v534
    %v759 = vpack.c.b16 %v542, %v535
    %v760 = vpack.c.b16 %v543, %v536
    %v761 = vpack.c.b16 %v551, %v544
    %v762 = vpack.c.b16 %v552, %v545
    %v763 = vpack.c.b16 %v553, %v546
    %v764 = vpack.c.b16 %v554, %v547
    %v765 = vpack.c.b16 %v555, %v548
    %v766 = vpack.c.b16 %v556, %v549
    %v767 = vpack.c.b16 %v557, %v550
    %v768 = vpack.c.b16 %v565, %v558
    %v769 = vpack.c.b16 %v566, %v559
    %v770 = vpack.c.b16 %v567, %v560
    %v771 = vpack.c.b16 %v568, %v561
    %v772 = vpack.c.b16 %v569, %v562
    %v773 = vpack.c.b16 %v570, %v563
    %v774 = vpack.c.b16 %v571, %v564
    %v775 = vpack.c.b16 %v579, %v572
    %v776 = vpack.c.b16 %v580, %v573
    %v777 = vpack.c.b16 %v581, %v574
    %v778 = vpack.c.b16 %v582, %v575
    %v779 = vpack.c.b16 %v583, %v576
    %v780 = vpack.c.b16 %v584, %v577
    %v781 = vpack.c.b16 %v585, %v578
    %v782 = vpack.c.b16 %v593, %v586
    %v783 = vpack.c.b16 %v594, %v587
    %v784 = vpack.c.b16 %v595, %v588
    %v785 = vpack.c.b16 %v596, %v589
    %v786 = vpack.c.b16 %v597, %v590
    %v787 = vpack.c.b16 %v598, %v591
    %v788 = vpack.c.b16 %v599, %v592
    %v789 = vpack.c.b16 %v607, %v600
    %v790 = vpack.c.b16 %v608, %v601
    %v791 = vpack.c.b16 %v609, %v602
    %v792 = vpack.c.b16 %v610, %v603
    %v793 = vpack.c.b16 %v611, %v604
    %v794 = vpack.c.b16 %v612, %v605
    %v795 = vpack.c.b16 %v613, %v606
    %v796 = vpack.c.b16 %v621, %v614
    %v797 = vpack.c.b16 %v622, %v615
    %v798 = vpack.c.b16 %v623, %v616
    %v799 = vpack.c.b16 %v624, %v617
    %v800 = vpack.c.b16 %v625, %v618
    %v801 = vpack.c.b16 %v626, %v619
    %v802 = vpack.c.b16 %v627, %v620
    %v803 = vpack.c.b16 %v635, %v628
    %v804 = vpack.c.b16 %v636, %v629
    %v805 = vpack.c.b16 %v637, %v630
    %v806 = vpack.c.b16 %v638, %v631
    %v807 = vpack.c.b16 %v639, %v632
    %v808 = vpack.c.b16 %v640, %v633
    %v809 = vpack.c.b16 %v641, %v634
    %v810 = vpack.c.b16 %v649, %v642
    %v811 = vpack.c.b16 %v650, %v643
    %v812 = vpack.c.b16 %v651, %v644
    %v813 = vpack.c.b16 %v652, %v645
    %v814 = vpack.c.b16 %v653, %v646
    %v815 = vpack.c.b16 %v654, %v647
    %v816 = vpack.c.b16 %v655, %v648
    %v817 = vpack.c.b16 %v663, %v656
    %v818 = vpack.c.b16 %v664, %v657
    %v819 = vpack.c.b16 %v665, %v658
    %v820 = vpack.c.b16 %v666, %v659
    %v821 = vpack.c.b16 %v667, %v660
    %v822 = vpack.c.b16 %v668, %v661
    %v823 = vpack.c.b16 %v669, %v662
    %v824 = vpack.c.b16 %v677, %v670
    %v825 = vpack.c.b16 %v678, %v671
    %v826 = vpack.c.b16 %v679, %v672
    %v827 = vpack.c.b16 %v680, %v673
    %v828 = vpack.c.b16 %v681, %v674
    %v829 = vpack.c.b16 %v682, %v675
    %v830 = vpack.c.b16 %v683, %v676
    %v831 = vpack.c.b16 %v691, %v684
    %v832 = vpack.c.b16 %v692, %v685
    %v833 = vpack.c.b16 %v693, %v686
    %v834 = vpack.c.b16 %v694, %v687
    %v835 = vpack.c.b16 %v695, %v688
    %v836 = vpack.c.b16 %v696, %v689
    %v837 = vpack.c.b16 %v697, %v690
    %v838 = vpack.c.b16 %v705, %v698
    %v839 = vpack.c.b16 %v706, %v699
    %v840 = vpack.c.b16 %v707, %v700
    %v841 = vpack.c.b16 %v708, %v701
    %v842 = vpack.c.b16 %v709, %v702
    %v843 = vpack.c.b16 %v710, %v703
    %v844 = vpack.c.b16 %v711, %v704
    %v845 = vpack.c.b16 %v719, %v712
    %v846 = vpack.c.b16 %v720, %v713
    %v847 = vpack.c.b16 %v721, %v714
    %v848 = vpack.c.b16 %v722, %v715
    %v849 = vpack.c.b16 %v723, %v716
    %v850 = vpack.c.b16 %v724, %v717
    %v851 = vpack.c.b16 %v725, %v718
    %v852 = vpack.c.b16 %v733, %v726
    %v853 = vpack.c.b16 %v734, %v727
    %v854 = vpack.c.b16 %v735, %v728
    %v855 = vpack.c.b16 %v736, %v729
    %v856 = vpack.c.b16 %v737, %v730
    %v857 = vpack.c.b16 %v738, %v731
    %v858 = vpack.c.b16 %v739, %v732
    %v859 = vpack.c.b16 %v747, %v740
    %v860 = vpack.c.b16 %v748, %v741
    %v861 = vpack.c.b16 %v749, %v742
    %v862 = vpack.c.b16 %v750, %v743
    %v863 = vpack.c.b16 %v751, %v744
    %v864 = vpack.c.b16 %v752, %v745
    %v865 = vpack.c.b16 %v753, %v746
    %v1158 = vunpack.c.l.b16 %v184
    %v1159 = vunpack.c.h.b16 %v184
    %v1160 = vunpack.c.l.b16 %v185
    %v1161 = vunpack.c.h.b16 %v185
    %v1162 = vunpack.c.l.b16 %v186
    %v1163 = vunpack.c.h.b16 %v186
    %v1164 = vunpack.c.l.b16 %v187
    %v1165 = vunpack.c.h.b16 %v187
    %v1166 = vunpack.c.l.b16 %v188
    %v1167 = vunpack.c.h.b16 %v188
    %v1168 = vunpack.c.l.b16 %v189
    %v1169 = vunpack.c.h.b16 %v189
    %v1170 = vunpack.c.l.b16 %v190
    %v1171 = vunpack.c.h.b16 %v190
    %v1172 = vunpack.c.l.b16 %v191
    %v1173 = vunpack.c.h.b16 %v191
    %v1174 = vunpack.c.l.b16 %v192
    %v1175 = vunpack.c.h.b16 %v192
    %v1176 = vunpack.c.l.b16 %v193
    %v1177 = vunpack.c.h.b16 %v193
    %v1178 = vunpack.c.l.b16 %v194
    %v1179 = vunpack.c.h.b16 %v194
    %v1180 = vunpack.c.l.b16 %v195
    %v1181 = vunpack.c.h.b16 %v195
    %v1182 = vunpack.c.l.b16 %v196
    %v1183 = vunpack.c.h.b16 %v196
    %v1184 = vunpack.c.l.b16 %v197
    %v1185 = vunpack.c.h.b16 %v197
    %v1186 = vunpack.c.l.b16 %v198
    %v1187 = vunpack.c.h.b16 %v198
    %v1188 = vunpack.c.l.b16 %v199
    %v1189 = vunpack.c.h.b16 %v199
    %v1190 = vunpack.c.l.b16 %v200
    %v1191 = vunpack.c.h.b16 %v200
    %v1192 = vunpack.c.l.b16 %v201
    %v1193 = vunpack.c.h.b16 %v201
    %v1194 = vunpack.c.l.b16 %v202
    %v1195 = vunpack.c.h.b16 %v202
    %v1196 = vunpack.c.l.b16 %v203
    %v1197 = vunpack.c.h.b16 %v203
    %v1198 = vunpack.c.l.b16 %v204
    %v1199 = vunpack.c.h.b16 %v204
    %v1200 = vunpack.c.l.b16 %v205
    %v1201 = vunpack.c.h.b16 %v205
    %v1202 = vunpack.c.l.b16 %v206
    %v1203 = vunpack.c.h.b16 %v206
    %v1204 = vunpack.c.l.b16 %v207
    %v1205 = vunpack.c.h.b16 %v207
    %v1206 = vunpack.c.l.b16 %v208
    %v1207 = vunpack.c.h.b16 %v208
    %v1208 = vunpack.c.l.b16 %v209
    %v1209 = vunpack.c.h.b16 %v209
    %v1210 = vunpack.c.l.b16 %v210
    %v1211 = vunpack.c.h.b16 %v210
    %v1212 = vunpack.c.l.b16 %v211
    %v1213 = vunpack.c.h.b16 %v211
    %v1214 = vunpack.c.l.b16 %v212
    %v1215 = vunpack.c.h.b16 %v212
    %v1216 = vunpack.c.l.b16 %v213
    %v1217 = vunpack.c.h.b16 %v213
    %v1218 = vunpack.c.l.b16 %v214
    %v1219 = vunpack.c.h.b16 %v214
    %v1220 = vunpack.c.l.b16 %v215
    %v1221 = vunpack.c.h.b16 %v215
    %v1222 = vunpack.c.l.b16 %v216
    %v1223 = vunpack.c.h.b16 %v216
    %v1224 = vunpack.c.l.b16 %v217
    %v1225 = vunpack.c.h.b16 %v217
    %v1226 = vunpack.c.l.b16 %v218
    %v1227 = vunpack.c.h.b16 %v218
    %v1228 = vunpack.c.l.b16 %v219
    %v1229 = vunpack.c.h.b16 %v219
    %v1230 = vunpack.c.l.b16 %v220
    %v1231 = vunpack.c.h.b16 %v220
    %v1232 = vunpack.c.l.b16 %v221
    %v1233 = vunpack.c.h.b16 %v221
    %v1234 = vunpack.c.l.b16 %v222
    %v1235 = vunpack.c.h.b16 %v222
    %v1236 = vunpack.c.l.b16 %v223
    %v1237 = vunpack.c.h.b16 %v223
    %v1238 = vunpack.c.l.b16 %v224
    %v1239 = vunpack.c.h.b16 %v224
    %v1240 = vunpack.c.l.b16 %v225
    %v1241 = vunpack.c.h.b16 %v225
    %v1242 = vunpack.c.l.b16 %v226
    %v1243 = vunpack.c.h.b16 %v226
    %v1244 = vunpack.c.l.b16 %v227
    %v1245 = vunpack.c.h.b16 %v227
    %v1246 = vunpack.c.l.b16 %v228
    %v1247 = vunpack.c.h.b16 %v228
    %v1248 = vunpack.c.l.b16 %v229
    %v1249 = vunpack.c.h.b16 %v229
    %v1250 = vunpack.c.l.b16 %v230
    %v1251 = vunpack.c.h.b16 %v230
    %v1252 = vunpack.c.l.b16 %v231
    %v1253 = vunpack.c.h.b16 %v231
    %v1254 = vunpack.c.l.b16 %v232
    %v1255 = vunpack.c.h.b16 %v232
    %v1256 = vunpack.c.l.b16 %v233
    %v1257 = vunpack.c.h.b16 %v233
    %v1258 = vunpack.c.l.b16 %v234
    %v1259 = vunpack.c.h.b16 %v234
    %v1260 = vunpack.c.l.b16 %v235
    %v1261 = vunpack.c.h.b16 %v235
    %v1262 = vunpack.c.l.b16 %v236
    %v1263 = vunpack.c.h.b16 %v236
    %v1264 = vunpack.c.l.b16 %v237
    %v1265 = vunpack.c.h.b16 %v237
    %v1266 = vunpack.c.l.b16 %v238
    %v1267 = vunpack.c.h.b16 %v238
    %v1268 = vunpack.c.l.b16 %v239
    %v1269 = vunpack.c.h.b16 %v239
    %v1270 = vunpack.c.l.b16 %v240
    %v1271 = vunpack.c.h.b16 %v240
    %v1272 = vunpack.c.l.b16 %v241
    %v1273 = vunpack.c.h.b16 %v241
    %v1274 = vunpack.c.l.b16 %v242
    %v1275 = vunpack.c.h.b16 %v242
    %v1276 = vunpack.c.l.b16 %v243
    %v1277 = vunpack.c.h.b16 %v243
    %v1278 = vunpack.c.l.b16 %v244
    %v1279 = vunpack.c.h.b16 %v244
    %v1280 = vunpack.c.l.b16 %v245
    %v1281 = vunpack.c.h.b16 %v245
    %v1282 = vunpack.c.l.b16 %v246
    %v1283 = vunpack.c.h.b16 %v246
    %v1284 = vunpack.c.l.b16 %v247
    %v1285 = vunpack.c.h.b16 %v247
    %v1286 = vunpack.c.l.b16 %v248
    %v1287 = vunpack.c.h.b16 %v248
    %v1288 = vunpack.c.l.b16 %v249
    %v1289 = vunpack.c.h.b16 %v249
    %v1290 = vunpack.c.l.b16 %v250
    %v1291 = vunpack.c.h.b16 %v250
    %v1292 = vunpack.c.l.b16 %v251
    %v1293 = vunpack.c.h.b16 %v251
    %v1294 = vunpack.c.l.b16 %v252
    %v1295 = vunpack.c.h.b16 %v252
    %v1296 = vunpack.c.l.b16 %v253
    %v1297 = vunpack.c.h.b16 %v253
    %v1298 = vunpack.c.l.b16 %v254
    %v1299 = vunpack.c.h.b16 %v254
    %v1300 = vunpack.c.l.b16 %v255
    %v1301 = vunpack.c.h.b16 %v255
    %v1302 = vunpack.c.l.b16 %v256
    %v1303 = vunpack.c.h.b16 %v256
    %v1304 = vunpack.c.l.b16 %v257
    %v1305 = vunpack.c.h.b16 %v257
    %v1306 = vunpack.c.l.b16 %v258
    %v1307 = vunpack.c.h.b16 %v258
    %v1308 = vunpack.c.l.b16 %v259
    %v1309 = vunpack.c.h.b16 %v259
    %v1310 = vunpack.c.l.b16 %v260
    %v1311 = vunpack.c.h.b16 %v260
    %v1312 = vunpack.c.l.b16 %v261
    %v1313 = vunpack.c.h.b16 %v261
    %v1314 = vunpack.c.l.b16 %v262
    %v1315 = vunpack.c.h.b16 %v262
    %v1316 = vunpack.c.l.b16 %v263
    %v1317 = vunpack.c.h.b16 %v263
    %v1318 = vunpack.c.l.b16 %v264
    %v1319 = vunpack.c.h.b16 %v264
    %v1320 = vunpack.c.l.b16 %v265
    %v1321 = vunpack.c.h.b16 %v265
    %v1322 = vunpack.c.l.b16 %v266
    %v1323 = vunpack.c.h.b16 %v266
    %v1324 = vunpack.c.l.b16 %v267
    %v1325 = vunpack.c.h.b16 %v267
    %v1326 = vunpack.c.l.b16 %v268
    %v1327 = vunpack.c.h.b16 %v268
    %v1328 = vunpack.c.l.b16 %v269
    %v1329 = vunpack.c.h.b16 %v269
    %v1330 = vunpack.c.l.b16 %v270
    %v1331 = vunpack.c.h.b16 %v270
    %v1332 = vunpack.c.l.b16 %v271
    %v1333 = vunpack.c.h.b16 %v271
    %v1334 = vunpack.c.l.b16 %v272
    %v1335 = vunpack.c.h.b16 %v272
    %v1336 = vunpack.c.l.b16 %v273
    %v1337 = vunpack.c.h.b16 %v273
    %v1338 = vunpack.c.l.b16 %v274
    %v1339 = vunpack.c.h.b16 %v274
    %v1340 = vunpack.c.l.b16 %v275
    %v1341 = vunpack.c.h.b16 %v275
    %v1342 = vunpack.c.l.b16 %v276
    %v1343 = vunpack.c.h.b16 %v276
    %v1344 = vunpack.c.l.b16 %v277
    %v1345 = vunpack.c.h.b16 %v277
    %v1346 = vunpack.c.l.b16 %v278
    %v1347 = vunpack.c.h.b16 %v278
    %v1348 = vunpack.c.l.b16 %v279
    %v1349 = vunpack.c.h.b16 %v279
    %v1350 = vunpack.c.l.b16 %v280
    %v1351 = vunpack.c.h.b16 %v280
    %v1352 = vunpack.c.l.b16 %v281
    %v1353 = vunpack.c.h.b16 %v281
    %v1354 = vunpack.c.l.b16 %v282
    %v1355 = vunpack.c.h.b16 %v282
    %v1356 = vunpack.c.l.b16 %v283
    %v1357 = vunpack.c.h.b16 %v283
    %v1358 = vunpack.c.l.b16 %v284
    %v1359 = vunpack.c.h.b16 %v284
    %v1360 = vunpack.c.l.b16 %v285
    %v1361 = vunpack.c.h.b16 %v285
    %v1362 = vunpack.c.l.b16 %v286
    %v1363 = vunpack.c.h.b16 %v286
    %v1364 = vunpack.c.l.b16 %v287
    %v1365 = vunpack.c.h.b16 %v287
    %v1366 = vunpack.c.l.b16 %v288
    %v1367 = vunpack.c.h.b16 %v288
    %v1368 = vunpack.c.l.b16 %v289
    %v1369 = vunpack.c.h.b16 %v289
    %v1370 = vunpack.c.l.b16 %v290
    %v1371 = vunpack.c.h.b16 %v290
    %v1372 = vunpack.c.l.b16 %v291
    %v1373 = vunpack.c.h.b16 %v291
    %v1374 = vunpack.c.l.b16 %v292
    %v1375 = vunpack.c.h.b16 %v292
    %v1376 = vunpack.c.l.b16 %v293
    %v1377 = vunpack.c.h.b16 %v293
    %v1378 = vunpack.c.l.b16 %v294
    %v1379 = vunpack.c.h.b16 %v294
    %v1380 = vunpack.c.l.b16 %v295
    %v1381 = vunpack.c.h.b16 %v295
    %v1382 = vunpack.c.l.b16 %v296
    %v1383 = vunpack.c.h.b16 %v296
    %v1384 = vunpack.c.l.b16 %v297
    %v1385 = vunpack.c.h.b16 %v297
    %v1386 = vunpack.c.l.b16 %v298
    %v1387 = vunpack.c.h.b16 %v298
    %v1388 = vunpack.c.l.b16 %v299
    %v1389 = vunpack.c.h.b16 %v299
    %v1390 = vunpack.c.l.b16 %v300
    %v1391 = vunpack.c.h.b16 %v300
    %v1392 = vunpack.c.l.b16 %v301
    %v1393 = vunpack.c.h.b16 %v301
    %v1394 = vunpack.c.l.b16 %v302
    %v1395 = vunpack.c.h.b16 %v302
    %v1396 = vunpack.c.l.b16 %v303
    %v1397 = vunpack.c.h.b16 %v303
    %v1398 = vunpack.c.l.b16 %v304
    %v1399 = vunpack.c.h.b16 %v304
    %v1400 = vunpack.c.l.b16 %v305
    %v1401 = vunpack.c.h.b16 %v305
    %v1402 = vunpack.c.l.b16 %v306
    %v1403 = vunpack.c.h.b16 %v306
    %v1404 = vunpack.c.l.b16 %v307
    %v1405 = vunpack.c.h.b16 %v307
    %v1406 = vunpack.c.l.b16 %v308
    %v1407 = vunpack.c.h.b16 %v308
    %v1408 = vunpack.c.l.b16 %v309
    %v1409 = vunpack.c.h.b16 %v309
    %v1410 = vunpack.c.l.b16 %v310
    %v1411 = vunpack.c.h.b16 %v310
    %v1412 = vunpack.c.l.b16 %v311
    %v1413 = vunpack.c.h.b16 %v311
    %v1414 = vunpack.c.l.b16 %v312
    %v1415 = vunpack.c.h.b16 %v312
    %v1416 = vunpack.c.l.b16 %v313
    %v1417 = vunpack.c.h.b16 %v313
    %v1418 = vunpack.c.l.b16 %v314
    %v1419 = vunpack.c.h.b16 %v314
    %v1420 = vunpack.c.l.b16 %v315
    %v1421 = vunpack.c.h.b16 %v315
    %v1422 = vunpack.c.l.b16 %v316
    %v1423 = vunpack.c.h.b16 %v316
    %v1424 = vunpack.c.l.b16 %v317
    %v1425 = vunpack.c.h.b16 %v317
    %v1426 = vunpack.c.l.b16 %v318
    %v1427 = vunpack.c.h.b16 %v318
    %v1428 = vunpack.c.l.b16 %v319
    %v1429 = vunpack.c.h.b16 %v319
    %v1430 = vunpack.c.l.b16 %v320
    %v1431 = vunpack.c.h.b16 %v320
    %v1432 = vunpack.c.l.b16 %v321
    %v1433 = vunpack.c.h.b16 %v321
    %v1434 = vunpack.c.l.b16 %v322
    %v1435 = vunpack.c.h.b16 %v322
    %v1436 = vunpack.c.l.b16 %v323
    %v1437 = vunpack.c.h.b16 %v323
    %v1438 = vunpack.c.l.b16 %v324
    %v1439 = vunpack.c.h.b16 %v324
    %v1440 = vunpack.c.l.b16 %v325
    %v1441 = vunpack.c.h.b16 %v325
    %v1442 = vunpack.c.l.b16 %v326
    %v1443 = vunpack.c.h.b16 %v326
    %v1444 = vunpack.c.l.b16 %v327
    %v1445 = vunpack.c.h.b16 %v327
    %v1446 = vunpack.c.l.b16 %v328
    %v1447 = vunpack.c.h.b16 %v328
    %v1448 = vunpack.c.l.b16 %v329
    %v1449 = vunpack.c.h.b16 %v329
    %v1450 = vunpack.c.l.b16 %v330
    %v1451 = vunpack.c.h.b16 %v330
    %v1452 = vunpack.c.l.b16 %v331
    %v1453 = vunpack.c.h.b16 %v331
    %v1454 = vunpack.c.l.b16 %v332
    %v1455 = vunpack.c.h.b16 %v332
    %v1456 = vunpack.c.l.b16 %v333
    %v1457 = vunpack.c.h.b16 %v333
    %v1458 = vunpack.c.l.b16 %v334
    %v1459 = vunpack.c.h.b16 %v334
    %v1460 = vunpack.c.l.b16 %v335
    %v1461 = vunpack.c.h.b16 %v335
    %v1462 = vunpack.c.l.b16 %v336
    %v1463 = vunpack.c.h.b16 %v336
    %v1464 = vunpack.c.l.b16 %v337
    %v1465 = vunpack.c.h.b16 %v337
    %v1466 = vunpack.c.l.b16 %v338
    %v1467 = vunpack.c.h.b16 %v338
    %v1468 = vunpack.c.l.b16 %v339
    %v1469 = vunpack.c.h.b16 %v339
    %v1470 = vunpack.c.l.b16 %v340
    %v1471 = vunpack.c.h.b16 %v340
    %v1472 = vunpack.c.l.b16 %v341
    %v1473 = vunpack.c.h.b16 %v341
    %v1474 = vunpack.c.l.b16 %v342
    %v1475 = vunpack.c.h.b16 %v342
    %v1476 = vunpack.c.l.b16 %v343
    %v1477 = vunpack.c.h.b16 %v343
    %v1478 = vunpack.c.l.b16 %v344
    %v1479 = vunpack.c.h.b16 %v344
    %v1480 = vunpack.c.l.b16 %v345
    %v1481 = vunpack.c.h.b16 %v345
    %v1482 = vunpack.c.l.b16 %v346
    %v1483 = vunpack.c.h.b16 %v346
    %v1484 = vunpack.c.l.b16 %v347
    %v1485 = vunpack.c.h.b16 %v347
    %v1486 = vunpack.c.l.b16 %v348
    %v1487 = vunpack.c.h.b16 %v348
    %v1488 = vunpack.c.l.b16 %v349
    %v1489 = vunpack.c.h.b16 %v349
    %v1490 = vunpack.c.l.b16 %v350
    %v1491 = vunpack.c.h.b16 %v350
    %v1492 = vunpack.c.l.b16 %v351
    %v1493 = vunpack.c.h.b16 %v351
    %v1494 = vunpack.c.l.b16 %v352
    %v1495 = vunpack.c.h.b16 %v352
    %v1496 = vunpack.c.l.b16 %v353
    %v1497 = vunpack.c.h.b16 %v353
    %v1498 = vunpack.c.l.b16 %v354
    %v1499 = vunpack.c.h.b16 %v354
    %v1500 = vunpack.c.l.b16 %v355
    %v1501 = vunpack.c.h.b16 %v355
    %v1502 = vunpack.c.l.b16 %v356
    %v1503 = vunpack.c.h.b16 %v356
    %v1504 = vunpack.c.l.b16 %v357
    %v1505 = vunpack.c.h.b16 %v357
    %v1506 = vunpack.c.l.b16 %v358
    %v1507 = vunpack.c.h.b16 %v358
    %v1508 = vunpack.c.l.b16 %v359
    %v1509 = vunpack.c.h.b16 %v359
    %v1510 = vunpack.c.l.b16 %v360
    %v1511 = vunpack.c.h.b16 %v360
    %v1512 = vunpack.c.l.b16 %v361
    %v1513 = vunpack.c.h.b16 %v361
    %v1514 = vunpack.c.l.b16 %v362
    %v1515 = vunpack.c.h.b16 %v362
    %v1516 = vunpack.c.l.b16 %v363
    %v1517 = vunpack.c.h.b16 %v363
    %v1518 = vunpack.c.l.b16 %v364
    %v1519 = vunpack.c.h.b16 %v364
    %v1520 = vunpack.c.l.b16 %v365
    %v1521 = vunpack.c.h.b16 %v365
    %v1522 = vunpack.c.l.b16 %v366
    %v1523 = vunpack.c.h.b16 %v366
    %v1524 = vunpack.c.l.b16 %v367
    %v1525 = vunpack.c.h.b16 %v367
    %v1526 = vunpack.c.l.b16 %v368
    %v1527 = vunpack.c.h.b16 %v368
    %v1528 = vunpack.c.l.b16 %v369
    %v1529 = vunpack.c.h.b16 %v369
    %v1530 = vunpack.c.l.b16 %v370
    %v1531 = vunpack.c.h.b16 %v370
    %v1532 = vunpack.c.l.b16 %v371
    %v1533 = vunpack.c.h.b16 %v371
    %v1534 = vunpack.c.l.b16 %v372
    %v1535 = vunpack.c.h.b16 %v372
    %v1536 = vunpack.c.l.b16 %v373
    %v1537 = vunpack.c.h.b16 %v373
    %v1538 = vunpack.c.l.b16 %v374
    %v1539 = vunpack.c.h.b16 %v374
    %v1540 = vunpack.c.l.b16 %v375
    %v1541 = vunpack.c.h.b16 %v375
    %v1542 = vunpack.c.l.b16 %v376
    %v1543 = vunpack.c.h.b16 %v376
    %v1544 = vunpack.c.l.b16 %v377
    %v1545 = vunpack.c.h.b16 %v377
    %v1546 = vunpack.c.l.b16 %v378
    %v1547 = vunpack.c.h.b16 %v378
    %v1548 = vunpack.c.l.b16 %v379
    %v1549 = vunpack.c.h.b16 %v379
    %v1550 = vpack.c.b16 %v1162, %v1158
    %v1551 = vpack.c.b16 %v1163, %v1159
    %v1552 = vpack.c.b16 %v1164, %v1160
    %v1553 = vpack.c.b16 %v1165, %v1161
    %v1554 = vpack.c.b16 %v1170, %v1166
    %v1555 = vpack.c.b16 %v1171, %v1167
    %v1556 = vpack.c.b16 %v1172, %v1168
    %v1557 = vpack.c.b16 %v1173, %v1169
    %v1558 = vpack.c.b16 %v1178, %v1174
    %v1559 = vpack.c.b16 %v1179, %v1175
    %v1560 = vpack.c.b16 %v1180, %v1176
    %v1561 = vpack.c.b16 %v1181, %v1177
    %v1562 = vpack.c.b16 %v1186, %v1182
    %v1563 = vpack.c.b16 %v1187, %v1183
    %v1564 = vpack.c.b16 %v1188, %v1184
    %v1565 = vpack.c.b16 %v1189, %v1185
    %v1566 = vpack.c.b16 %v1194, %v1190
    %v1567 = vpack.c.b16 %v1195, %v1191
    %v1568 = vpack.c.b16 %v1196, %v1192
    %v1569 = vpack.c.b16 %v1197, %v1193
    %v1570 = vpack.c.b16 %v1202, %v1198
    %v1571 = vpack.c.b16 %v1203, %v1199
    %v1572 = vpack.c.b16 %v1204, %v1200
    %v1573 = vpack.c.b16 %v1205, %v1201
    %v1574 = vpack.c.b16 %v1210, %v1206
    %v1575 = vpack.c.b16 %v1211, %v1207
    %v1576 = vpack.c.b16 %v1212, %v1208
    %v1577 = vpack.c.b16 %v1213, %v1209
    %v1578 = vpack.c.b16 %v1218, %v1214
    %v1579 = vpack.c.b16 %v1219, %v1215
    %v1580 = vpack.c.b16 %v1220, %v1216
    %v1581 = vpack.c.b16 %v1221, %v1217
    %v1582 = vpack.c.b16 %v1226, %v1222
    %v1583 = vpack.c.b16 %v1227, %v1223
    %v1584 = vpack.c.b16 %v1228, %v1224
    %v1585 = vpack.c.b16 %v1229, %v1225
    %v1586 = vpack.c.b16 %v1234, %v1230
    %v1587 = vpack.c.b16 %v1235, %v1231
    %v1588 = vpack.c.b16 %v1236, %v1232
    %v1589 = vpack.c.b16 %v1237, %v1233
    %v1590 = vpack.c.b16 %v1242, %v1238
    %v1591 = vpack.c.b16 %v1243, %v1239
    %v1592 = vpack.c.b16 %v1244, %v1240
    %v1593 = vpack.c.b16 %v1245, %v1241
    %v1594 = vpack.c.b16 %v1250, %v1246
    %v1595 = vpack.c.b16 %v1251, %v1247
    %v1596 = vpack.c.b16 %v1252, %v1248
    %v1597 = vpack.c.b16 %v1253, %v1249
    %v1598 = vpack.c.b16 %v1258, %v1254
    %v1599 = vpack.c.b16 %v1259, %v1255
    %v1600 = vpack.c.b16 %v1260, %v1256
    %v1601 = vpack.c.b16 %v1261, %v1257
    %v1602 = vpack.c.b16 %v1266, %v1262
    %v1603 = vpack.c.b16 %v1267, %v1263
    %v1604 = vpack.c.b16 %v1268, %v1264
    %v1605 = vpack.c.b16 %v1269, %v1265
    %v1606 = vpack.c.b16 %v1274, %v1270
    %v1607 = vpack.c.b16 %v1275, %v1271
    %v1608 = vpack.c.b16 %v1276, %v1272
    %v1609 = vpack.c.b16 %v1277, %v1273
    %v1610 = vpack.c.b16 %v1282, %v1278
    %v1611 = vpack.c.b16 %v1283, %v1279
    %v1612 = vpack.c.b16 %v1284, %v1280
    %v1613 = vpack.c.b16 %v1285, %v1281
    %v1614 = vpack.c.b16 %v1290, %v1286
    %v1615 = vpack.c.b16 %v1291, %v1287
    %v1616 = vpack.c.b16 %v1292, %v1288
    %v1617 = vpack.c.b16 %v1293, %v1289
    %v1618 = vpack.c.b16 %v1298, %v1294
    %v1619 = vpack.c.b16 %v1299, %v1295
    %v1620 = vpack.c.b16 %v1300, %v1296
    %v1621 = vpack.c.b16 %v1301, %v1297
    %v1622 = vpack.c.b16 %v1306, %v1302
    %v1623 = vpack.c.b16 %v1307, %v1303
    %v1624 = vpack.c.b16 %v1308, %v1304
    %v1625 = vpack.c.b16 %v1309, %v1305
    %v1626 = vpack.c.b16 %v1314, %v1310
    %v1627 = vpack.c.b16 %v1315, %v1311
    %v1628 = vpack.c.b16 %v1316, %v1312
    %v1629 = vpack.c.b16 %v1317, %v1313
    %v1630 = vpack.c.b16 %v1322, %v1318
    %v1631 = vpack.c.b16 %v1323, %v1319
    %v1632 = vpack.c.b16 %v1324, %v1320
    %v1633 = vpack.c.b16 %v1325, %v1321
    %v1634 = vpack.c.b16 %v1330, %v1326
    %v1635 = vpack.c.b16 %v1331, %v1327
    %v1636 = vpack.c.b16 %v1332, %v1328
    %v1637 = vpack.c.b16 %v1333, %v1329
    %v1638 = vpack.c.b16 %v1338, %v1334
    %v1639 = vpack.c.b16 %v1339, %v1335
    %v1640 = vpack.c.b16 %v1340, %v1336
    %v1641 = vpack.c.b16 %v1341, %v1337
    %v1642 = vpack.c.b16 %v1346, %v1342
    %v1643 = vpack.c.b16 %v1347, %v1343
    %v1644 = vpack.c.b16 %v1348, %v1344
    %v1645 = vpack.c.b16 %v1349, %v1345
    %v1646 = vpack.c.b16 %v1354, %v1350
    %v1647 = vpack.c.b16 %v1355, %v1351
    %v1648 = vpack.c.b16 %v1356, %v1352
    %v1649 = vpack.c.b16 %v1357, %v1353
    %v1650 = vpack.c.b16 %v1362, %v1358
    %v1651 = vpack.c.b16 %v1363, %v1359
    %v1652 = vpack.c.b16 %v1364, %v1360
    %v1653 = vpack.c.b16 %v1365, %v1361
    %v1654 = vpack.c.b16 %v1370, %v1366
    %v1655 = vpack.c.b16 %v1371, %v1367
    %v1656 = vpack.c.b16 %v1372, %v1368
    %v1657 = vpack.c.b16 %v1373, %v1369
    %v1658 = vpack.c.b16 %v1378, %v1374
    %v1659 = vpack.c.b16 %v1379, %v1375
    %v1660 = vpack.c.b16 %v1380, %v1376
    %v1661 = vpack.c.b16 %v1381, %v1377
    %v1662 = vpack.c.b16 %v1386, %v1382
    %v1663 = vpack.c.b16 %v1387, %v1383
    %v1664 = vpack.c.b16 %v1388, %v1384
    %v1665 = vpack.c.b16 %v1389, %v1385
    %v1666 = vpack.c.b16 %v1394, %v1390
    %v1667 = vpack.c.b16 %v1395, %v1391
    %v1668 = vpack.c.b16 %v1396, %v1392
    %v1669 = vpack.c.b16 %v1397, %v1393
    %v1670 = vpack.c.b16 %v1402, %v1398
    %v1671 = vpack.c.b16 %v1403, %v1399
    %v1672 = vpack.c.b16 %v1404, %v1400
    %v1673 = vpack.c.b16 %v1405, %v1401
    %v1674 = vpack.c.b16 %v1410, %v1406
    %v1675 = vpack.c.b16 %v1411, %v1407
    %v1676 = vpack.c.b16 %v1412, %v1408
    %v1677 = vpack.c.b16 %v1413, %v1409
    %v1678 = vpack.c.b16 %v1418, %v1414
    %v1679 = vpack.c.b16 %v1419, %v1415
    %v1680 = vpack.c.b16 %v1420, %v1416
    %v1681 = vpack.c.b16 %v1421, %v1417
    %v1682 = vpack.c.b16 %v1426, %v1422
    %v1683 = vpack.c.b16 %v1427, %v1423
    %v1684 = vpack.c.b16 %v1428, %v1424
    %v1685 = vpack.c.b16 %v1429, %v1425
    %v1686 = vpack.c.b16 %v1434, %v1430
    %v1687 = vpack.c.b16 %v1435, %v1431
    %v1688 = vpack.c.b16 %v1436, %v1432
    %v1689 = vpack.c.b16 %v1437, %v1433
    %v1690 = vpack.c.b16 %v1442, %v1438
    %v1691 = vpack.c.b16 %v1443, %v1439
    %v1692 = vpack.c.b16 %v1444, %v1440
    %v1693 = vpack.c.b16 %v1445, %v1441
    %v1694 = vpack.c.b16 %v1450, %v1446
    %v1695 = vpack.c.b16 %v1451, %v1447
    %v1696 = vpack.c.b16 %v1452, %v1448
    %v1697 = vpack.c.b16 %v1453, %v1449
    %v1698 = vpack.c.b16 %v1458, %v1454
    %v1699 = vpack.c.b16 %v1459, %v1455
    %v1700 = vpack.c.b16 %v1460, %v1456
    %v1701 = vpack.c.b16 %v1461, %v1457
    %v1702 = vpack.c.b16 %v1466, %v1462
    %v1703 = vpack.c.b16 %v1467, %v1463
    %v1704 = vpack.c.b16 %v1468, %v1464
    %v1705 = vpack.c.b16 %v1469, %v1465
    %v1706 = vpack.c.b16 %v1474, %v1470
    %v1707 = vpack.c.b16 %v1475, %v1471
    %v1708 = vpack.c.b16 %v1476, %v1472
    %v1709 = vpack.c.b16 %v1477, %v1473
    %v1710 = vpack.c.b16 %v1482, %v1478
    %v1711 = vpack.c.b16 %v1483, %v1479
    %v1712 = vpack.c.b16 %v1484, %v1480
    %v1713 = vpack.c.b16 %v1485, %v1481
    %v1714 = vpack.c.b16 %v1490, %v1486
    %v1715 = vpack.c.b16 %v1491, %v1487
    %v1716 = vpack.c.b16 %v1492, %v1488
    %v1717 = vpack.c.b16 %v1493, %v1489
    %v1718 = vpack.c.b16 %v1498, %v1494
    %v1719 = vpack.c.b16 %v1499, %v1495
    %v1720 = vpack.c.b16 %v1500, %v1496
    %v1721 = vpack.c.b16 %v1501, %v1497
    %v1722 = vpack.c.b16 %v1506, %v1502
    %v1723 = vpack.c.b16 %v1507, %v1503
    %v1724 = vpack.c.b16 %v1508, %v1504
    %v1725 = vpack.c.b16 %v1509, %v1505
    %v1726 = vpack.c.b16 %v1514, %v1510
    %v1727 = vpack.c.b16 %v1515, %v1511
    %v1728 = vpack.c.b16 %v1516, %v1512
    %v1729 = vpack.c.b16 %v1517, %v1513
    %v1730 = vpack.c.b16 %v1522, %v1518
    %v1731 = vpack.c.b16 %v1523, %v1519
    %v1732 = vpack.c.b16 %v1524, %v1520
    %v1733 = vpack.c.b16 %v1525, %v1521
    %v1734 = vpack.c.b16 %v1530, %v1526
    %v1735 = vpack.c.b16 %v1531, %v1527
    %v1736 = vpack.c.b16 %v1532, %v1528
    %v1737 = vpack.c.b16 %v1533, %v1529
    %v1738 = vpack.c.b16 %v1538, %v1534
    %v1739 = vpack.c.b16 %v1539, %v1535
    %v1740 = vpack.c.b16 %v1540, %v1536
    %v1741 = vpack.c.b16 %v1541, %v1537
    %v1742 = vpack.c.b16 %v1546, %v1542
    %v1743 = vpack.c.b16 %v1547, %v1543
    %v1744 = vpack.c.b16 %v1548, %v1544
    %v1745 = vpack.c.b16 %v1549, %v1545
    %vm1942 = vcmask 130048
    %v1944 = vsel %vm1942, %v760, 0
    %v1947 = vsel %vm1942, %v767, 0
    %v1950 = vsel %vm1942, %v774, 0
    %v1953 = vsel %vm1942, %v781, 0
    %v1956 = vsel %vm1942, %v788, 0
    %v1959 = vsel %vm1942, %v795, 0
    %v1962 = vsel %vm1942, %v802, 0
    %v1965 = vsel %vm1942, %v809, 0
    %v1968 = vsel %vm1942, %v816, 0
    %v1971 = vsel %vm1942, %v823, 0
    %v1974 = vsel %vm1942, %v830, 0
    %v1977 = vsel %vm1942, %v837, 0
    %v1980 = vsel %vm1942, %v844, 0
    %v1983 = vsel %vm1942, %v851, 0
    %v1986 = vsel %vm1942, %v858, 0
    %v1989 = vsel %vm1942, %v865, 0
    %1991 = vmatprep.subr.bf16.mxu0 %v1579
    %1992 = vmatpush1.bf16.msra.mxu0 %v1578
    %1993 = vmatprep.subr.bf16.mxu0 %v1575
    %1994 = vmatpush1.bf16.msra.mxu0 %v1574
    %1995 = vmatprep.subr.bf16.mxu0 %v1571
    %1996 = vmatpush1.bf16.msra.mxu0 %v1570
    %1997 = vmatprep.subr.bf16.mxu0 %v1567
    %1998 = vmatpush1.bf16.msra.mxu0 %v1566
    %1999 = vmatprep.subr.bf16.mxu0 %v1563
    %2000 = vmatpush1.bf16.msra.mxu0 %v1562
    %2001 = vmatprep.subr.bf16.mxu0 %v1559
    %2002 = vmatpush1.bf16.msra.mxu0 %v1558
    %2003 = vmatprep.subr.bf16.mxu0 %v1555
    %2004 = vmatpush1.bf16.msra.mxu0 %v1554
    %2005 = vmatprep.subr.bf16.mxu0 %v1551
    %2006 = vmatpush1.bf16.msra.mxu0 %v1550
    %2007 = vmatprep.subr.bf16.mxu0 %v1611
    %2008 = vmatpush2.bf16.msra.mxu0 %v1610
    %2009 = vmatprep.subr.bf16.mxu0 %v1607
    %2010 = vmatpush2.bf16.msra.mxu0 %v1606
    %2011 = vmatprep.subr.bf16.mxu0 %v1603
    %2012 = vmatpush2.bf16.msra.mxu0 %v1602
    %2013 = vmatprep.subr.bf16.mxu0 %v1599
    %2014 = vmatpush2.bf16.msra.mxu0 %v1598
    %2015 = vmatprep.subr.bf16.mxu0 %v1595
    %2016 = vmatpush2.bf16.msra.mxu0 %v1594
    %2017 = vmatprep.subr.bf16.mxu0 %v1591
    %2018 = vmatpush2.bf16.msra.mxu0 %v1590
    %2019 = vmatprep.subr.bf16.mxu0 %v1587
    %2020 = vmatpush2.bf16.msra.mxu0 %v1586
    %2021 = vmatprep.subr.bf16.mxu0 %v1583
    %2022 = vmatpush2.bf16.msra.mxu0 %v1582
    %2023 = vmatprep.mubr.bf16.mxu0 %v755
    %2024 = vmatmul.mubr.bf16.gmra.mxu0 %v754
    %v2025 = vpop.f32.mrf.mxu0
    %v2026 = vadd.f32 %v385, %v2025
    %v2027 = vpop.f32.mrf.mxu0
    %v2028 = vadd.f32 %v389, %v2027
    %v2029 = vpop.f32.mrf.mxu0
    %v2030 = vadd.f32 %v385, %v2029
    %v2031 = vpop.f32.mrf.mxu0
    %v2032 = vadd.f32 %v389, %v2031
    %2033 = vmatprep.mubr.bf16.mxu0 %v762
    %2034 = vmatmul.mubr.bf16.gmra.mxu0 %v761
    %v2035 = vpop.f32.mrf.mxu0
    %v2036 = vadd.f32 %v385, %v2035
    %v2037 = vpop.f32.mrf.mxu0
    %v2038 = vadd.f32 %v389, %v2037
    %v2039 = vpop.f32.mrf.mxu0
    %v2040 = vadd.f32 %v385, %v2039
    %v2041 = vpop.f32.mrf.mxu0
    %v2042 = vadd.f32 %v389, %v2041
    %2043 = vmatprep.mubr.bf16.mxu0 %v769
    %2044 = vmatmul.mubr.bf16.gmra.mxu0 %v768
    %v2045 = vpop.f32.mrf.mxu0
    %v2046 = vadd.f32 %v385, %v2045
    %v2047 = vpop.f32.mrf.mxu0
    %v2048 = vadd.f32 %v389, %v2047
    %v2049 = vpop.f32.mrf.mxu0
    %v2050 = vadd.f32 %v385, %v2049
    %v2051 = vpop.f32.mrf.mxu0
    %v2052 = vadd.f32 %v389, %v2051
    %2053 = vmatprep.mubr.bf16.mxu0 %v776
    %2054 = vmatmul.mubr.bf16.gmra.mxu0 %v775
    %v2055 = vpop.f32.mrf.mxu0
    %v2056 = vadd.f32 %v385, %v2055
    %v2057 = vpop.f32.mrf.mxu0
    %v2058 = vadd.f32 %v389, %v2057
    %v2059 = vpop.f32.mrf.mxu0
    %v2060 = vadd.f32 %v385, %v2059
    %v2061 = vpop.f32.mrf.mxu0
    %v2062 = vadd.f32 %v389, %v2061
    %2063 = vmatprep.mubr.bf16.mxu0 %v783
    %2064 = vmatmul.mubr.bf16.gmra.mxu0 %v782
    %v2065 = vpop.f32.mrf.mxu0
    %v2066 = vadd.f32 %v385, %v2065
    %v2067 = vpop.f32.mrf.mxu0
    %v2068 = vadd.f32 %v389, %v2067
    %v2069 = vpop.f32.mrf.mxu0
    %v2070 = vadd.f32 %v385, %v2069
    %v2071 = vpop.f32.mrf.mxu0
    %v2072 = vadd.f32 %v389, %v2071
    %2073 = vmatprep.mubr.bf16.mxu0 %v790
    %2074 = vmatmul.mubr.bf16.gmra.mxu0 %v789
    %v2075 = vpop.f32.mrf.mxu0
    %v2076 = vadd.f32 %v385, %v2075
    %v2077 = vpop.f32.mrf.mxu0
    %v2078 = vadd.f32 %v389, %v2077
    %v2079 = vpop.f32.mrf.mxu0
    %v2080 = vadd.f32 %v385, %v2079
    %v2081 = vpop.f32.mrf.mxu0
    %v2082 = vadd.f32 %v389, %v2081
    %2083 = vmatprep.mubr.bf16.mxu0 %v797
    %2084 = vmatmul.mubr.bf16.gmra.mxu0 %v796
    %v2085 = vpop.f32.mrf.mxu0
    %v2086 = vadd.f32 %v385, %v2085
    %v2087 = vpop.f32.mrf.mxu0
    %v2088 = vadd.f32 %v389, %v2087
    %v2089 = vpop.f32.mrf.mxu0
    %v2090 = vadd.f32 %v385, %v2089
    %v2091 = vpop.f32.mrf.mxu0
    %v2092 = vadd.f32 %v389, %v2091
    %2093 = vmatprep.mubr.bf16.mxu0 %v804
    %2094 = vmatmul.mubr.bf16.gmra.mxu0 %v803
    %v2095 = vpop.f32.mrf.mxu0
    %v2096 = vadd.f32 %v385, %v2095
    %v2097 = vpop.f32.mrf.mxu0
    %v2098 = vadd.f32 %v389, %v2097
    %v2099 = vpop.f32.mrf.mxu0
    %v2100 = vadd.f32 %v385, %v2099
    %v2101 = vpop.f32.mrf.mxu0
    %v2102 = vadd.f32 %v389, %v2101
    %2103 = vmatprep.mubr.bf16.mxu0 %v811
    %2104 = vmatmul.mubr.bf16.gmra.mxu0 %v810
    %v2105 = vpop.f32.mrf.mxu0
    %v2106 = vadd.f32 %v385, %v2105
    %v2107 = vpop.f32.mrf.mxu0
    %v2108 = vadd.f32 %v389, %v2107
    %v2109 = vpop.f32.mrf.mxu0
    %v2110 = vadd.f32 %v385, %v2109
    %v2111 = vpop.f32.mrf.mxu0
    %v2112 = vadd.f32 %v389, %v2111
    %2113 = vmatprep.mubr.bf16.mxu0 %v818
    %2114 = vmatmul.mubr.bf16.gmra.mxu0 %v817
    %v2115 = vpop.f32.mrf.mxu0
    %v2116 = vadd.f32 %v385, %v2115
    %v2117 = vpop.f32.mrf.mxu0
    %v2118 = vadd.f32 %v389, %v2117
    %v2119 = vpop.f32.mrf.mxu0
    %v2120 = vadd.f32 %v385, %v2119
    %v2121 = vpop.f32.mrf.mxu0
    %v2122 = vadd.f32 %v389, %v2121
    %2123 = vmatprep.mubr.bf16.mxu0 %v825
    %2124 = vmatmul.mubr.bf16.gmra.mxu0 %v824
    %v2125 = vpop.f32.mrf.mxu0
    %v2126 = vadd.f32 %v385, %v2125
    %v2127 = vpop.f32.mrf.mxu0
    %v2128 = vadd.f32 %v389, %v2127
    %v2129 = vpop.f32.mrf.mxu0
    %v2130 = vadd.f32 %v385, %v2129
    %v2131 = vpop.f32.mrf.mxu0
    %v2132 = vadd.f32 %v389, %v2131
    %2133 = vmatprep.mubr.bf16.mxu0 %v832
    %2134 = vmatmul.mubr.bf16.gmra.mxu0 %v831
    %v2135 = vpop.f32.mrf.mxu0
    %v2136 = vadd.f32 %v385, %v2135
    %v2137 = vpop.f32.mrf.mxu0
    %v2138 = vadd.f32 %v389, %v2137
    %v2139 = vpop.f32.mrf.mxu0
    %v2140 = vadd.f32 %v385, %v2139
    %v2141 = vpop.f32.mrf.mxu0
    %v2142 = vadd.f32 %v389, %v2141
    %2143 = vmatprep.mubr.bf16.mxu0 %v839
    %2144 = vmatmul.mubr.bf16.gmra.mxu0 %v838
    %v2145 = vpop.f32.mrf.mxu0
    %v2146 = vadd.f32 %v385, %v2145
    %v2147 = vpop.f32.mrf.mxu0
    %v2148 = vadd.f32 %v389, %v2147
    %v2149 = vpop.f32.mrf.mxu0
    %v2150 = vadd.f32 %v385, %v2149
    %v2151 = vpop.f32.mrf.mxu0
    %v2152 = vadd.f32 %v389, %v2151
    %2153 = vmatprep.mubr.bf16.mxu0 %v846
    %2154 = vmatmul.mubr.bf16.gmra.mxu0 %v845
    %v2155 = vpop.f32.mrf.mxu0
    %v2156 = vadd.f32 %v385, %v2155
    %v2157 = vpop.f32.mrf.mxu0
    %v2158 = vadd.f32 %v389, %v2157
    %v2159 = vpop.f32.mrf.mxu0
    %v2160 = vadd.f32 %v385, %v2159
    %v2161 = vpop.f32.mrf.mxu0
    %v2162 = vadd.f32 %v389, %v2161
    %2163 = vmatprep.mubr.bf16.mxu0 %v853
    %2164 = vmatmul.mubr.bf16.gmra.mxu0 %v852
    %v2165 = vpop.f32.mrf.mxu0
    %v2166 = vadd.f32 %v385, %v2165
    %v2167 = vpop.f32.mrf.mxu0
    %v2168 = vadd.f32 %v389, %v2167
    %v2169 = vpop.f32.mrf.mxu0
    %v2170 = vadd.f32 %v385, %v2169
    %v2171 = vpop.f32.mrf.mxu0
    %v2172 = vadd.f32 %v389, %v2171
    %2173 = vmatprep.mubr.bf16.mxu0 %v860
    %2174 = vmatmul.mubr.bf16.gmra.mxu0 %v859
    %v2175 = vpop.f32.mrf.mxu0
    %v2176 = vadd.f32 %v385, %v2175
    %v2177 = vpop.f32.mrf.mxu0
    %v2178 = vadd.f32 %v389, %v2177
    %v2179 = vpop.f32.mrf.mxu0
    %v2180 = vadd.f32 %v385, %v2179
    %v2181 = vpop.f32.mrf.mxu0
    %v2182 = vadd.f32 %v389, %v2181
    %2183 = vdwg.mxu0
    %2184 = vmatprep.subr.bf16.mxu0 %v1643
    %2185 = vmatpush1.bf16.msra.mxu0 %v1642
    %2186 = vmatprep.subr.bf16.mxu0 %v1639
    %2187 = vmatpush1.bf16.msra.mxu0 %v1638
    %2188 = vmatprep.subr.bf16.mxu0 %v1635
    %2189 = vmatpush1.bf16.msra.mxu0 %v1634
    %2190 = vmatprep.subr.bf16.mxu0 %v1631
    %2191 = vmatpush1.bf16.msra.mxu0 %v1630
    %2192 = vmatprep.subr.bf16.mxu0 %v1627
    %2193 = vmatpush1.bf16.msra.mxu0 %v1626
    %2194 = vmatprep.subr.bf16.mxu0 %v1623
    %2195 = vmatpush1.bf16.msra.mxu0 %v1622
    %2196 = vmatprep.subr.bf16.mxu0 %v1619
    %2197 = vmatpush1.bf16.msra.mxu0 %v1618
    %2198 = vmatprep.subr.bf16.mxu0 %v1615
    %2199 = vmatpush1.bf16.msra.mxu0 %v1614
    %2200 = vmatprep.subr.bf16.mxu0 %v1675
    %2201 = vmatpush2.bf16.msra.mxu0 %v1674
    %2202 = vmatprep.subr.bf16.mxu0 %v1671
    %2203 = vmatpush2.bf16.msra.mxu0 %v1670
    %2204 = vmatprep.subr.bf16.mxu0 %v1667
    %2205 = vmatpush2.bf16.msra.mxu0 %v1666
    %2206 = vmatprep.subr.bf16.mxu0 %v1663
    %2207 = vmatpush2.bf16.msra.mxu0 %v1662
    %2208 = vmatprep.subr.bf16.mxu0 %v1659
    %2209 = vmatpush2.bf16.msra.mxu0 %v1658
    %2210 = vmatprep.subr.bf16.mxu0 %v1655
    %2211 = vmatpush2.bf16.msra.mxu0 %v1654
    %2212 = vmatprep.subr.bf16.mxu0 %v1651
    %2213 = vmatpush2.bf16.msra.mxu0 %v1650
    %2214 = vmatprep.subr.bf16.mxu0 %v1647
    %2215 = vmatpush2.bf16.msra.mxu0 %v1646
    %2216 = vmatprep.mubr.bf16.mxu0 %v757
    %2217 = vmatmul.mubr.bf16.gmra.mxu0 %v756
    %v2218 = vpop.f32.mrf.mxu0
    %v2219 = vadd.f32 %v2026, %v2218
    %v2220 = vpop.f32.mrf.mxu0
    %v2221 = vadd.f32 %v2028, %v2220
    %v2222 = vpop.f32.mrf.mxu0
    %v2223 = vadd.f32 %v2030, %v2222
    %v2224 = vpop.f32.mrf.mxu0
    %v2225 = vadd.f32 %v2032, %v2224
    %2226 = vmatprep.mubr.bf16.mxu0 %v764
    %2227 = vmatmul.mubr.bf16.gmra.mxu0 %v763
    %v2228 = vpop.f32.mrf.mxu0
    %v2229 = vadd.f32 %v2036, %v2228
    %v2230 = vpop.f32.mrf.mxu0
    %v2231 = vadd.f32 %v2038, %v2230
    %v2232 = vpop.f32.mrf.mxu0
    %v2233 = vadd.f32 %v2040, %v2232
    %v2234 = vpop.f32.mrf.mxu0
    %v2235 = vadd.f32 %v2042, %v2234
    %2236 = vmatprep.mubr.bf16.mxu0 %v771
    %2237 = vmatmul.mubr.bf16.gmra.mxu0 %v770
    %v2238 = vpop.f32.mrf.mxu0
    %v2239 = vadd.f32 %v2046, %v2238
    %v2240 = vpop.f32.mrf.mxu0
    %v2241 = vadd.f32 %v2048, %v2240
    %v2242 = vpop.f32.mrf.mxu0
    %v2243 = vadd.f32 %v2050, %v2242
    %v2244 = vpop.f32.mrf.mxu0
    %v2245 = vadd.f32 %v2052, %v2244
    %2246 = vmatprep.mubr.bf16.mxu0 %v778
    %2247 = vmatmul.mubr.bf16.gmra.mxu0 %v777
    %v2248 = vpop.f32.mrf.mxu0
    %v2249 = vadd.f32 %v2056, %v2248
    %v2250 = vpop.f32.mrf.mxu0
    %v2251 = vadd.f32 %v2058, %v2250
    %v2252 = vpop.f32.mrf.mxu0
    %v2253 = vadd.f32 %v2060, %v2252
    %v2254 = vpop.f32.mrf.mxu0
    %v2255 = vadd.f32 %v2062, %v2254
    %2256 = vmatprep.mubr.bf16.mxu0 %v785
    %2257 = vmatmul.mubr.bf16.gmra.mxu0 %v784
    %v2258 = vpop.f32.mrf.mxu0
    %v2259 = vadd.f32 %v2066, %v2258
    %v2260 = vpop.f32.mrf.mxu0
    %v2261 = vadd.f32 %v2068, %v2260
    %v2262 = vpop.f32.mrf.mxu0
    %v2263 = vadd.f32 %v2070, %v2262
    %v2264 = vpop.f32.mrf.mxu0
    %v2265 = vadd.f32 %v2072, %v2264
    %2266 = vmatprep.mubr.bf16.mxu0 %v792
    %2267 = vmatmul.mubr.bf16.gmra.mxu0 %v791
    %v2268 = vpop.f32.mrf.mxu0
    %v2269 = vadd.f32 %v2076, %v2268
    %v2270 = vpop.f32.mrf.mxu0
    %v2271 = vadd.f32 %v2078, %v2270
    %v2272 = vpop.f32.mrf.mxu0
    %v2273 = vadd.f32 %v2080, %v2272
    %v2274 = vpop.f32.mrf.mxu0
    %v2275 = vadd.f32 %v2082, %v2274
    %2276 = vmatprep.mubr.bf16.mxu0 %v799
    %2277 = vmatmul.mubr.bf16.gmra.mxu0 %v798
    %v2278 = vpop.f32.mrf.mxu0
    %v2279 = vadd.f32 %v2086, %v2278
    %v2280 = vpop.f32.mrf.mxu0
    %v2281 = vadd.f32 %v2088, %v2280
    %v2282 = vpop.f32.mrf.mxu0
    %v2283 = vadd.f32 %v2090, %v2282
    %v2284 = vpop.f32.mrf.mxu0
    %v2285 = vadd.f32 %v2092, %v2284
    %2286 = vmatprep.mubr.bf16.mxu0 %v806
    %2287 = vmatmul.mubr.bf16.gmra.mxu0 %v805
    %v2288 = vpop.f32.mrf.mxu0
    %v2289 = vadd.f32 %v2096, %v2288
    %v2290 = vpop.f32.mrf.mxu0
    %v2291 = vadd.f32 %v2098, %v2290
    %v2292 = vpop.f32.mrf.mxu0
    %v2293 = vadd.f32 %v2100, %v2292
    %v2294 = vpop.f32.mrf.mxu0
    %v2295 = vadd.f32 %v2102, %v2294
    %2296 = vmatprep.mubr.bf16.mxu0 %v813
    %2297 = vmatmul.mubr.bf16.gmra.mxu0 %v812
    %v2298 = vpop.f32.mrf.mxu0
    %v2299 = vadd.f32 %v2106, %v2298
    %v2300 = vpop.f32.mrf.mxu0
    %v2301 = vadd.f32 %v2108, %v2300
    %v2302 = vpop.f32.mrf.mxu0
    %v2303 = vadd.f32 %v2110, %v2302
    %v2304 = vpop.f32.mrf.mxu0
    %v2305 = vadd.f32 %v2112, %v2304
    %2306 = vmatprep.mubr.bf16.mxu0 %v820
    %2307 = vmatmul.mubr.bf16.gmra.mxu0 %v819
    %v2308 = vpop.f32.mrf.mxu0
    %v2309 = vadd.f32 %v2116, %v2308
    %v2310 = vpop.f32.mrf.mxu0
    %v2311 = vadd.f32 %v2118, %v2310
    %v2312 = vpop.f32.mrf.mxu0
    %v2313 = vadd.f32 %v2120, %v2312
    %v2314 = vpop.f32.mrf.mxu0
    %v2315 = vadd.f32 %v2122, %v2314
    %2316 = vmatprep.mubr.bf16.mxu0 %v827
    %2317 = vmatmul.mubr.bf16.gmra.mxu0 %v826
    %v2318 = vpop.f32.mrf.mxu0
    %v2319 = vadd.f32 %v2126, %v2318
    %v2320 = vpop.f32.mrf.mxu0
    %v2321 = vadd.f32 %v2128, %v2320
    %v2322 = vpop.f32.mrf.mxu0
    %v2323 = vadd.f32 %v2130, %v2322
    %v2324 = vpop.f32.mrf.mxu0
    %v2325 = vadd.f32 %v2132, %v2324
    %2326 = vmatprep.mubr.bf16.mxu0 %v834
    %2327 = vmatmul.mubr.bf16.gmra.mxu0 %v833
    %v2328 = vpop.f32.mrf.mxu0
    %v2329 = vadd.f32 %v2136, %v2328
    %v2330 = vpop.f32.mrf.mxu0
    %v2331 = vadd.f32 %v2138, %v2330
    %v2332 = vpop.f32.mrf.mxu0
    %v2333 = vadd.f32 %v2140, %v2332
    %v2334 = vpop.f32.mrf.mxu0
    %v2335 = vadd.f32 %v2142, %v2334
    %2336 = vmatprep.mubr.bf16.mxu0 %v841
    %2337 = vmatmul.mubr.bf16.gmra.mxu0 %v840
    %v2338 = vpop.f32.mrf.mxu0
    %v2339 = vadd.f32 %v2146, %v2338
    %v2340 = vpop.f32.mrf.mxu0
    %v2341 = vadd.f32 %v2148, %v2340
    %v2342 = vpop.f32.mrf.mxu0
    %v2343 = vadd.f32 %v2150, %v2342
    %v2344 = vpop.f32.mrf.mxu0
    %v2345 = vadd.f32 %v2152, %v2344
    %2346 = vmatprep.mubr.bf16.mxu0 %v848
    %2347 = vmatmul.mubr.bf16.gmra.mxu0 %v847
    %v2348 = vpop.f32.mrf.mxu0
    %v2349 = vadd.f32 %v2156, %v2348
    %v2350 = vpop.f32.mrf.mxu0
    %v2351 = vadd.f32 %v2158, %v2350
    %v2352 = vpop.f32.mrf.mxu0
    %v2353 = vadd.f32 %v2160, %v2352
    %v2354 = vpop.f32.mrf.mxu0
    %v2355 = vadd.f32 %v2162, %v2354
    %2356 = vmatprep.mubr.bf16.mxu0 %v855
    %2357 = vmatmul.mubr.bf16.gmra.mxu0 %v854
    %v2358 = vpop.f32.mrf.mxu0
    %v2359 = vadd.f32 %v2166, %v2358
    %v2360 = vpop.f32.mrf.mxu0
    %v2361 = vadd.f32 %v2168, %v2360
    %v2362 = vpop.f32.mrf.mxu0
    %v2363 = vadd.f32 %v2170, %v2362
    %v2364 = vpop.f32.mrf.mxu0
    %v2365 = vadd.f32 %v2172, %v2364
    %2366 = vmatprep.mubr.bf16.mxu0 %v862
    %2367 = vmatmul.mubr.bf16.gmra.mxu0 %v861
    %v2368 = vpop.f32.mrf.mxu0
    %v2369 = vadd.f32 %v2176, %v2368
    %v2370 = vpop.f32.mrf.mxu0
    %v2371 = vadd.f32 %v2178, %v2370
    %v2372 = vpop.f32.mrf.mxu0
    %v2373 = vadd.f32 %v2180, %v2372
    %v2374 = vpop.f32.mrf.mxu0
    %v2375 = vadd.f32 %v2182, %v2374
    %2376 = vdwg.mxu0
    %2377 = vmatprep.subr.bf16.mxu0 %v1707
    %2378 = vmatpush1.bf16.msra.mxu0 %v1706
    %2379 = vmatprep.subr.bf16.mxu0 %v1703
    %2380 = vmatpush1.bf16.msra.mxu0 %v1702
    %2381 = vmatprep.subr.bf16.mxu0 %v1699
    %2382 = vmatpush1.bf16.msra.mxu0 %v1698
    %2383 = vmatprep.subr.bf16.mxu0 %v1695
    %2384 = vmatpush1.bf16.msra.mxu0 %v1694
    %2385 = vmatprep.subr.bf16.mxu0 %v1691
    %2386 = vmatpush1.bf16.msra.mxu0 %v1690
    %2387 = vmatprep.subr.bf16.mxu0 %v1687
    %2388 = vmatpush1.bf16.msra.mxu0 %v1686
    %2389 = vmatprep.subr.bf16.mxu0 %v1683
    %2390 = vmatpush1.bf16.msra.mxu0 %v1682
    %2391 = vmatprep.subr.bf16.mxu0 %v1679
    %2392 = vmatpush1.bf16.msra.mxu0 %v1678
    %2393 = vmatprep.subr.bf16.mxu0 %v1739
    %2394 = vmatpush2.bf16.msra.mxu0 %v1738
    %2395 = vmatprep.subr.bf16.mxu0 %v1735
    %2396 = vmatpush2.bf16.msra.mxu0 %v1734
    %2397 = vmatprep.subr.bf16.mxu0 %v1731
    %2398 = vmatpush2.bf16.msra.mxu0 %v1730
    %2399 = vmatprep.subr.bf16.mxu0 %v1727
    %2400 = vmatpush2.bf16.msra.mxu0 %v1726
    %2401 = vmatprep.subr.bf16.mxu0 %v1723
    %2402 = vmatpush2.bf16.msra.mxu0 %v1722
    %2403 = vmatprep.subr.bf16.mxu0 %v1719
    %2404 = vmatpush2.bf16.msra.mxu0 %v1718
    %2405 = vmatprep.subr.bf16.mxu0 %v1715
    %2406 = vmatpush2.bf16.msra.mxu0 %v1714
    %2407 = vmatprep.subr.bf16.mxu0 %v1711
    %2408 = vmatpush2.bf16.msra.mxu0 %v1710
    %2409 = vmatprep.mubr.bf16.mxu0 %v759
    %2410 = vmatmul.mubr.bf16.gmra.mxu0 %v758
    %v2411 = vpop.f32.mrf.mxu0
    %v2412 = vadd.f32 %v2219, %v2411
    %v2413 = vpop.f32.mrf.mxu0
    %v2414 = vadd.f32 %v2221, %v2413
    %v2415 = vpop.f32.mrf.mxu0
    %v2416 = vadd.f32 %v2223, %v2415
    %v2417 = vpop.f32.mrf.mxu0
    %v2418 = vadd.f32 %v2225, %v2417
    %2419 = vmatprep.mubr.bf16.mxu0 %v766
    %2420 = vmatmul.mubr.bf16.gmra.mxu0 %v765
    %v2421 = vpop.f32.mrf.mxu0
    %v2422 = vadd.f32 %v2229, %v2421
    %v2423 = vpop.f32.mrf.mxu0
    %v2424 = vadd.f32 %v2231, %v2423
    %v2425 = vpop.f32.mrf.mxu0
    %v2426 = vadd.f32 %v2233, %v2425
    %v2427 = vpop.f32.mrf.mxu0
    %v2428 = vadd.f32 %v2235, %v2427
    %2429 = vmatprep.mubr.bf16.mxu0 %v773
    %2430 = vmatmul.mubr.bf16.gmra.mxu0 %v772
    %v2431 = vpop.f32.mrf.mxu0
    %v2432 = vadd.f32 %v2239, %v2431
    %v2433 = vpop.f32.mrf.mxu0
    %v2434 = vadd.f32 %v2241, %v2433
    %v2435 = vpop.f32.mrf.mxu0
    %v2436 = vadd.f32 %v2243, %v2435
    %v2437 = vpop.f32.mrf.mxu0
    %v2438 = vadd.f32 %v2245, %v2437
    %2439 = vmatprep.mubr.bf16.mxu0 %v780
    %2440 = vmatmul.mubr.bf16.gmra.mxu0 %v779
    %v2441 = vpop.f32.mrf.mxu0
    %v2442 = vadd.f32 %v2249, %v2441
    %v2443 = vpop.f32.mrf.mxu0
    %v2444 = vadd.f32 %v2251, %v2443
    %v2445 = vpop.f32.mrf.mxu0
    %v2446 = vadd.f32 %v2253, %v2445
    %v2447 = vpop.f32.mrf.mxu0
    %v2448 = vadd.f32 %v2255, %v2447
    %2449 = vmatprep.mubr.bf16.mxu0 %v787
    %2450 = vmatmul.mubr.bf16.gmra.mxu0 %v786
    %v2451 = vpop.f32.mrf.mxu0
    %v2452 = vadd.f32 %v2259, %v2451
    %v2453 = vpop.f32.mrf.mxu0
    %v2454 = vadd.f32 %v2261, %v2453
    %v2455 = vpop.f32.mrf.mxu0
    %v2456 = vadd.f32 %v2263, %v2455
    %v2457 = vpop.f32.mrf.mxu0
    %v2458 = vadd.f32 %v2265, %v2457
    %2459 = vmatprep.mubr.bf16.mxu0 %v794
    %2460 = vmatmul.mubr.bf16.gmra.mxu0 %v793
    %v2461 = vpop.f32.mrf.mxu0
    %v2462 = vadd.f32 %v2269, %v2461
    %v2463 = vpop.f32.mrf.mxu0
    %v2464 = vadd.f32 %v2271, %v2463
    %v2465 = vpop.f32.mrf.mxu0
    %v2466 = vadd.f32 %v2273, %v2465
    %v2467 = vpop.f32.mrf.mxu0
    %v2468 = vadd.f32 %v2275, %v2467
    %2469 = vmatprep.mubr.bf16.mxu0 %v801
    %2470 = vmatmul.mubr.bf16.gmra.mxu0 %v800
    %v2471 = vpop.f32.mrf.mxu0
    %v2472 = vadd.f32 %v2279, %v2471
    %v2473 = vpop.f32.mrf.mxu0
    %v2474 = vadd.f32 %v2281, %v2473
    %v2475 = vpop.f32.mrf.mxu0
    %v2476 = vadd.f32 %v2283, %v2475
    %v2477 = vpop.f32.mrf.mxu0
    %v2478 = vadd.f32 %v2285, %v2477
    %2479 = vmatprep.mubr.bf16.mxu0 %v808
    %2480 = vmatmul.mubr.bf16.gmra.mxu0 %v807
    %v2481 = vpop.f32.mrf.mxu0
    %v2482 = vadd.f32 %v2289, %v2481
    %v2483 = vpop.f32.mrf.mxu0
    %v2484 = vadd.f32 %v2291, %v2483
    %v2485 = vpop.f32.mrf.mxu0
    %v2486 = vadd.f32 %v2293, %v2485
    %v2487 = vpop.f32.mrf.mxu0
    %v2488 = vadd.f32 %v2295, %v2487
    %2489 = vmatprep.mubr.bf16.mxu0 %v815
    %2490 = vmatmul.mubr.bf16.gmra.mxu0 %v814
    %v2491 = vpop.f32.mrf.mxu0
    %v2492 = vadd.f32 %v2299, %v2491
    %v2493 = vpop.f32.mrf.mxu0
    %v2494 = vadd.f32 %v2301, %v2493
    %v2495 = vpop.f32.mrf.mxu0
    %v2496 = vadd.f32 %v2303, %v2495
    %v2497 = vpop.f32.mrf.mxu0
    %v2498 = vadd.f32 %v2305, %v2497
    %2499 = vmatprep.mubr.bf16.mxu0 %v822
    %2500 = vmatmul.mubr.bf16.gmra.mxu0 %v821
    %v2501 = vpop.f32.mrf.mxu0
    %v2502 = vadd.f32 %v2309, %v2501
    %v2503 = vpop.f32.mrf.mxu0
    %v2504 = vadd.f32 %v2311, %v2503
    %v2505 = vpop.f32.mrf.mxu0
    %v2506 = vadd.f32 %v2313, %v2505
    %v2507 = vpop.f32.mrf.mxu0
    %v2508 = vadd.f32 %v2315, %v2507
    %2509 = vmatprep.mubr.bf16.mxu0 %v829
    %2510 = vmatmul.mubr.bf16.gmra.mxu0 %v828
    %v2511 = vpop.f32.mrf.mxu0
    %v2512 = vadd.f32 %v2319, %v2511
    %v2513 = vpop.f32.mrf.mxu0
    %v2514 = vadd.f32 %v2321, %v2513
    %v2515 = vpop.f32.mrf.mxu0
    %v2516 = vadd.f32 %v2323, %v2515
    %v2517 = vpop.f32.mrf.mxu0
    %v2518 = vadd.f32 %v2325, %v2517
    %2519 = vmatprep.mubr.bf16.mxu0 %v836
    %2520 = vmatmul.mubr.bf16.gmra.mxu0 %v835
    %v2521 = vpop.f32.mrf.mxu0
    %v2522 = vadd.f32 %v2329, %v2521
    %v2523 = vpop.f32.mrf.mxu0
    %v2524 = vadd.f32 %v2331, %v2523
    %v2525 = vpop.f32.mrf.mxu0
    %v2526 = vadd.f32 %v2333, %v2525
    %v2527 = vpop.f32.mrf.mxu0
    %v2528 = vadd.f32 %v2335, %v2527
    %2529 = vmatprep.mubr.bf16.mxu0 %v843
    %2530 = vmatmul.mubr.bf16.gmra.mxu0 %v842
    %v2531 = vpop.f32.mrf.mxu0
    %v2532 = vadd.f32 %v2339, %v2531
    %v2533 = vpop.f32.mrf.mxu0
    %v2534 = vadd.f32 %v2341, %v2533
    %v2535 = vpop.f32.mrf.mxu0
    %v2536 = vadd.f32 %v2343, %v2535
    %v2537 = vpop.f32.mrf.mxu0
    %v2538 = vadd.f32 %v2345, %v2537
    %2539 = vmatprep.mubr.bf16.mxu0 %v850
    %2540 = vmatmul.mubr.bf16.gmra.mxu0 %v849
    %v2541 = vpop.f32.mrf.mxu0
    %v2542 = vadd.f32 %v2349, %v2541
    %v2543 = vpop.f32.mrf.mxu0
    %v2544 = vadd.f32 %v2351, %v2543
    %v2545 = vpop.f32.mrf.mxu0
    %v2546 = vadd.f32 %v2353, %v2545
    %v2547 = vpop.f32.mrf.mxu0
    %v2548 = vadd.f32 %v2355, %v2547
    %2549 = vmatprep.mubr.bf16.mxu0 %v857
    %2550 = vmatmul.mubr.bf16.gmra.mxu0 %v856
    %v2551 = vpop.f32.mrf.mxu0
    %v2552 = vadd.f32 %v2359, %v2551
    %v2553 = vpop.f32.mrf.mxu0
    %v2554 = vadd.f32 %v2361, %v2553
    %v2555 = vpop.f32.mrf.mxu0
    %v2556 = vadd.f32 %v2363, %v2555
    %v2557 = vpop.f32.mrf.mxu0
    %v2558 = vadd.f32 %v2365, %v2557
    %2559 = vmatprep.mubr.bf16.mxu0 %v864
    %2560 = vmatmul.mubr.bf16.gmra.mxu0 %v863
    %v2561 = vpop.f32.mrf.mxu0
    %v2562 = vadd.f32 %v2369, %v2561
    %v2563 = vpop.f32.mrf.mxu0
    %v2564 = vadd.f32 %v2371, %v2563
    %v2565 = vpop.f32.mrf.mxu0
    %v2566 = vadd.f32 %v2373, %v2565
    %v2567 = vpop.f32.mrf.mxu0
    %v2568 = vadd.f32 %v2375, %v2567
    %2569 = vdwg.mxu0
    %2570 = vmatprep.subr.bf16.mxu0 0
    %2571 = vmatpush1.bf16.msra.mxu0 0
    %2572 = vmatprep.subr.bf16.mxu0 0
    %2573 = vmatpush1.bf16.msra.mxu0 0
    %2574 = vmatprep.subr.bf16.mxu0 0
    %2575 = vmatpush1.bf16.msra.mxu0 0
    %2576 = vmatprep.subr.bf16.mxu0 0
    %2577 = vmatpush1.bf16.msra.mxu0 0
    %2578 = vmatprep.subr.bf16.mxu0 0
    %2579 = vmatpush1.bf16.msra.mxu0 0
    %2580 = vmatprep.subr.bf16.mxu0 0
    %2581 = vmatpush1.bf16.msra.mxu0 0
    %2582 = vmatprep.subr.bf16.mxu0 0
    %2583 = vmatpush1.bf16.msra.mxu0 0
    %2584 = vmatprep.subr.bf16.mxu0 %v1743
    %2585 = vmatpush1.bf16.msra.mxu0 %v1742
    %2586 = vmatprep.subr.bf16.mxu0 0
    %2587 = vmatpush2.bf16.msra.mxu0 0
    %2588 = vmatprep.subr.bf16.mxu0 0
    %2589 = vmatpush2.bf16.msra.mxu0 0
    %2590 = vmatprep.subr.bf16.mxu0 0
    %2591 = vmatpush2.bf16.msra.mxu0 0
    %2592 = vmatprep.subr.bf16.mxu0 0
    %2593 = vmatpush2.bf16.msra.mxu0 0
    %2594 = vmatprep.subr.bf16.mxu0 0
    %2595 = vmatpush2.bf16.msra.mxu0 0
    %2596 = vmatprep.subr.bf16.mxu0 0
    %2597 = vmatpush2.bf16.msra.mxu0 0
    %2598 = vmatprep.subr.bf16.mxu0 0
    %2599 = vmatpush2.bf16.msra.mxu0 0
    %2600 = vmatprep.subr.bf16.mxu0 0
    %2601 = vmatpush2.bf16.msra.mxu0 0
    %2602 = vmatprep.mubr.bf16.mxu0 0
    %2603 = vmatmul.mubr.bf16.gmra.mxu0 %v1944
    %v2604 = vpop.f32.mrf.mxu0
    %v2605 = vadd.f32 %v2412, %v2604
    %v2606 = vpop.f32.mrf.mxu0
    %v2607 = vadd.f32 %v2414, %v2606
    %v2608 = vpop.f32.mrf.mxu0
    %v2609 = vadd.f32 %v2416, %v2608
    %v2610 = vpop.f32.mrf.mxu0
    %v2611 = vadd.f32 %v2418, %v2610
    %2612 = vmatprep.mubr.bf16.mxu0 0
    %2613 = vmatmul.mubr.bf16.gmra.mxu0 %v1947
    %v2614 = vpop.f32.mrf.mxu0
    %v2615 = vadd.f32 %v2422, %v2614
    %v2616 = vpop.f32.mrf.mxu0
    %v2617 = vadd.f32 %v2424, %v2616
    %v2618 = vpop.f32.mrf.mxu0
    %v2619 = vadd.f32 %v2426, %v2618
    %v2620 = vpop.f32.mrf.mxu0
    %v2621 = vadd.f32 %v2428, %v2620
    %2622 = vmatprep.mubr.bf16.mxu0 0
    %2623 = vmatmul.mubr.bf16.gmra.mxu0 %v1950
    %v2624 = vpop.f32.mrf.mxu0
    %v2625 = vadd.f32 %v2432, %v2624
    %v2626 = vpop.f32.mrf.mxu0
    %v2627 = vadd.f32 %v2434, %v2626
    %v2628 = vpop.f32.mrf.mxu0
    %v2629 = vadd.f32 %v2436, %v2628
    %v2630 = vpop.f32.mrf.mxu0
    %v2631 = vadd.f32 %v2438, %v2630
    %2632 = vmatprep.mubr.bf16.mxu0 0
    %2633 = vmatmul.mubr.bf16.gmra.mxu0 %v1953
    %v2634 = vpop.f32.mrf.mxu0
    %v2635 = vadd.f32 %v2442, %v2634
    %v2636 = vpop.f32.mrf.mxu0
    %v2637 = vadd.f32 %v2444, %v2636
    %v2638 = vpop.f32.mrf.mxu0
    %v2639 = vadd.f32 %v2446, %v2638
    %v2640 = vpop.f32.mrf.mxu0
    %v2641 = vadd.f32 %v2448, %v2640
    %2642 = vmatprep.mubr.bf16.mxu0 0
    %2643 = vmatmul.mubr.bf16.gmra.mxu0 %v1956
    %v2644 = vpop.f32.mrf.mxu0
    %v2645 = vadd.f32 %v2452, %v2644
    %v2646 = vpop.f32.mrf.mxu0
    %v2647 = vadd.f32 %v2454, %v2646
    %v2648 = vpop.f32.mrf.mxu0
    %v2649 = vadd.f32 %v2456, %v2648
    %v2650 = vpop.f32.mrf.mxu0
    %v2651 = vadd.f32 %v2458, %v2650
    %2652 = vmatprep.mubr.bf16.mxu0 0
    %2653 = vmatmul.mubr.bf16.gmra.mxu0 %v1959
    %v2654 = vpop.f32.mrf.mxu0
    %v2655 = vadd.f32 %v2462, %v2654
    %v2656 = vpop.f32.mrf.mxu0
    %v2657 = vadd.f32 %v2464, %v2656
    %v2658 = vpop.f32.mrf.mxu0
    %v2659 = vadd.f32 %v2466, %v2658
    %v2660 = vpop.f32.mrf.mxu0
    %v2661 = vadd.f32 %v2468, %v2660
    %2662 = vmatprep.mubr.bf16.mxu0 0
    %2663 = vmatmul.mubr.bf16.gmra.mxu0 %v1962
    %v2664 = vpop.f32.mrf.mxu0
    %v2665 = vadd.f32 %v2472, %v2664
    %v2666 = vpop.f32.mrf.mxu0
    %v2667 = vadd.f32 %v2474, %v2666
    %v2668 = vpop.f32.mrf.mxu0
    %v2669 = vadd.f32 %v2476, %v2668
    %v2670 = vpop.f32.mrf.mxu0
    %v2671 = vadd.f32 %v2478, %v2670
    %2672 = vmatprep.mubr.bf16.mxu0 0
    %2673 = vmatmul.mubr.bf16.gmra.mxu0 %v1965
    %v2674 = vpop.f32.mrf.mxu0
    %v2675 = vadd.f32 %v2482, %v2674
    %v2676 = vpop.f32.mrf.mxu0
    %v2677 = vadd.f32 %v2484, %v2676
    %v2678 = vpop.f32.mrf.mxu0
    %v2679 = vadd.f32 %v2486, %v2678
    %v2680 = vpop.f32.mrf.mxu0
    %v2681 = vadd.f32 %v2488, %v2680
    %2682 = vmatprep.mubr.bf16.mxu0 0
    %2683 = vmatmul.mubr.bf16.gmra.mxu0 %v1968
    %v2684 = vpop.f32.mrf.mxu0
    %v2685 = vadd.f32 %v2492, %v2684
    %v2686 = vpop.f32.mrf.mxu0
    %v2687 = vadd.f32 %v2494, %v2686
    %v2688 = vpop.f32.mrf.mxu0
    %v2689 = vadd.f32 %v2496, %v2688
    %v2690 = vpop.f32.mrf.mxu0
    %v2691 = vadd.f32 %v2498, %v2690
    %2692 = vmatprep.mubr.bf16.mxu0 0
    %2693 = vmatmul.mubr.bf16.gmra.mxu0 %v1971
    %v2694 = vpop.f32.mrf.mxu0
    %v2695 = vadd.f32 %v2502, %v2694
    %v2696 = vpop.f32.mrf.mxu0
    %v2697 = vadd.f32 %v2504, %v2696
    %v2698 = vpop.f32.mrf.mxu0
    %v2699 = vadd.f32 %v2506, %v2698
    %v2700 = vpop.f32.mrf.mxu0
    %v2701 = vadd.f32 %v2508, %v2700
    %2702 = vmatprep.mubr.bf16.mxu0 0
    %2703 = vmatmul.mubr.bf16.gmra.mxu0 %v1974
    %v2704 = vpop.f32.mrf.mxu0
    %v2705 = vadd.f32 %v2512, %v2704
    %v2706 = vpop.f32.mrf.mxu0
    %v2707 = vadd.f32 %v2514, %v2706
    %v2708 = vpop.f32.mrf.mxu0
    %v2709 = vadd.f32 %v2516, %v2708
    %v2710 = vpop.f32.mrf.mxu0
    %v2711 = vadd.f32 %v2518, %v2710
    %2712 = vmatprep.mubr.bf16.mxu0 0
    %2713 = vmatmul.mubr.bf16.gmra.mxu0 %v1977
    %v2714 = vpop.f32.mrf.mxu0
    %v2715 = vadd.f32 %v2522, %v2714
    %v2716 = vpop.f32.mrf.mxu0
    %v2717 = vadd.f32 %v2524, %v2716
    %v2718 = vpop.f32.mrf.mxu0
    %v2719 = vadd.f32 %v2526, %v2718
    %v2720 = vpop.f32.mrf.mxu0
    %v2721 = vadd.f32 %v2528, %v2720
    %2722 = vmatprep.mubr.bf16.mxu0 0
    %2723 = vmatmul.mubr.bf16.gmra.mxu0 %v1980
    %v2724 = vpop.f32.mrf.mxu0
    %v2725 = vadd.f32 %v2532, %v2724
    %v2726 = vpop.f32.mrf.mxu0
    %v2727 = vadd.f32 %v2534, %v2726
    %v2728 = vpop.f32.mrf.mxu0
    %v2729 = vadd.f32 %v2536, %v2728
    %v2730 = vpop.f32.mrf.mxu0
    %v2731 = vadd.f32 %v2538, %v2730
    %2732 = vmatprep.mubr.bf16.mxu0 0
    %2733 = vmatmul.mubr.bf16.gmra.mxu0 %v1983
    %v2734 = vpop.f32.mrf.mxu0
    %v2735 = vadd.f32 %v2542, %v2734
    %v2736 = vpop.f32.mrf.mxu0
    %v2737 = vadd.f32 %v2544, %v2736
    %v2738 = vpop.f32.mrf.mxu0
    %v2739 = vadd.f32 %v2546, %v2738
    %v2740 = vpop.f32.mrf.mxu0
    %v2741 = vadd.f32 %v2548, %v2740
    %2742 = vmatprep.mubr.bf16.mxu0 0
    %2743 = vmatmul.mubr.bf16.gmra.mxu0 %v1986
    %v2744 = vpop.f32.mrf.mxu0
    %v2745 = vadd.f32 %v2552, %v2744
    %v2746 = vpop.f32.mrf.mxu0
    %v2747 = vadd.f32 %v2554, %v2746
    %v2748 = vpop.f32.mrf.mxu0
    %v2749 = vadd.f32 %v2556, %v2748
    %v2750 = vpop.f32.mrf.mxu0
    %v2751 = vadd.f32 %v2558, %v2750
    %2752 = vmatprep.mubr.bf16.mxu0 0
    %2753 = vmatmul.mubr.bf16.gmra.mxu0 %v1989
    %v2754 = vpop.f32.mrf.mxu0
    %v2755 = vadd.f32 %v2562, %v2754
    %v2756 = vpop.f32.mrf.mxu0
    %v2757 = vadd.f32 %v2564, %v2756
    %v2758 = vpop.f32.mrf.mxu0
    %v2759 = vadd.f32 %v2566, %v2758
    %v2760 = vpop.f32.mrf.mxu0
    %v2761 = vadd.f32 %v2568, %v2760
    %2762 = vdwg.mxu0
    %2763 = vmatprep.subr.bf16.mxu0 %v1581
    %2764 = vmatpush1.bf16.msra.mxu0 %v1580
    %2765 = vmatprep.subr.bf16.mxu0 %v1577
    %2766 = vmatpush1.bf16.msra.mxu0 %v1576
    %2767 = vmatprep.subr.bf16.mxu0 %v1573
    %2768 = vmatpush1.bf16.msra.mxu0 %v1572
    %2769 = vmatprep.subr.bf16.mxu0 %v1569
    %2770 = vmatpush1.bf16.msra.mxu0 %v1568
    %2771 = vmatprep.subr.bf16.mxu0 %v1565
    %2772 = vmatpush1.bf16.msra.mxu0 %v1564
    %2773 = vmatprep.subr.bf16.mxu0 %v1561
    %2774 = vmatpush1.bf16.msra.mxu0 %v1560
    %2775 = vmatprep.subr.bf16.mxu0 %v1557
    %2776 = vmatpush1.bf16.msra.mxu0 %v1556
    %2777 = vmatprep.subr.bf16.mxu0 %v1553
    %2778 = vmatpush1.bf16.msra.mxu0 %v1552
    %2779 = vmatprep.subr.bf16.mxu0 %v1613
    %2780 = vmatpush2.bf16.msra.mxu0 %v1612
    %2781 = vmatprep.subr.bf16.mxu0 %v1609
    %2782 = vmatpush2.bf16.msra.mxu0 %v1608
    %2783 = vmatprep.subr.bf16.mxu0 %v1605
    %2784 = vmatpush2.bf16.msra.mxu0 %v1604
    %2785 = vmatprep.subr.bf16.mxu0 %v1601
    %2786 = vmatpush2.bf16.msra.mxu0 %v1600
    %2787 = vmatprep.subr.bf16.mxu0 %v1597
    %2788 = vmatpush2.bf16.msra.mxu0 %v1596
    %2789 = vmatprep.subr.bf16.mxu0 %v1593
    %2790 = vmatpush2.bf16.msra.mxu0 %v1592
    %2791 = vmatprep.subr.bf16.mxu0 %v1589
    %2792 = vmatpush2.bf16.msra.mxu0 %v1588
    %2793 = vmatprep.subr.bf16.mxu0 %v1585
    %2794 = vmatpush2.bf16.msra.mxu0 %v1584
    %2795 = vmatprep.mubr.bf16.mxu0 %v755
    %2796 = vmatmul.mubr.bf16.gmra.mxu0 %v754
    %v2797 = vpop.f32.mrf.mxu0
    %v2798 = vadd.f32 %v393, %v2797
    %v2799 = vpop.f32.mrf.mxu0
    %v2800 = vadd.f32 %v397, %v2799
    %v2801 = vpop.f32.mrf.mxu0
    %v2802 = vadd.f32 %v393, %v2801
    %v2803 = vpop.f32.mrf.mxu0
    %v2804 = vadd.f32 %v397, %v2803
    %2805 = vmatprep.mubr.bf16.mxu0 %v762
    %2806 = vmatmul.mubr.bf16.gmra.mxu0 %v761
    %v2807 = vpop.f32.mrf.mxu0
    %v2808 = vadd.f32 %v393, %v2807
    %v2809 = vpop.f32.mrf.mxu0
    %v2810 = vadd.f32 %v397, %v2809
    %v2811 = vpop.f32.mrf.mxu0
    %v2812 = vadd.f32 %v393, %v2811
    %v2813 = vpop.f32.mrf.mxu0
    %v2814 = vadd.f32 %v397, %v2813
    %2815 = vmatprep.mubr.bf16.mxu0 %v769
    %2816 = vmatmul.mubr.bf16.gmra.mxu0 %v768
    %v2817 = vpop.f32.mrf.mxu0
    %v2818 = vadd.f32 %v393, %v2817
    %v2819 = vpop.f32.mrf.mxu0
    %v2820 = vadd.f32 %v397, %v2819
    %v2821 = vpop.f32.mrf.mxu0
    %v2822 = vadd.f32 %v393, %v2821
    %v2823 = vpop.f32.mrf.mxu0
    %v2824 = vadd.f32 %v397, %v2823
    %2825 = vmatprep.mubr.bf16.mxu0 %v776
    %2826 = vmatmul.mubr.bf16.gmra.mxu0 %v775
    %v2827 = vpop.f32.mrf.mxu0
    %v2828 = vadd.f32 %v393, %v2827
    %v2829 = vpop.f32.mrf.mxu0
    %v2830 = vadd.f32 %v397, %v2829
    %v2831 = vpop.f32.mrf.mxu0
    %v2832 = vadd.f32 %v393, %v2831
    %v2833 = vpop.f32.mrf.mxu0
    %v2834 = vadd.f32 %v397, %v2833
    %2835 = vmatprep.mubr.bf16.mxu0 %v783
    %2836 = vmatmul.mubr.bf16.gmra.mxu0 %v782
    %v2837 = vpop.f32.mrf.mxu0
    %v2838 = vadd.f32 %v393, %v2837
    %v2839 = vpop.f32.mrf.mxu0
    %v2840 = vadd.f32 %v397, %v2839
    %v2841 = vpop.f32.mrf.mxu0
    %v2842 = vadd.f32 %v393, %v2841
    %v2843 = vpop.f32.mrf.mxu0
    %v2844 = vadd.f32 %v397, %v2843
    %2845 = vmatprep.mubr.bf16.mxu0 %v790
    %2846 = vmatmul.mubr.bf16.gmra.mxu0 %v789
    %v2847 = vpop.f32.mrf.mxu0
    %v2848 = vadd.f32 %v393, %v2847
    %v2849 = vpop.f32.mrf.mxu0
    %v2850 = vadd.f32 %v397, %v2849
    %v2851 = vpop.f32.mrf.mxu0
    %v2852 = vadd.f32 %v393, %v2851
    %v2853 = vpop.f32.mrf.mxu0
    %v2854 = vadd.f32 %v397, %v2853
    %2855 = vmatprep.mubr.bf16.mxu0 %v797
    %2856 = vmatmul.mubr.bf16.gmra.mxu0 %v796
    %v2857 = vpop.f32.mrf.mxu0
    %v2858 = vadd.f32 %v393, %v2857
    %v2859 = vpop.f32.mrf.mxu0
    %v2860 = vadd.f32 %v397, %v2859
    %v2861 = vpop.f32.mrf.mxu0
    %v2862 = vadd.f32 %v393, %v2861
    %v2863 = vpop.f32.mrf.mxu0
    %v2864 = vadd.f32 %v397, %v2863
    %2865 = vmatprep.mubr.bf16.mxu0 %v804
    %2866 = vmatmul.mubr.bf16.gmra.mxu0 %v803
    %v2867 = vpop.f32.mrf.mxu0
    %v2868 = vadd.f32 %v393, %v2867
    %v2869 = vpop.f32.mrf.mxu0
    %v2870 = vadd.f32 %v397, %v2869
    %v2871 = vpop.f32.mrf.mxu0
    %v2872 = vadd.f32 %v393, %v2871
    %v2873 = vpop.f32.mrf.mxu0
    %v2874 = vadd.f32 %v397, %v2873
    %2875 = vmatprep.mubr.bf16.mxu0 %v811
    %2876 = vmatmul.mubr.bf16.gmra.mxu0 %v810
    %v2877 = vpop.f32.mrf.mxu0
    %v2878 = vadd.f32 %v393, %v2877
    %v2879 = vpop.f32.mrf.mxu0
    %v2880 = vadd.f32 %v397, %v2879
    %v2881 = vpop.f32.mrf.mxu0
    %v2882 = vadd.f32 %v393, %v2881
    %v2883 = vpop.f32.mrf.mxu0
    %v2884 = vadd.f32 %v397, %v2883
    %2885 = vmatprep.mubr.bf16.mxu0 %v818
    %2886 = vmatmul.mubr.bf16.gmra.mxu0 %v817
    %v2887 = vpop.f32.mrf.mxu0
    %v2888 = vadd.f32 %v393, %v2887
    %v2889 = vpop.f32.mrf.mxu0
    %v2890 = vadd.f32 %v397, %v2889
    %v2891 = vpop.f32.mrf.mxu0
    %v2892 = vadd.f32 %v393, %v2891
    %v2893 = vpop.f32.mrf.mxu0
    %v2894 = vadd.f32 %v397, %v2893
    %2895 = vmatprep.mubr.bf16.mxu0 %v825
    %2896 = vmatmul.mubr.bf16.gmra.mxu0 %v824
    %v2897 = vpop.f32.mrf.mxu0
    %v2898 = vadd.f32 %v393, %v2897
    %v2899 = vpop.f32.mrf.mxu0
    %v2900 = vadd.f32 %v397, %v2899
    %v2901 = vpop.f32.mrf.mxu0
    %v2902 = vadd.f32 %v393, %v2901
    %v2903 = vpop.f32.mrf.mxu0
    %v2904 = vadd.f32 %v397, %v2903
    %2905 = vmatprep.mubr.bf16.mxu0 %v832
    %2906 = vmatmul.mubr.bf16.gmra.mxu0 %v831
    %v2907 = vpop.f32.mrf.mxu0
    %v2908 = vadd.f32 %v393, %v2907
    %v2909 = vpop.f32.mrf.mxu0
    %v2910 = vadd.f32 %v397, %v2909
    %v2911 = vpop.f32.mrf.mxu0
    %v2912 = vadd.f32 %v393, %v2911
    %v2913 = vpop.f32.mrf.mxu0
    %v2914 = vadd.f32 %v397, %v2913
    %2915 = vmatprep.mubr.bf16.mxu0 %v839
    %2916 = vmatmul.mubr.bf16.gmra.mxu0 %v838
    %v2917 = vpop.f32.mrf.mxu0
    %v2918 = vadd.f32 %v393, %v2917
    %v2919 = vpop.f32.mrf.mxu0
    %v2920 = vadd.f32 %v397, %v2919
    %v2921 = vpop.f32.mrf.mxu0
    %v2922 = vadd.f32 %v393, %v2921
    %v2923 = vpop.f32.mrf.mxu0
    %v2924 = vadd.f32 %v397, %v2923
    %2925 = vmatprep.mubr.bf16.mxu0 %v846
    %2926 = vmatmul.mubr.bf16.gmra.mxu0 %v845
    %v2927 = vpop.f32.mrf.mxu0
    %v2928 = vadd.f32 %v393, %v2927
    %v2929 = vpop.f32.mrf.mxu0
    %v2930 = vadd.f32 %v397, %v2929
    %v2931 = vpop.f32.mrf.mxu0
    %v2932 = vadd.f32 %v393, %v2931
    %v2933 = vpop.f32.mrf.mxu0
    %v2934 = vadd.f32 %v397, %v2933
    %2935 = vmatprep.mubr.bf16.mxu0 %v853
    %2936 = vmatmul.mubr.bf16.gmra.mxu0 %v852
    %v2937 = vpop.f32.mrf.mxu0
    %v2938 = vadd.f32 %v393, %v2937
    %v2939 = vpop.f32.mrf.mxu0
    %v2940 = vadd.f32 %v397, %v2939
    %v2941 = vpop.f32.mrf.mxu0
    %v2942 = vadd.f32 %v393, %v2941
    %v2943 = vpop.f32.mrf.mxu0
    %v2944 = vadd.f32 %v397, %v2943
    %2945 = vmatprep.mubr.bf16.mxu0 %v860
    %2946 = vmatmul.mubr.bf16.gmra.mxu0 %v859
    %v2947 = vpop.f32.mrf.mxu0
    %v2948 = vadd.f32 %v393, %v2947
    %v2949 = vpop.f32.mrf.mxu0
    %v2950 = vadd.f32 %v397, %v2949
    %v2951 = vpop.f32.mrf.mxu0
    %v2952 = vadd.f32 %v393, %v2951
    %v2953 = vpop.f32.mrf.mxu0
    %v2954 = vadd.f32 %v397, %v2953
    %2955 = vdwg.mxu0
    %2956 = vmatprep.subr.bf16.mxu0 %v1645
    %2957 = vmatpush1.bf16.msra.mxu0 %v1644
    %2958 = vmatprep.subr.bf16.mxu0 %v1641
    %2959 = vmatpush1.bf16.msra.mxu0 %v1640
    %2960 = vmatprep.subr.bf16.mxu0 %v1637
    %2961 = vmatpush1.bf16.msra.mxu0 %v1636
    %2962 = vmatprep.subr.bf16.mxu0 %v1633
    %2963 = vmatpush1.bf16.msra.mxu0 %v1632
    %2964 = vmatprep.subr.bf16.mxu0 %v1629
    %2965 = vmatpush1.bf16.msra.mxu0 %v1628
    %2966 = vmatprep.subr.bf16.mxu0 %v1625
    %2967 = vmatpush1.bf16.msra.mxu0 %v1624
    %2968 = vmatprep.subr.bf16.mxu0 %v1621
    %2969 = vmatpush1.bf16.msra.mxu0 %v1620
    %2970 = vmatprep.subr.bf16.mxu0 %v1617
    %2971 = vmatpush1.bf16.msra.mxu0 %v1616
    %2972 = vmatprep.subr.bf16.mxu0 %v1677
    %2973 = vmatpush2.bf16.msra.mxu0 %v1676
    %2974 = vmatprep.subr.bf16.mxu0 %v1673
    %2975 = vmatpush2.bf16.msra.mxu0 %v1672
    %2976 = vmatprep.subr.bf16.mxu0 %v1669
    %2977 = vmatpush2.bf16.msra.mxu0 %v1668
    %2978 = vmatprep.subr.bf16.mxu0 %v1665
    %2979 = vmatpush2.bf16.msra.mxu0 %v1664
    %2980 = vmatprep.subr.bf16.mxu0 %v1661
    %2981 = vmatpush2.bf16.msra.mxu0 %v1660
    %2982 = vmatprep.subr.bf16.mxu0 %v1657
    %2983 = vmatpush2.bf16.msra.mxu0 %v1656
    %2984 = vmatprep.subr.bf16.mxu0 %v1653
    %2985 = vmatpush2.bf16.msra.mxu0 %v1652
    %2986 = vmatprep.subr.bf16.mxu0 %v1649
    %2987 = vmatpush2.bf16.msra.mxu0 %v1648
    %2988 = vmatprep.mubr.bf16.mxu0 %v757
    %2989 = vmatmul.mubr.bf16.gmra.mxu0 %v756
    %v2990 = vpop.f32.mrf.mxu0
    %v2991 = vadd.f32 %v2798, %v2990
    %v2992 = vpop.f32.mrf.mxu0
    %v2993 = vadd.f32 %v2800, %v2992
    %v2994 = vpop.f32.mrf.mxu0
    %v2995 = vadd.f32 %v2802, %v2994
    %v2996 = vpop.f32.mrf.mxu0
    %v2997 = vadd.f32 %v2804, %v2996
    %2998 = vmatprep.mubr.bf16.mxu0 %v764
    %2999 = vmatmul.mubr.bf16.gmra.mxu0 %v763
    %v3000 = vpop.f32.mrf.mxu0
    %v3001 = vadd.f32 %v2808, %v3000
    %v3002 = vpop.f32.mrf.mxu0
    %v3003 = vadd.f32 %v2810, %v3002
    %v3004 = vpop.f32.mrf.mxu0
    %v3005 = vadd.f32 %v2812, %v3004
    %v3006 = vpop.f32.mrf.mxu0
    %v3007 = vadd.f32 %v2814, %v3006
    %3008 = vmatprep.mubr.bf16.mxu0 %v771
    %3009 = vmatmul.mubr.bf16.gmra.mxu0 %v770
    %v3010 = vpop.f32.mrf.mxu0
    %v3011 = vadd.f32 %v2818, %v3010
    %v3012 = vpop.f32.mrf.mxu0
    %v3013 = vadd.f32 %v2820, %v3012
    %v3014 = vpop.f32.mrf.mxu0
    %v3015 = vadd.f32 %v2822, %v3014
    %v3016 = vpop.f32.mrf.mxu0
    %v3017 = vadd.f32 %v2824, %v3016
    %3018 = vmatprep.mubr.bf16.mxu0 %v778
    %3019 = vmatmul.mubr.bf16.gmra.mxu0 %v777
    %v3020 = vpop.f32.mrf.mxu0
    %v3021 = vadd.f32 %v2828, %v3020
    %v3022 = vpop.f32.mrf.mxu0
    %v3023 = vadd.f32 %v2830, %v3022
    %v3024 = vpop.f32.mrf.mxu0
    %v3025 = vadd.f32 %v2832, %v3024
    %v3026 = vpop.f32.mrf.mxu0
    %v3027 = vadd.f32 %v2834, %v3026
    %3028 = vmatprep.mubr.bf16.mxu0 %v785
    %3029 = vmatmul.mubr.bf16.gmra.mxu0 %v784
    %v3030 = vpop.f32.mrf.mxu0
    %v3031 = vadd.f32 %v2838, %v3030
    %v3032 = vpop.f32.mrf.mxu0
    %v3033 = vadd.f32 %v2840, %v3032
    %v3034 = vpop.f32.mrf.mxu0
    %v3035 = vadd.f32 %v2842, %v3034
    %v3036 = vpop.f32.mrf.mxu0
    %v3037 = vadd.f32 %v2844, %v3036
    %3038 = vmatprep.mubr.bf16.mxu0 %v792
    %3039 = vmatmul.mubr.bf16.gmra.mxu0 %v791
    %v3040 = vpop.f32.mrf.mxu0
    %v3041 = vadd.f32 %v2848, %v3040
    %v3042 = vpop.f32.mrf.mxu0
    %v3043 = vadd.f32 %v2850, %v3042
    %v3044 = vpop.f32.mrf.mxu0
    %v3045 = vadd.f32 %v2852, %v3044
    %v3046 = vpop.f32.mrf.mxu0
    %v3047 = vadd.f32 %v2854, %v3046
    %3048 = vmatprep.mubr.bf16.mxu0 %v799
    %3049 = vmatmul.mubr.bf16.gmra.mxu0 %v798
    %v3050 = vpop.f32.mrf.mxu0
    %v3051 = vadd.f32 %v2858, %v3050
    %v3052 = vpop.f32.mrf.mxu0
    %v3053 = vadd.f32 %v2860, %v3052
    %v3054 = vpop.f32.mrf.mxu0
    %v3055 = vadd.f32 %v2862, %v3054
    %v3056 = vpop.f32.mrf.mxu0
    %v3057 = vadd.f32 %v2864, %v3056
    %3058 = vmatprep.mubr.bf16.mxu0 %v806
    %3059 = vmatmul.mubr.bf16.gmra.mxu0 %v805
    %v3060 = vpop.f32.mrf.mxu0
    %v3061 = vadd.f32 %v2868, %v3060
    %v3062 = vpop.f32.mrf.mxu0
    %v3063 = vadd.f32 %v2870, %v3062
    %v3064 = vpop.f32.mrf.mxu0
    %v3065 = vadd.f32 %v2872, %v3064
    %v3066 = vpop.f32.mrf.mxu0
    %v3067 = vadd.f32 %v2874, %v3066
    %3068 = vmatprep.mubr.bf16.mxu0 %v813
    %3069 = vmatmul.mubr.bf16.gmra.mxu0 %v812
    %v3070 = vpop.f32.mrf.mxu0
    %v3071 = vadd.f32 %v2878, %v3070
    %v3072 = vpop.f32.mrf.mxu0
    %v3073 = vadd.f32 %v2880, %v3072
    %v3074 = vpop.f32.mrf.mxu0
    %v3075 = vadd.f32 %v2882, %v3074
    %v3076 = vpop.f32.mrf.mxu0
    %v3077 = vadd.f32 %v2884, %v3076
    %3078 = vmatprep.mubr.bf16.mxu0 %v820
    %3079 = vmatmul.mubr.bf16.gmra.mxu0 %v819
    %v3080 = vpop.f32.mrf.mxu0
    %v3081 = vadd.f32 %v2888, %v3080
    %v3082 = vpop.f32.mrf.mxu0
    %v3083 = vadd.f32 %v2890, %v3082
    %v3084 = vpop.f32.mrf.mxu0
    %v3085 = vadd.f32 %v2892, %v3084
    %v3086 = vpop.f32.mrf.mxu0
    %v3087 = vadd.f32 %v2894, %v3086
    %3088 = vmatprep.mubr.bf16.mxu0 %v827
    %3089 = vmatmul.mubr.bf16.gmra.mxu0 %v826
    %v3090 = vpop.f32.mrf.mxu0
    %v3091 = vadd.f32 %v2898, %v3090
    %v3092 = vpop.f32.mrf.mxu0
    %v3093 = vadd.f32 %v2900, %v3092
    %v3094 = vpop.f32.mrf.mxu0
    %v3095 = vadd.f32 %v2902, %v3094
    %v3096 = vpop.f32.mrf.mxu0
    %v3097 = vadd.f32 %v2904, %v3096
    %3098 = vmatprep.mubr.bf16.mxu0 %v834
    %3099 = vmatmul.mubr.bf16.gmra.mxu0 %v833
    %v3100 = vpop.f32.mrf.mxu0
    %v3101 = vadd.f32 %v2908, %v3100
    %v3102 = vpop.f32.mrf.mxu0
    %v3103 = vadd.f32 %v2910, %v3102
    %v3104 = vpop.f32.mrf.mxu0
    %v3105 = vadd.f32 %v2912, %v3104
    %v3106 = vpop.f32.mrf.mxu0
    %v3107 = vadd.f32 %v2914, %v3106
    %3108 = vmatprep.mubr.bf16.mxu0 %v841
    %3109 = vmatmul.mubr.bf16.gmra.mxu0 %v840
    %v3110 = vpop.f32.mrf.mxu0
    %v3111 = vadd.f32 %v2918, %v3110
    %v3112 = vpop.f32.mrf.mxu0
    %v3113 = vadd.f32 %v2920, %v3112
    %v3114 = vpop.f32.mrf.mxu0
    %v3115 = vadd.f32 %v2922, %v3114
    %v3116 = vpop.f32.mrf.mxu0
    %v3117 = vadd.f32 %v2924, %v3116
    %3118 = vmatprep.mubr.bf16.mxu0 %v848
    %3119 = vmatmul.mubr.bf16.gmra.mxu0 %v847
    %v3120 = vpop.f32.mrf.mxu0
    %v3121 = vadd.f32 %v2928, %v3120
    %v3122 = vpop.f32.mrf.mxu0
    %v3123 = vadd.f32 %v2930, %v3122
    %v3124 = vpop.f32.mrf.mxu0
    %v3125 = vadd.f32 %v2932, %v3124
    %v3126 = vpop.f32.mrf.mxu0
    %v3127 = vadd.f32 %v2934, %v3126
    %3128 = vmatprep.mubr.bf16.mxu0 %v855
    %3129 = vmatmul.mubr.bf16.gmra.mxu0 %v854
    %v3130 = vpop.f32.mrf.mxu0
    %v3131 = vadd.f32 %v2938, %v3130
    %v3132 = vpop.f32.mrf.mxu0
    %v3133 = vadd.f32 %v2940, %v3132
    %v3134 = vpop.f32.mrf.mxu0
    %v3135 = vadd.f32 %v2942, %v3134
    %v3136 = vpop.f32.mrf.mxu0
    %v3137 = vadd.f32 %v2944, %v3136
    %3138 = vmatprep.mubr.bf16.mxu0 %v862
    %3139 = vmatmul.mubr.bf16.gmra.mxu0 %v861
    %v3140 = vpop.f32.mrf.mxu0
    %v3141 = vadd.f32 %v2948, %v3140
    %v3142 = vpop.f32.mrf.mxu0
    %v3143 = vadd.f32 %v2950, %v3142
    %v3144 = vpop.f32.mrf.mxu0
    %v3145 = vadd.f32 %v2952, %v3144
    %v3146 = vpop.f32.mrf.mxu0
    %v3147 = vadd.f32 %v2954, %v3146
    %3148 = vdwg.mxu0
    %3149 = vmatprep.subr.bf16.mxu0 %v1709
    %3150 = vmatpush1.bf16.msra.mxu0 %v1708
    %3151 = vmatprep.subr.bf16.mxu0 %v1705
    %3152 = vmatpush1.bf16.msra.mxu0 %v1704
    %3153 = vmatprep.subr.bf16.mxu0 %v1701
    %3154 = vmatpush1.bf16.msra.mxu0 %v1700
    %3155 = vmatprep.subr.bf16.mxu0 %v1697
    %3156 = vmatpush1.bf16.msra.mxu0 %v1696
    %3157 = vmatprep.subr.bf16.mxu0 %v1693
    %3158 = vmatpush1.bf16.msra.mxu0 %v1692
    %3159 = vmatprep.subr.bf16.mxu0 %v1689
    %3160 = vmatpush1.bf16.msra.mxu0 %v1688
    %3161 = vmatprep.subr.bf16.mxu0 %v1685
    %3162 = vmatpush1.bf16.msra.mxu0 %v1684
    %3163 = vmatprep.subr.bf16.mxu0 %v1681
    %3164 = vmatpush1.bf16.msra.mxu0 %v1680
    %3165 = vmatprep.subr.bf16.mxu0 %v1741
    %3166 = vmatpush2.bf16.msra.mxu0 %v1740
    %3167 = vmatprep.subr.bf16.mxu0 %v1737
    %3168 = vmatpush2.bf16.msra.mxu0 %v1736
    %3169 = vmatprep.subr.bf16.mxu0 %v1733
    %3170 = vmatpush2.bf16.msra.mxu0 %v1732
    %3171 = vmatprep.subr.bf16.mxu0 %v1729
    %3172 = vmatpush2.bf16.msra.mxu0 %v1728
    %3173 = vmatprep.subr.bf16.mxu0 %v1725
    %3174 = vmatpush2.bf16.msra.mxu0 %v1724
    %3175 = vmatprep.subr.bf16.mxu0 %v1721
    %3176 = vmatpush2.bf16.msra.mxu0 %v1720
    %3177 = vmatprep.subr.bf16.mxu0 %v1717
    %3178 = vmatpush2.bf16.msra.mxu0 %v1716
    %3179 = vmatprep.subr.bf16.mxu0 %v1713
    %3180 = vmatpush2.bf16.msra.mxu0 %v1712
    %3181 = vmatprep.mubr.bf16.mxu0 %v759
    %3182 = vmatmul.mubr.bf16.gmra.mxu0 %v758
    %v3183 = vpop.f32.mrf.mxu0
    %v3184 = vadd.f32 %v2991, %v3183
    %v3185 = vpop.f32.mrf.mxu0
    %v3186 = vadd.f32 %v2993, %v3185
    %v3187 = vpop.f32.mrf.mxu0
    %v3188 = vadd.f32 %v2995, %v3187
    %v3189 = vpop.f32.mrf.mxu0
    %v3190 = vadd.f32 %v2997, %v3189
    %3191 = vmatprep.mubr.bf16.mxu0 %v766
    %3192 = vmatmul.mubr.bf16.gmra.mxu0 %v765
    %v3193 = vpop.f32.mrf.mxu0
    %v3194 = vadd.f32 %v3001, %v3193
    %v3195 = vpop.f32.mrf.mxu0
    %v3196 = vadd.f32 %v3003, %v3195
    %v3197 = vpop.f32.mrf.mxu0
    %v3198 = vadd.f32 %v3005, %v3197
    %v3199 = vpop.f32.mrf.mxu0
    %v3200 = vadd.f32 %v3007, %v3199
    %3201 = vmatprep.mubr.bf16.mxu0 %v773
    %3202 = vmatmul.mubr.bf16.gmra.mxu0 %v772
    %v3203 = vpop.f32.mrf.mxu0
    %v3204 = vadd.f32 %v3011, %v3203
    %v3205 = vpop.f32.mrf.mxu0
    %v3206 = vadd.f32 %v3013, %v3205
    %v3207 = vpop.f32.mrf.mxu0
    %v3208 = vadd.f32 %v3015, %v3207
    %v3209 = vpop.f32.mrf.mxu0
    %v3210 = vadd.f32 %v3017, %v3209
    %3211 = vmatprep.mubr.bf16.mxu0 %v780
    %3212 = vmatmul.mubr.bf16.gmra.mxu0 %v779
    %v3213 = vpop.f32.mrf.mxu0
    %v3214 = vadd.f32 %v3021, %v3213
    %v3215 = vpop.f32.mrf.mxu0
    %v3216 = vadd.f32 %v3023, %v3215
    %v3217 = vpop.f32.mrf.mxu0
    %v3218 = vadd.f32 %v3025, %v3217
    %v3219 = vpop.f32.mrf.mxu0
    %v3220 = vadd.f32 %v3027, %v3219
    %3221 = vmatprep.mubr.bf16.mxu0 %v787
    %3222 = vmatmul.mubr.bf16.gmra.mxu0 %v786
    %v3223 = vpop.f32.mrf.mxu0
    %v3224 = vadd.f32 %v3031, %v3223
    %v3225 = vpop.f32.mrf.mxu0
    %v3226 = vadd.f32 %v3033, %v3225
    %v3227 = vpop.f32.mrf.mxu0
    %v3228 = vadd.f32 %v3035, %v3227
    %v3229 = vpop.f32.mrf.mxu0
    %v3230 = vadd.f32 %v3037, %v3229
    %3231 = vmatprep.mubr.bf16.mxu0 %v794
    %3232 = vmatmul.mubr.bf16.gmra.mxu0 %v793
    %v3233 = vpop.f32.mrf.mxu0
    %v3234 = vadd.f32 %v3041, %v3233
    %v3235 = vpop.f32.mrf.mxu0
    %v3236 = vadd.f32 %v3043, %v3235
    %v3237 = vpop.f32.mrf.mxu0
    %v3238 = vadd.f32 %v3045, %v3237
    %v3239 = vpop.f32.mrf.mxu0
    %v3240 = vadd.f32 %v3047, %v3239
    %3241 = vmatprep.mubr.bf16.mxu0 %v801
    %3242 = vmatmul.mubr.bf16.gmra.mxu0 %v800
    %v3243 = vpop.f32.mrf.mxu0
    %v3244 = vadd.f32 %v3051, %v3243
    %v3245 = vpop.f32.mrf.mxu0
    %v3246 = vadd.f32 %v3053, %v3245
    %v3247 = vpop.f32.mrf.mxu0
    %v3248 = vadd.f32 %v3055, %v3247
    %v3249 = vpop.f32.mrf.mxu0
    %v3250 = vadd.f32 %v3057, %v3249
    %3251 = vmatprep.mubr.bf16.mxu0 %v808
    %3252 = vmatmul.mubr.bf16.gmra.mxu0 %v807
    %v3253 = vpop.f32.mrf.mxu0
    %v3254 = vadd.f32 %v3061, %v3253
    %v3255 = vpop.f32.mrf.mxu0
    %v3256 = vadd.f32 %v3063, %v3255
    %v3257 = vpop.f32.mrf.mxu0
    %v3258 = vadd.f32 %v3065, %v3257
    %v3259 = vpop.f32.mrf.mxu0
    %v3260 = vadd.f32 %v3067, %v3259
    %3261 = vmatprep.mubr.bf16.mxu0 %v815
    %3262 = vmatmul.mubr.bf16.gmra.mxu0 %v814
    %v3263 = vpop.f32.mrf.mxu0
    %v3264 = vadd.f32 %v3071, %v3263
    %v3265 = vpop.f32.mrf.mxu0
    %v3266 = vadd.f32 %v3073, %v3265
    %v3267 = vpop.f32.mrf.mxu0
    %v3268 = vadd.f32 %v3075, %v3267
    %v3269 = vpop.f32.mrf.mxu0
    %v3270 = vadd.f32 %v3077, %v3269
    %3271 = vmatprep.mubr.bf16.mxu0 %v822
    %3272 = vmatmul.mubr.bf16.gmra.mxu0 %v821
    %v3273 = vpop.f32.mrf.mxu0
    %v3274 = vadd.f32 %v3081, %v3273
    %v3275 = vpop.f32.mrf.mxu0
    %v3276 = vadd.f32 %v3083, %v3275
    %v3277 = vpop.f32.mrf.mxu0
    %v3278 = vadd.f32 %v3085, %v3277
    %v3279 = vpop.f32.mrf.mxu0
    %v3280 = vadd.f32 %v3087, %v3279
    %3281 = vmatprep.mubr.bf16.mxu0 %v829
    %3282 = vmatmul.mubr.bf16.gmra.mxu0 %v828
    %v3283 = vpop.f32.mrf.mxu0
    %v3284 = vadd.f32 %v3091, %v3283
    %v3285 = vpop.f32.mrf.mxu0
    %v3286 = vadd.f32 %v3093, %v3285
    %v3287 = vpop.f32.mrf.mxu0
    %v3288 = vadd.f32 %v3095, %v3287
    %v3289 = vpop.f32.mrf.mxu0
    %v3290 = vadd.f32 %v3097, %v3289
    %3291 = vmatprep.mubr.bf16.mxu0 %v836
    %3292 = vmatmul.mubr.bf16.gmra.mxu0 %v835
    %v3293 = vpop.f32.mrf.mxu0
    %v3294 = vadd.f32 %v3101, %v3293
    %v3295 = vpop.f32.mrf.mxu0
    %v3296 = vadd.f32 %v3103, %v3295
    %v3297 = vpop.f32.mrf.mxu0
    %v3298 = vadd.f32 %v3105, %v3297
    %v3299 = vpop.f32.mrf.mxu0
    %v3300 = vadd.f32 %v3107, %v3299
    %3301 = vmatprep.mubr.bf16.mxu0 %v843
    %3302 = vmatmul.mubr.bf16.gmra.mxu0 %v842
    %v3303 = vpop.f32.mrf.mxu0
    %v3304 = vadd.f32 %v3111, %v3303
    %v3305 = vpop.f32.mrf.mxu0
    %v3306 = vadd.f32 %v3113, %v3305
    %v3307 = vpop.f32.mrf.mxu0
    %v3308 = vadd.f32 %v3115, %v3307
    %v3309 = vpop.f32.mrf.mxu0
    %v3310 = vadd.f32 %v3117, %v3309
    %3311 = vmatprep.mubr.bf16.mxu0 %v850
    %3312 = vmatmul.mubr.bf16.gmra.mxu0 %v849
    %v3313 = vpop.f32.mrf.mxu0
    %v3314 = vadd.f32 %v3121, %v3313
    %v3315 = vpop.f32.mrf.mxu0
    %v3316 = vadd.f32 %v3123, %v3315
    %v3317 = vpop.f32.mrf.mxu0
    %v3318 = vadd.f32 %v3125, %v3317
    %v3319 = vpop.f32.mrf.mxu0
    %v3320 = vadd.f32 %v3127, %v3319
    %3321 = vmatprep.mubr.bf16.mxu0 %v857
    %3322 = vmatmul.mubr.bf16.gmra.mxu0 %v856
    %v3323 = vpop.f32.mrf.mxu0
    %v3324 = vadd.f32 %v3131, %v3323
    %v3325 = vpop.f32.mrf.mxu0
    %v3326 = vadd.f32 %v3133, %v3325
    %v3327 = vpop.f32.mrf.mxu0
    %v3328 = vadd.f32 %v3135, %v3327
    %v3329 = vpop.f32.mrf.mxu0
    %v3330 = vadd.f32 %v3137, %v3329
    %3331 = vmatprep.mubr.bf16.mxu0 %v864
    %3332 = vmatmul.mubr.bf16.gmra.mxu0 %v863
    %v3333 = vpop.f32.mrf.mxu0
    %v3334 = vadd.f32 %v3141, %v3333
    %v3335 = vpop.f32.mrf.mxu0
    %v3336 = vadd.f32 %v3143, %v3335
    %v3337 = vpop.f32.mrf.mxu0
    %v3338 = vadd.f32 %v3145, %v3337
    %v3339 = vpop.f32.mrf.mxu0
    %v3340 = vadd.f32 %v3147, %v3339
    %3341 = vdwg.mxu0
    %3342 = vmatprep.subr.bf16.mxu0 0
    %3343 = vmatpush1.bf16.msra.mxu0 0
    %3344 = vmatprep.subr.bf16.mxu0 0
    %3345 = vmatpush1.bf16.msra.mxu0 0
    %3346 = vmatprep.subr.bf16.mxu0 0
    %3347 = vmatpush1.bf16.msra.mxu0 0
    %3348 = vmatprep.subr.bf16.mxu0 0
    %3349 = vmatpush1.bf16.msra.mxu0 0
    %3350 = vmatprep.subr.bf16.mxu0 0
    %3351 = vmatpush1.bf16.msra.mxu0 0
    %3352 = vmatprep.subr.bf16.mxu0 0
    %3353 = vmatpush1.bf16.msra.mxu0 0
    %3354 = vmatprep.subr.bf16.mxu0 0
    %3355 = vmatpush1.bf16.msra.mxu0 0
    %3356 = vmatprep.subr.bf16.mxu0 %v1745
    %3357 = vmatpush1.bf16.msra.mxu0 %v1744
    %3358 = vmatprep.subr.bf16.mxu0 0
    %3359 = vmatpush2.bf16.msra.mxu0 0
    %3360 = vmatprep.subr.bf16.mxu0 0
    %3361 = vmatpush2.bf16.msra.mxu0 0
    %3362 = vmatprep.subr.bf16.mxu0 0
    %3363 = vmatpush2.bf16.msra.mxu0 0
    %3364 = vmatprep.subr.bf16.mxu0 0
    %3365 = vmatpush2.bf16.msra.mxu0 0
    %3366 = vmatprep.subr.bf16.mxu0 0
    %3367 = vmatpush2.bf16.msra.mxu0 0
    %3368 = vmatprep.subr.bf16.mxu0 0
    %3369 = vmatpush2.bf16.msra.mxu0 0
    %3370 = vmatprep.subr.bf16.mxu0 0
    %3371 = vmatpush2.bf16.msra.mxu0 0
    %3372 = vmatprep.subr.bf16.mxu0 0
    %3373 = vmatpush2.bf16.msra.mxu0 0
    %3374 = vmatprep.mubr.bf16.mxu0 0
    %3375 = vmatmul.mubr.bf16.gmra.mxu0 %v1944
    %v3376 = vpop.f32.mrf.mxu0
    %v3377 = vadd.f32 %v3184, %v3376
    %v3378 = vpop.f32.mrf.mxu0
    %v3379 = vadd.f32 %v3186, %v3378
    %v3380 = vpop.f32.mrf.mxu0
    %v3381 = vadd.f32 %v3188, %v3380
    %v3382 = vpop.f32.mrf.mxu0
    %v3383 = vadd.f32 %v3190, %v3382
    %3384 = vmatprep.mubr.bf16.mxu0 0
    %3385 = vmatmul.mubr.bf16.gmra.mxu0 %v1947
    %v3386 = vpop.f32.mrf.mxu0
    %v3387 = vadd.f32 %v3194, %v3386
    %v3388 = vpop.f32.mrf.mxu0
    %v3389 = vadd.f32 %v3196, %v3388
    %v3390 = vpop.f32.mrf.mxu0
    %v3391 = vadd.f32 %v3198, %v3390
    %v3392 = vpop.f32.mrf.mxu0
    %v3393 = vadd.f32 %v3200, %v3392
    %3394 = vmatprep.mubr.bf16.mxu0 0
    %3395 = vmatmul.mubr.bf16.gmra.mxu0 %v1950
    %v3396 = vpop.f32.mrf.mxu0
    %v3397 = vadd.f32 %v3204, %v3396
    %v3398 = vpop.f32.mrf.mxu0
    %v3399 = vadd.f32 %v3206, %v3398
    %v3400 = vpop.f32.mrf.mxu0
    %v3401 = vadd.f32 %v3208, %v3400
    %v3402 = vpop.f32.mrf.mxu0
    %v3403 = vadd.f32 %v3210, %v3402
    %3404 = vmatprep.mubr.bf16.mxu0 0
    %3405 = vmatmul.mubr.bf16.gmra.mxu0 %v1953
    %v3406 = vpop.f32.mrf.mxu0
    %v3407 = vadd.f32 %v3214, %v3406
    %v3408 = vpop.f32.mrf.mxu0
    %v3409 = vadd.f32 %v3216, %v3408
    %v3410 = vpop.f32.mrf.mxu0
    %v3411 = vadd.f32 %v3218, %v3410
    %v3412 = vpop.f32.mrf.mxu0
    %v3413 = vadd.f32 %v3220, %v3412
    %3414 = vmatprep.mubr.bf16.mxu0 0
    %3415 = vmatmul.mubr.bf16.gmra.mxu0 %v1956
    %v3416 = vpop.f32.mrf.mxu0
    %v3417 = vadd.f32 %v3224, %v3416
    %v3418 = vpop.f32.mrf.mxu0
    %v3419 = vadd.f32 %v3226, %v3418
    %v3420 = vpop.f32.mrf.mxu0
    %v3421 = vadd.f32 %v3228, %v3420
    %v3422 = vpop.f32.mrf.mxu0
    %v3423 = vadd.f32 %v3230, %v3422
    %3424 = vmatprep.mubr.bf16.mxu0 0
    %3425 = vmatmul.mubr.bf16.gmra.mxu0 %v1959
    %v3426 = vpop.f32.mrf.mxu0
    %v3427 = vadd.f32 %v3234, %v3426
    %v3428 = vpop.f32.mrf.mxu0
    %v3429 = vadd.f32 %v3236, %v3428
    %v3430 = vpop.f32.mrf.mxu0
    %v3431 = vadd.f32 %v3238, %v3430
    %v3432 = vpop.f32.mrf.mxu0
    %v3433 = vadd.f32 %v3240, %v3432
    %3434 = vmatprep.mubr.bf16.mxu0 0
    %3435 = vmatmul.mubr.bf16.gmra.mxu0 %v1962
    %v3436 = vpop.f32.mrf.mxu0
    %v3437 = vadd.f32 %v3244, %v3436
    %v3438 = vpop.f32.mrf.mxu0
    %v3439 = vadd.f32 %v3246, %v3438
    %v3440 = vpop.f32.mrf.mxu0
    %v3441 = vadd.f32 %v3248, %v3440
    %v3442 = vpop.f32.mrf.mxu0
    %v3443 = vadd.f32 %v3250, %v3442
    %3444 = vmatprep.mubr.bf16.mxu0 0
    %3445 = vmatmul.mubr.bf16.gmra.mxu0 %v1965
    %v3446 = vpop.f32.mrf.mxu0
    %v3447 = vadd.f32 %v3254, %v3446
    %v3448 = vpop.f32.mrf.mxu0
    %v3449 = vadd.f32 %v3256, %v3448
    %v3450 = vpop.f32.mrf.mxu0
    %v3451 = vadd.f32 %v3258, %v3450
    %v3452 = vpop.f32.mrf.mxu0
    %v3453 = vadd.f32 %v3260, %v3452
    %3454 = vmatprep.mubr.bf16.mxu0 0
    %3455 = vmatmul.mubr.bf16.gmra.mxu0 %v1968
    %v3456 = vpop.f32.mrf.mxu0
    %v3457 = vadd.f32 %v3264, %v3456
    %v3458 = vpop.f32.mrf.mxu0
    %v3459 = vadd.f32 %v3266, %v3458
    %v3460 = vpop.f32.mrf.mxu0
    %v3461 = vadd.f32 %v3268, %v3460
    %v3462 = vpop.f32.mrf.mxu0
    %v3463 = vadd.f32 %v3270, %v3462
    %3464 = vmatprep.mubr.bf16.mxu0 0
    %3465 = vmatmul.mubr.bf16.gmra.mxu0 %v1971
    %v3466 = vpop.f32.mrf.mxu0
    %v3467 = vadd.f32 %v3274, %v3466
    %v3468 = vpop.f32.mrf.mxu0
    %v3469 = vadd.f32 %v3276, %v3468
    %v3470 = vpop.f32.mrf.mxu0
    %v3471 = vadd.f32 %v3278, %v3470
    %v3472 = vpop.f32.mrf.mxu0
    %v3473 = vadd.f32 %v3280, %v3472
    %3474 = vmatprep.mubr.bf16.mxu0 0
    %3475 = vmatmul.mubr.bf16.gmra.mxu0 %v1974
    %v3476 = vpop.f32.mrf.mxu0
    %v3477 = vadd.f32 %v3284, %v3476
    %v3478 = vpop.f32.mrf.mxu0
    %v3479 = vadd.f32 %v3286, %v3478
    %v3480 = vpop.f32.mrf.mxu0
    %v3481 = vadd.f32 %v3288, %v3480
    %v3482 = vpop.f32.mrf.mxu0
    %v3483 = vadd.f32 %v3290, %v3482
    %3484 = vmatprep.mubr.bf16.mxu0 0
    %3485 = vmatmul.mubr.bf16.gmra.mxu0 %v1977
    %v3486 = vpop.f32.mrf.mxu0
    %v3487 = vadd.f32 %v3294, %v3486
    %v3488 = vpop.f32.mrf.mxu0
    %v3489 = vadd.f32 %v3296, %v3488
    %v3490 = vpop.f32.mrf.mxu0
    %v3491 = vadd.f32 %v3298, %v3490
    %v3492 = vpop.f32.mrf.mxu0
    %v3493 = vadd.f32 %v3300, %v3492
    %3494 = vmatprep.mubr.bf16.mxu0 0
    %3495 = vmatmul.mubr.bf16.gmra.mxu0 %v1980
    %v3496 = vpop.f32.mrf.mxu0
    %v3497 = vadd.f32 %v3304, %v3496
    %v3498 = vpop.f32.mrf.mxu0
    %v3499 = vadd.f32 %v3306, %v3498
    %v3500 = vpop.f32.mrf.mxu0
    %v3501 = vadd.f32 %v3308, %v3500
    %v3502 = vpop.f32.mrf.mxu0
    %v3503 = vadd.f32 %v3310, %v3502
    %3504 = vmatprep.mubr.bf16.mxu0 0
    %3505 = vmatmul.mubr.bf16.gmra.mxu0 %v1983
    %v3506 = vpop.f32.mrf.mxu0
    %v3507 = vadd.f32 %v3314, %v3506
    %v3508 = vpop.f32.mrf.mxu0
    %v3509 = vadd.f32 %v3316, %v3508
    %v3510 = vpop.f32.mrf.mxu0
    %v3511 = vadd.f32 %v3318, %v3510
    %v3512 = vpop.f32.mrf.mxu0
    %v3513 = vadd.f32 %v3320, %v3512
    %3514 = vmatprep.mubr.bf16.mxu0 0
    %3515 = vmatmul.mubr.bf16.gmra.mxu0 %v1986
    %v3516 = vpop.f32.mrf.mxu0
    %v3517 = vadd.f32 %v3324, %v3516
    %v3518 = vpop.f32.mrf.mxu0
    %v3519 = vadd.f32 %v3326, %v3518
    %v3520 = vpop.f32.mrf.mxu0
    %v3521 = vadd.f32 %v3328, %v3520
    %v3522 = vpop.f32.mrf.mxu0
    %v3523 = vadd.f32 %v3330, %v3522
    %3524 = vmatprep.mubr.bf16.mxu0 0
    %3525 = vmatmul.mubr.bf16.gmra.mxu0 %v1989
    %v3526 = vpop.f32.mrf.mxu0
    %v3527 = vadd.f32 %v3334, %v3526
    %v3528 = vpop.f32.mrf.mxu0
    %v3529 = vadd.f32 %v3336, %v3528
    %v3530 = vpop.f32.mrf.mxu0
    %v3531 = vadd.f32 %v3338, %v3530
    %v3532 = vpop.f32.mrf.mxu0
    %v3533 = vadd.f32 %v3340, %v3532
    %3534 = vdwg.mxu0
    %v3535 = vmax.f32 %v2605, 0.0
    %v3536 = vmax.f32 %v2607, 0.0
    %v3537 = vmax.f32 %v3377, 0.0
    %v3538 = vmax.f32 %v3379, 0.0
    %v3539 = vmax.f32 %v2609, 0.0
    %v3540 = vmax.f32 %v2611, 0.0
    %v3541 = vmax.f32 %v3381, 0.0
    %v3542 = vmax.f32 %v3383, 0.0
    %v3543 = vmax.f32 %v2615, 0.0
    %v3544 = vmax.f32 %v2617, 0.0
    %v3545 = vmax.f32 %v3387, 0.0
    %v3546 = vmax.f32 %v3389, 0.0
    %v3547 = vmax.f32 %v2619, 0.0
    %v3548 = vmax.f32 %v2621, 0.0
    %v3549 = vmax.f32 %v3391, 0.0
    %v3550 = vmax.f32 %v3393, 0.0
    %v3551 = vmax.f32 %v2625, 0.0
    %v3552 = vmax.f32 %v2627, 0.0
    %v3553 = vmax.f32 %v3397, 0.0
    %v3554 = vmax.f32 %v3399, 0.0
    %v3555 = vmax.f32 %v2629, 0.0
    %v3556 = vmax.f32 %v2631, 0.0
    %v3557 = vmax.f32 %v3401, 0.0
    %v3558 = vmax.f32 %v3403, 0.0
    %v3559 = vmax.f32 %v2635, 0.0
    %v3560 = vmax.f32 %v2637, 0.0
    %v3561 = vmax.f32 %v3407, 0.0
    %v3562 = vmax.f32 %v3409, 0.0
    %v3563 = vmax.f32 %v2639, 0.0
    %v3564 = vmax.f32 %v2641, 0.0
    %v3565 = vmax.f32 %v3411, 0.0
    %v3566 = vmax.f32 %v3413, 0.0
    %v3567 = vmax.f32 %v2645, 0.0
    %v3568 = vmax.f32 %v2647, 0.0
    %v3569 = vmax.f32 %v3417, 0.0
    %v3570 = vmax.f32 %v3419, 0.0
    %v3571 = vmax.f32 %v2649, 0.0
    %v3572 = vmax.f32 %v2651, 0.0
    %v3573 = vmax.f32 %v3421, 0.0
    %v3574 = vmax.f32 %v3423, 0.0
    %v3575 = vmax.f32 %v2655, 0.0
    %v3576 = vmax.f32 %v2657, 0.0
    %v3577 = vmax.f32 %v3427, 0.0
    %v3578 = vmax.f32 %v3429, 0.0
    %v3579 = vmax.f32 %v2659, 0.0
    %v3580 = vmax.f32 %v2661, 0.0
    %v3581 = vmax.f32 %v3431, 0.0
    %v3582 = vmax.f32 %v3433, 0.0
    %v3583 = vmax.f32 %v2665, 0.0
    %v3584 = vmax.f32 %v2667, 0.0
    %v3585 = vmax.f32 %v3437, 0.0
    %v3586 = vmax.f32 %v3439, 0.0
    %v3587 = vmax.f32 %v2669, 0.0
    %v3588 = vmax.f32 %v2671, 0.0
    %v3589 = vmax.f32 %v3441, 0.0
    %v3590 = vmax.f32 %v3443, 0.0
    %v3591 = vmax.f32 %v2675, 0.0
    %v3592 = vmax.f32 %v2677, 0.0
    %v3593 = vmax.f32 %v3447, 0.0
    %v3594 = vmax.f32 %v3449, 0.0
    %v3595 = vmax.f32 %v2679, 0.0
    %v3596 = vmax.f32 %v2681, 0.0
    %v3597 = vmax.f32 %v3451, 0.0
    %v3598 = vmax.f32 %v3453, 0.0
    %v3599 = vmax.f32 %v2685, 0.0
    %v3600 = vmax.f32 %v2687, 0.0
    %v3601 = vmax.f32 %v3457, 0.0
    %v3602 = vmax.f32 %v3459, 0.0
    %v3603 = vmax.f32 %v2689, 0.0
    %v3604 = vmax.f32 %v2691, 0.0
    %v3605 = vmax.f32 %v3461, 0.0
    %v3606 = vmax.f32 %v3463, 0.0
    %v3607 = vmax.f32 %v2695, 0.0
    %v3608 = vmax.f32 %v2697, 0.0
    %v3609 = vmax.f32 %v3467, 0.0
    %v3610 = vmax.f32 %v3469, 0.0
    %v3611 = vmax.f32 %v2699, 0.0
    %v3612 = vmax.f32 %v2701, 0.0
    %v3613 = vmax.f32 %v3471, 0.0
    %v3614 = vmax.f32 %v3473, 0.0
    %v3615 = vmax.f32 %v2705, 0.0
    %v3616 = vmax.f32 %v2707, 0.0
    %v3617 = vmax.f32 %v3477, 0.0
    %v3618 = vmax.f32 %v3479, 0.0
    %v3619 = vmax.f32 %v2709, 0.0
    %v3620 = vmax.f32 %v2711, 0.0
    %v3621 = vmax.f32 %v3481, 0.0
    %v3622 = vmax.f32 %v3483, 0.0
    %v3623 = vmax.f32 %v2715, 0.0
    %v3624 = vmax.f32 %v2717, 0.0
    %v3625 = vmax.f32 %v3487, 0.0
    %v3626 = vmax.f32 %v3489, 0.0
    %v3627 = vmax.f32 %v2719, 0.0
    %v3628 = vmax.f32 %v2721, 0.0
    %v3629 = vmax.f32 %v3491, 0.0
    %v3630 = vmax.f32 %v3493, 0.0
    %v3631 = vmax.f32 %v2725, 0.0
    %v3632 = vmax.f32 %v2727, 0.0
    %v3633 = vmax.f32 %v3497, 0.0
    %v3634 = vmax.f32 %v3499, 0.0
    %v3635 = vmax.f32 %v2729, 0.0
    %v3636 = vmax.f32 %v2731, 0.0
    %v3637 = vmax.f32 %v3501, 0.0
    %v3638 = vmax.f32 %v3503, 0.0
    %v3639 = vmax.f32 %v2735, 0.0
    %v3640 = vmax.f32 %v2737, 0.0
    %v3641 = vmax.f32 %v3507, 0.0
    %v3642 = vmax.f32 %v3509, 0.0
    %v3643 = vmax.f32 %v2739, 0.0
    %v3644 = vmax.f32 %v2741, 0.0
    %v3645 = vmax.f32 %v3511, 0.0
    %v3646 = vmax.f32 %v3513, 0.0
    %v3647 = vmax.f32 %v2745, 0.0
    %v3648 = vmax.f32 %v2747, 0.0
    %v3649 = vmax.f32 %v3517, 0.0
    %v3650 = vmax.f32 %v3519, 0.0
    %v3651 = vmax.f32 %v2749, 0.0
    %v3652 = vmax.f32 %v2751, 0.0
    %v3653 = vmax.f32 %v3521, 0.0
    %v3654 = vmax.f32 %v3523, 0.0
    %v3655 = vmax.f32 %v2755, 0.0
    %v3656 = vmax.f32 %v2757, 0.0
    %v3657 = vmax.f32 %v3527, 0.0
    %v3658 = vmax.f32 %v3529, 0.0
    %v3659 = vmax.f32 %v2759, 0.0
    %v3660 = vmax.f32 %v2761, 0.0
    %v3661 = vmax.f32 %v3531, 0.0
    %v3662 = vmax.f32 %v3533, 0.0
    %v3663 = vpack.c.bf16 %v3539, %v3535
    %v3664 = vpack.c.bf16 %v3540, %v3536
    %v3665 = vpack.c.bf16 %v3541, %v3537
    %v3666 = vpack.c.bf16 %v3542, %v3538
    %v3667 = vpack.c.bf16 %v3547, %v3543
    %v3668 = vpack.c.bf16 %v3548, %v3544
    %v3669 = vpack.c.bf16 %v3549, %v3545
    %v3670 = vpack.c.bf16 %v3550, %v3546
    %v3671 = vpack.c.bf16 %v3555, %v3551
    %v3672 = vpack.c.bf16 %v3556, %v3552
    %v3673 = vpack.c.bf16 %v3557, %v3553
    %v3674 = vpack.c.bf16 %v3558, %v3554
    %v3675 = vpack.c.bf16 %v3563, %v3559
    %v3676 = vpack.c.bf16 %v3564, %v3560
    %v3677 = vpack.c.bf16 %v3565, %v3561
    %v3678 = vpack.c.bf16 %v3566, %v3562
    %v3679 = vpack.c.bf16 %v3571, %v3567
    %v3680 = vpack.c.bf16 %v3572, %v3568
    %v3681 = vpack.c.bf16 %v3573, %v3569
    %v3682 = vpack.c.bf16 %v3574, %v3570
    %v3683 = vpack.c.bf16 %v3579, %v3575
    %v3684 = vpack.c.bf16 %v3580, %v3576
    %v3685 = vpack.c.bf16 %v3581, %v3577
    %v3686 = vpack.c.bf16 %v3582, %v3578
    %v3687 = vpack.c.bf16 %v3587, %v3583
    %v3688 = vpack.c.bf16 %v3588, %v3584
    %v3689 = vpack.c.bf16 %v3589, %v3585
    %v3690 = vpack.c.bf16 %v3590, %v3586
    %v3691 = vpack.c.bf16 %v3595, %v3591
    %v3692 = vpack.c.bf16 %v3596, %v3592
    %v3693 = vpack.c.bf16 %v3597, %v3593
    %v3694 = vpack.c.bf16 %v3598, %v3594
    %v3695 = vpack.c.bf16 %v3603, %v3599
    %v3696 = vpack.c.bf16 %v3604, %v3600
    %v3697 = vpack.c.bf16 %v3605, %v3601
    %v3698 = vpack.c.bf16 %v3606, %v3602
    %v3699 = vpack.c.bf16 %v3611, %v3607
    %v3700 = vpack.c.bf16 %v3612, %v3608
    %v3701 = vpack.c.bf16 %v3613, %v3609
    %v3702 = vpack.c.bf16 %v3614, %v3610
    %v3703 = vpack.c.bf16 %v3619, %v3615
    %v3704 = vpack.c.bf16 %v3620, %v3616
    %v3705 = vpack.c.bf16 %v3621, %v3617
    %v3706 = vpack.c.bf16 %v3622, %v3618
    %v3707 = vpack.c.bf16 %v3627, %v3623
    %v3708 = vpack.c.bf16 %v3628, %v3624
    %v3709 = vpack.c.bf16 %v3629, %v3625
    %v3710 = vpack.c.bf16 %v3630, %v3626
    %v3711 = vpack.c.bf16 %v3635, %v3631
    %v3712 = vpack.c.bf16 %v3636, %v3632
    %v3713 = vpack.c.bf16 %v3637, %v3633
    %v3714 = vpack.c.bf16 %v3638, %v3634
    %v3715 = vpack.c.bf16 %v3643, %v3639
    %v3716 = vpack.c.bf16 %v3644, %v3640
    %v3717 = vpack.c.bf16 %v3645, %v3641
    %v3718 = vpack.c.bf16 %v3646, %v3642
    %v3719 = vpack.c.bf16 %v3651, %v3647
    %v3720 = vpack.c.bf16 %v3652, %v3648
    %v3721 = vpack.c.bf16 %v3653, %v3649
    %v3722 = vpack.c.bf16 %v3654, %v3650
    %v3723 = vpack.c.bf16 %v3659, %v3655
    %v3724 = vpack.c.bf16 %v3660, %v3656
    %v3725 = vpack.c.bf16 %v3661, %v3657
    %v3726 = vpack.c.bf16 %v3662, %v3658
    %v3727 = vld [vmem:[#allocation2] sm:$0xff]
    %v3728 = vld [vmem:[#allocation2 + $0x8] sm:$0xff]
    %v3729 = vld [vmem:[#allocation2 + $0x10] sm:$0xff]
    %v3730 = vld [vmem:[#allocation2 + $0x18] sm:$0xff]
    %v3731 = vld [vmem:[#allocation2 + $0x20] sm:$0xff]
    %v3732 = vld [vmem:[#allocation2 + $0x28] sm:$0xff]
    %v3733 = vld [vmem:[#allocation2 + $0x30] sm:$0xff]
    %v3734 = vld [vmem:[#allocation2 + $0x38] sm:$0xff]
    %v3735 = vld [vmem:[#allocation2 + $0x40] sm:$0xff]
    %v3736 = vld [vmem:[#allocation2 + $0x48] sm:$0xff]
    %v3737 = vld [vmem:[#allocation2 + $0x50] sm:$0xff]
    %v3738 = vld [vmem:[#allocation2 + $0x58] sm:$0xff]
    %v3739 = vld [vmem:[#allocation2 + $0x60] sm:$0xff]
    %v3740 = vld [vmem:[#allocation2 + $0x68] sm:$0xff]
    %v3741 = vld [vmem:[#allocation2 + $0x70] sm:$0xff]
    %v3742 = vld [vmem:[#allocation2 + $0x78] sm:$0xff]
    %v3743 = vld [vmem:[#allocation2 + $0x80] sm:$0xff]
    %v3744 = vld [vmem:[#allocation2 + $0x88] sm:$0xff]
    %v3745 = vld [vmem:[#allocation2 + $0x90] sm:$0xff]
    %v3746 = vld [vmem:[#allocation2 + $0x98] sm:$0xff]
    %v3747 = vld [vmem:[#allocation2 + $0xa0] sm:$0xff]
    %v3748 = vld [vmem:[#allocation2 + $0xa8] sm:$0xff]
    %v3749 = vld [vmem:[#allocation2 + $0xb0] sm:$0xff]
    %v3750 = vld [vmem:[#allocation2 + $0xb8] sm:$0xff]
    %v3751 = vld [vmem:[#allocation2 + $0xc0] sm:$0xff]
    %v3752 = vld [vmem:[#allocation2 + $0xc8] sm:$0xff]
    %v3753 = vld [vmem:[#allocation2 + $0xd0] sm:$0xff]
    %v3754 = vld [vmem:[#allocation2 + $0xd8] sm:$0xff]
    %v3755 = vld [vmem:[#allocation2 + $0xe0] sm:$0xff]
    %v3756 = vld [vmem:[#allocation2 + $0xe8] sm:$0xff]
    %v3757 = vld [vmem:[#allocation2 + $0xf0] sm:$0xff]
    %v3758 = vld [vmem:[#allocation2 + $0xf8] sm:$0xff]
    %v3759 = vld [vmem:[#allocation2 + $0x100] sm:$0xff]
    %v3760 = vld [vmem:[#allocation2 + $0x108] sm:$0xff]
    %v3761 = vld [vmem:[#allocation2 + $0x110] sm:$0xff]
    %v3762 = vld [vmem:[#allocation2 + $0x118] sm:$0xff]
    %v3763 = vld [vmem:[#allocation2 + $0x120] sm:$0xff]
    %v3764 = vld [vmem:[#allocation2 + $0x128] sm:$0xff]
    %v3765 = vld [vmem:[#allocation2 + $0x130] sm:$0xff]
    %v3766 = vld [vmem:[#allocation2 + $0x138] sm:$0xff]
    %v3767 = vld [vmem:[#allocation2 + $0x140] sm:$0xff]
    %v3768 = vld [vmem:[#allocation2 + $0x148] sm:$0xff]
    %v3769 = vld [vmem:[#allocation2 + $0x150] sm:$0xff]
    %v3770 = vld [vmem:[#allocation2 + $0x158] sm:$0xff]
    %v3771 = vld [vmem:[#allocation2 + $0x160] sm:$0xff]
    %v3772 = vld [vmem:[#allocation2 + $0x168] sm:$0xff]
    %v3773 = vld [vmem:[#allocation2 + $0x170] sm:$0xff]
    %v3774 = vld [vmem:[#allocation2 + $0x178] sm:$0xff]
    %v3775 = vld [vmem:[#allocation2 + $0x180] sm:$0xff]
    %v3776 = vld [vmem:[#allocation2 + $0x188] sm:$0xff]
    %v3777 = vld [vmem:[#allocation2 + $0x190] sm:$0xff]
    %v3778 = vld [vmem:[#allocation2 + $0x198] sm:$0xff]
    %v3779 = vld [vmem:[#allocation2 + $0x1a0] sm:$0xff]
    %v3780 = vld [vmem:[#allocation2 + $0x1a8] sm:$0xff]
    %v3781 = vld [vmem:[#allocation2 + $0x1b0] sm:$0xff]
    %v3782 = vld [vmem:[#allocation2 + $0x1b8] sm:$0xff]
    %v3783 = vld [vmem:[#allocation2 + $0x1c0] sm:$0xff]
    %v3784 = vld [vmem:[#allocation2 + $0x1c8] sm:$0xff]
    %v3785 = vld [vmem:[#allocation2 + $0x1d0] sm:$0xff]
    %v3786 = vld [vmem:[#allocation2 + $0x1d8] sm:$0xff]
    %v3787 = vld [vmem:[#allocation2 + $0x1e0] sm:$0xff]
    %v3788 = vld [vmem:[#allocation2 + $0x1e8] sm:$0xff]
    %v3789 = vld [vmem:[#allocation2 + $0x1f0] sm:$0xff]
    %v3790 = vld [vmem:[#allocation2 + $0x1f8] sm:$0xff]
    %v3791 = vld [vmem:[#allocation2 + $0x200] sm:$0xff]
    %v3792 = vld [vmem:[#allocation2 + $0x208] sm:$0xff]
    %v3793 = vld [vmem:[#allocation2 + $0x210] sm:$0xff]
    %v3794 = vld [vmem:[#allocation2 + $0x218] sm:$0xff]
    %v3795 = vld [vmem:[#allocation2 + $0x220] sm:$0xff]
    %v3796 = vld [vmem:[#allocation2 + $0x228] sm:$0xff]
    %v3797 = vld [vmem:[#allocation2 + $0x230] sm:$0xff]
    %v3798 = vld [vmem:[#allocation2 + $0x238] sm:$0xff]
    %v3799 = vld [vmem:[#allocation2 + $0x240] sm:$0xff]
    %v3800 = vld [vmem:[#allocation2 + $0x248] sm:$0xff]
    %v3801 = vld [vmem:[#allocation2 + $0x250] sm:$0xff]
    %v3802 = vld [vmem:[#allocation2 + $0x258] sm:$0xff]
    %v3803 = vld [vmem:[#allocation2 + $0x260] sm:$0xff]
    %v3804 = vld [vmem:[#allocation2 + $0x268] sm:$0xff]
    %v3805 = vld [vmem:[#allocation2 + $0x270] sm:$0xff]
    %v3806 = vld [vmem:[#allocation2 + $0x278] sm:$0xff]
    %v3807 = vld [vmem:[#allocation2 + $0x280] sm:$0xff]
    %v3808 = vld [vmem:[#allocation2 + $0x288] sm:$0xff]
    %v3809 = vld [vmem:[#allocation2 + $0x290] sm:$0xff]
    %v3810 = vld [vmem:[#allocation2 + $0x298] sm:$0xff]
    %v3811 = vld [vmem:[#allocation2 + $0x2a0] sm:$0xff]
    %v3812 = vld [vmem:[#allocation2 + $0x2a8] sm:$0xff]
    %v3813 = vld [vmem:[#allocation2 + $0x2b0] sm:$0xff]
    %v3814 = vld [vmem:[#allocation2 + $0x2b8] sm:$0xff]
    %v3815 = vld [vmem:[#allocation2 + $0x2c0] sm:$0xff]
    %v3816 = vld [vmem:[#allocation2 + $0x2c8] sm:$0xff]
    %v3817 = vld [vmem:[#allocation2 + $0x2d0] sm:$0xff]
    %v3818 = vld [vmem:[#allocation2 + $0x2d8] sm:$0xff]
    %v3819 = vld [vmem:[#allocation2 + $0x2e0] sm:$0xff]
    %v3820 = vld [vmem:[#allocation2 + $0x2e8] sm:$0xff]
    %v3821 = vld [vmem:[#allocation2 + $0x2f0] sm:$0xff]
    %v3822 = vld [vmem:[#allocation2 + $0x2f8] sm:$0xff]
    %v3823 = vld [vmem:[#allocation2 + $0x300] sm:$0xff]
    %v3824 = vld [vmem:[#allocation2 + $0x308] sm:$0xff]
    %v3825 = vld [vmem:[#allocation2 + $0x310] sm:$0xff]
    %v3826 = vld [vmem:[#allocation2 + $0x318] sm:$0xff]
    %v3827 = vld [vmem:[#allocation2 + $0x320] sm:$0xff]
    %v3828 = vld [vmem:[#allocation2 + $0x328] sm:$0xff]
    %v3829 = vld [vmem:[#allocation2 + $0x330] sm:$0xff]
    %v3830 = vld [vmem:[#allocation2 + $0x338] sm:$0xff]
    %v3831 = vld [vmem:[#allocation2 + $0x340] sm:$0xff]
    %v3832 = vld [vmem:[#allocation2 + $0x348] sm:$0xff]
    %v3833 = vld [vmem:[#allocation2 + $0x350] sm:$0xff]
    %v3834 = vld [vmem:[#allocation2 + $0x358] sm:$0xff]
    %v3835 = vld [vmem:[#allocation2 + $0x360] sm:$0xff]
    %v3836 = vld [vmem:[#allocation2 + $0x368] sm:$0xff]
    %v3837 = vld [vmem:[#allocation2 + $0x370] sm:$0xff]
    %v3838 = vld [vmem:[#allocation2 + $0x378] sm:$0xff]
    %v3839 = vld [vmem:[#allocation2 + $0x380] sm:$0xff]
    %v3840 = vld [vmem:[#allocation2 + $0x388] sm:$0xff]
    %v3841 = vld [vmem:[#allocation2 + $0x390] sm:$0xff]
    %v3842 = vld [vmem:[#allocation2 + $0x398] sm:$0xff]
    %v3843 = vld [vmem:[#allocation2 + $0x3a0] sm:$0xff]
    %v3844 = vld [vmem:[#allocation2 + $0x3a8] sm:$0xff]
    %v3845 = vld [vmem:[#allocation2 + $0x3b0] sm:$0xff]
    %v3846 = vld [vmem:[#allocation2 + $0x3b8] sm:$0xff]
    %v3847 = vld [vmem:[#allocation2 + $0x3c0] sm:$0xff]
    %v3848 = vld [vmem:[#allocation2 + $0x3c8] sm:$0xff]
    %v3849 = vld [vmem:[#allocation2 + $0x3d0] sm:$0xff]
    %v3850 = vld [vmem:[#allocation2 + $0x3d8] sm:$0xff]
    %v3851 = vld [vmem:[#allocation2 + $0x3e0] sm:$0xff]
    %v3852 = vld [vmem:[#allocation2 + $0x3e8] sm:$0xff]
    %v3853 = vld [vmem:[#allocation2 + $0x3f0] sm:$0xff]
    %v3854 = vld [vmem:[#allocation2 + $0x3f8] sm:$0xff]
    %v3855 = vld [vmem:[%s4] sm:$0xf]
    %v3857 = vlaneseq
    %v3858 = vshrl.u32 %v3857, 7
    %v3859 = vsub.s32 0, %v3858
    %v3860 = vrot.slane %v3855, %v3859
    %v3861 = vlaneseq
    %v3862 = vshrl.u32 %v3861, 7
    %v3863 = vsub.s32 1, %v3862
    %v3864 = vrot.slane %v3855, %v3863
    %v3865 = vlaneseq
    %v3866 = vshrl.u32 %v3865, 7
    %v3867 = vsub.s32 2, %v3866
    %v3868 = vrot.slane %v3855, %v3867
    %v3869 = vlaneseq
    %v3870 = vshrl.u32 %v3869, 7
    %v3871 = vsub.s32 3, %v3870
    %v3872 = vrot.slane %v3855, %v3871
    %v4005 = vunpack.c.l.b16 %v3727
    %v4006 = vunpack.c.h.b16 %v3727
    %v4007 = vunpack.c.l.b16 %v3728
    %v4008 = vunpack.c.h.b16 %v3728
    %v4009 = vunpack.c.l.b16 %v3729
    %v4010 = vunpack.c.h.b16 %v3729
    %v4011 = vunpack.c.l.b16 %v3730
    %v4012 = vunpack.c.h.b16 %v3730
    %v4013 = vunpack.c.l.b16 %v3731
    %v4014 = vunpack.c.h.b16 %v3731
    %v4015 = vunpack.c.l.b16 %v3732
    %v4016 = vunpack.c.h.b16 %v3732
    %v4017 = vunpack.c.l.b16 %v3733
    %v4018 = vunpack.c.h.b16 %v3733
    %v4019 = vunpack.c.l.b16 %v3734
    %v4020 = vunpack.c.h.b16 %v3734
    %v4021 = vunpack.c.l.b16 %v3735
    %v4022 = vunpack.c.h.b16 %v3735
    %v4023 = vunpack.c.l.b16 %v3736
    %v4024 = vunpack.c.h.b16 %v3736
    %v4025 = vunpack.c.l.b16 %v3737
    %v4026 = vunpack.c.h.b16 %v3737
    %v4027 = vunpack.c.l.b16 %v3738
    %v4028 = vunpack.c.h.b16 %v3738
    %v4029 = vunpack.c.l.b16 %v3739
    %v4030 = vunpack.c.h.b16 %v3739
    %v4031 = vunpack.c.l.b16 %v3740
    %v4032 = vunpack.c.h.b16 %v3740
    %v4033 = vunpack.c.l.b16 %v3741
    %v4034 = vunpack.c.h.b16 %v3741
    %v4035 = vunpack.c.l.b16 %v3742
    %v4036 = vunpack.c.h.b16 %v3742
    %v4037 = vunpack.c.l.b16 %v3743
    %v4038 = vunpack.c.h.b16 %v3743
    %v4039 = vunpack.c.l.b16 %v3744
    %v4040 = vunpack.c.h.b16 %v3744
    %v4041 = vunpack.c.l.b16 %v3745
    %v4042 = vunpack.c.h.b16 %v3745
    %v4043 = vunpack.c.l.b16 %v3746
    %v4044 = vunpack.c.h.b16 %v3746
    %v4045 = vunpack.c.l.b16 %v3747
    %v4046 = vunpack.c.h.b16 %v3747
    %v4047 = vunpack.c.l.b16 %v3748
    %v4048 = vunpack.c.h.b16 %v3748
    %v4049 = vunpack.c.l.b16 %v3749
    %v4050 = vunpack.c.h.b16 %v3749
    %v4051 = vunpack.c.l.b16 %v3750
    %v4052 = vunpack.c.h.b16 %v3750
    %v4053 = vunpack.c.l.b16 %v3751
    %v4054 = vunpack.c.h.b16 %v3751
    %v4055 = vunpack.c.l.b16 %v3752
    %v4056 = vunpack.c.h.b16 %v3752
    %v4057 = vunpack.c.l.b16 %v3753
    %v4058 = vunpack.c.h.b16 %v3753
    %v4059 = vunpack.c.l.b16 %v3754
    %v4060 = vunpack.c.h.b16 %v3754
    %v4061 = vunpack.c.l.b16 %v3755
    %v4062 = vunpack.c.h.b16 %v3755
    %v4063 = vunpack.c.l.b16 %v3756
    %v4064 = vunpack.c.h.b16 %v3756
    %v4065 = vunpack.c.l.b16 %v3757
    %v4066 = vunpack.c.h.b16 %v3757
    %v4067 = vunpack.c.l.b16 %v3758
    %v4068 = vunpack.c.h.b16 %v3758
    %v4069 = vunpack.c.l.b16 %v3759
    %v4070 = vunpack.c.h.b16 %v3759
    %v4071 = vunpack.c.l.b16 %v3760
    %v4072 = vunpack.c.h.b16 %v3760
    %v4073 = vunpack.c.l.b16 %v3761
    %v4074 = vunpack.c.h.b16 %v3761
    %v4075 = vunpack.c.l.b16 %v3762
    %v4076 = vunpack.c.h.b16 %v3762
    %v4077 = vunpack.c.l.b16 %v3763
    %v4078 = vunpack.c.h.b16 %v3763
    %v4079 = vunpack.c.l.b16 %v3764
    %v4080 = vunpack.c.h.b16 %v3764
    %v4081 = vunpack.c.l.b16 %v3765
    %v4082 = vunpack.c.h.b16 %v3765
    %v4083 = vunpack.c.l.b16 %v3766
    %v4084 = vunpack.c.h.b16 %v3766
    %v4085 = vunpack.c.l.b16 %v3767
    %v4086 = vunpack.c.h.b16 %v3767
    %v4087 = vunpack.c.l.b16 %v3768
    %v4088 = vunpack.c.h.b16 %v3768
    %v4089 = vunpack.c.l.b16 %v3769
    %v4090 = vunpack.c.h.b16 %v3769
    %v4091 = vunpack.c.l.b16 %v3770
    %v4092 = vunpack.c.h.b16 %v3770
    %v4093 = vunpack.c.l.b16 %v3771
    %v4094 = vunpack.c.h.b16 %v3771
    %v4095 = vunpack.c.l.b16 %v3772
    %v4096 = vunpack.c.h.b16 %v3772
    %v4097 = vunpack.c.l.b16 %v3773
    %v4098 = vunpack.c.h.b16 %v3773
    %v4099 = vunpack.c.l.b16 %v3774
    %v4100 = vunpack.c.h.b16 %v3774
    %v4101 = vunpack.c.l.b16 %v3775
    %v4102 = vunpack.c.h.b16 %v3775
    %v4103 = vunpack.c.l.b16 %v3776
    %v4104 = vunpack.c.h.b16 %v3776
    %v4105 = vunpack.c.l.b16 %v3777
    %v4106 = vunpack.c.h.b16 %v3777
    %v4107 = vunpack.c.l.b16 %v3778
    %v4108 = vunpack.c.h.b16 %v3778
    %v4109 = vunpack.c.l.b16 %v3779
    %v4110 = vunpack.c.h.b16 %v3779
    %v4111 = vunpack.c.l.b16 %v3780
    %v4112 = vunpack.c.h.b16 %v3780
    %v4113 = vunpack.c.l.b16 %v3781
    %v4114 = vunpack.c.h.b16 %v3781
    %v4115 = vunpack.c.l.b16 %v3782
    %v4116 = vunpack.c.h.b16 %v3782
    %v4117 = vunpack.c.l.b16 %v3783
    %v4118 = vunpack.c.h.b16 %v3783
    %v4119 = vunpack.c.l.b16 %v3784
    %v4120 = vunpack.c.h.b16 %v3784
    %v4121 = vunpack.c.l.b16 %v3785
    %v4122 = vunpack.c.h.b16 %v3785
    %v4123 = vunpack.c.l.b16 %v3786
    %v4124 = vunpack.c.h.b16 %v3786
    %v4125 = vunpack.c.l.b16 %v3787
    %v4126 = vunpack.c.h.b16 %v3787
    %v4127 = vunpack.c.l.b16 %v3788
    %v4128 = vunpack.c.h.b16 %v3788
    %v4129 = vunpack.c.l.b16 %v3789
    %v4130 = vunpack.c.h.b16 %v3789
    %v4131 = vunpack.c.l.b16 %v3790
    %v4132 = vunpack.c.h.b16 %v3790
    %v4133 = vunpack.c.l.b16 %v3791
    %v4134 = vunpack.c.h.b16 %v3791
    %v4135 = vunpack.c.l.b16 %v3792
    %v4136 = vunpack.c.h.b16 %v3792
    %v4137 = vunpack.c.l.b16 %v3793
    %v4138 = vunpack.c.h.b16 %v3793
    %v4139 = vunpack.c.l.b16 %v3794
    %v4140 = vunpack.c.h.b16 %v3794
    %v4141 = vunpack.c.l.b16 %v3795
    %v4142 = vunpack.c.h.b16 %v3795
    %v4143 = vunpack.c.l.b16 %v3796
    %v4144 = vunpack.c.h.b16 %v3796
    %v4145 = vunpack.c.l.b16 %v3797
    %v4146 = vunpack.c.h.b16 %v3797
    %v4147 = vunpack.c.l.b16 %v3798
    %v4148 = vunpack.c.h.b16 %v3798
    %v4149 = vunpack.c.l.b16 %v3799
    %v4150 = vunpack.c.h.b16 %v3799
    %v4151 = vunpack.c.l.b16 %v3800
    %v4152 = vunpack.c.h.b16 %v3800
    %v4153 = vunpack.c.l.b16 %v3801
    %v4154 = vunpack.c.h.b16 %v3801
    %v4155 = vunpack.c.l.b16 %v3802
    %v4156 = vunpack.c.h.b16 %v3802
    %v4157 = vunpack.c.l.b16 %v3803
    %v4158 = vunpack.c.h.b16 %v3803
    %v4159 = vunpack.c.l.b16 %v3804
    %v4160 = vunpack.c.h.b16 %v3804
    %v4161 = vunpack.c.l.b16 %v3805
    %v4162 = vunpack.c.h.b16 %v3805
    %v4163 = vunpack.c.l.b16 %v3806
    %v4164 = vunpack.c.h.b16 %v3806
    %v4165 = vunpack.c.l.b16 %v3807
    %v4166 = vunpack.c.h.b16 %v3807
    %v4167 = vunpack.c.l.b16 %v3808
    %v4168 = vunpack.c.h.b16 %v3808
    %v4169 = vunpack.c.l.b16 %v3809
    %v4170 = vunpack.c.h.b16 %v3809
    %v4171 = vunpack.c.l.b16 %v3810
    %v4172 = vunpack.c.h.b16 %v3810
    %v4173 = vunpack.c.l.b16 %v3811
    %v4174 = vunpack.c.h.b16 %v3811
    %v4175 = vunpack.c.l.b16 %v3812
    %v4176 = vunpack.c.h.b16 %v3812
    %v4177 = vunpack.c.l.b16 %v3813
    %v4178 = vunpack.c.h.b16 %v3813
    %v4179 = vunpack.c.l.b16 %v3814
    %v4180 = vunpack.c.h.b16 %v3814
    %v4181 = vunpack.c.l.b16 %v3815
    %v4182 = vunpack.c.h.b16 %v3815
    %v4183 = vunpack.c.l.b16 %v3816
    %v4184 = vunpack.c.h.b16 %v3816
    %v4185 = vunpack.c.l.b16 %v3817
    %v4186 = vunpack.c.h.b16 %v3817
    %v4187 = vunpack.c.l.b16 %v3818
    %v4188 = vunpack.c.h.b16 %v3818
    %v4189 = vunpack.c.l.b16 %v3819
    %v4190 = vunpack.c.h.b16 %v3819
    %v4191 = vunpack.c.l.b16 %v3820
    %v4192 = vunpack.c.h.b16 %v3820
    %v4193 = vunpack.c.l.b16 %v3821
    %v4194 = vunpack.c.h.b16 %v3821
    %v4195 = vunpack.c.l.b16 %v3822
    %v4196 = vunpack.c.h.b16 %v3822
    %v4197 = vunpack.c.l.b16 %v3823
    %v4198 = vunpack.c.h.b16 %v3823
    %v4199 = vunpack.c.l.b16 %v3824
    %v4200 = vunpack.c.h.b16 %v3824
    %v4201 = vunpack.c.l.b16 %v3825
    %v4202 = vunpack.c.h.b16 %v3825
    %v4203 = vunpack.c.l.b16 %v3826
    %v4204 = vunpack.c.h.b16 %v3826
    %v4205 = vunpack.c.l.b16 %v3827
    %v4206 = vunpack.c.h.b16 %v3827
    %v4207 = vunpack.c.l.b16 %v3828
    %v4208 = vunpack.c.h.b16 %v3828
    %v4209 = vunpack.c.l.b16 %v3829
    %v4210 = vunpack.c.h.b16 %v3829
    %v4211 = vunpack.c.l.b16 %v3830
    %v4212 = vunpack.c.h.b16 %v3830
    %v4213 = vunpack.c.l.b16 %v3831
    %v4214 = vunpack.c.h.b16 %v3831
    %v4215 = vunpack.c.l.b16 %v3832
    %v4216 = vunpack.c.h.b16 %v3832
    %v4217 = vunpack.c.l.b16 %v3833
    %v4218 = vunpack.c.h.b16 %v3833
    %v4219 = vunpack.c.l.b16 %v3834
    %v4220 = vunpack.c.h.b16 %v3834
    %v4221 = vunpack.c.l.b16 %v3835
    %v4222 = vunpack.c.h.b16 %v3835
    %v4223 = vunpack.c.l.b16 %v3836
    %v4224 = vunpack.c.h.b16 %v3836
    %v4225 = vunpack.c.l.b16 %v3837
    %v4226 = vunpack.c.h.b16 %v3837
    %v4227 = vunpack.c.l.b16 %v3838
    %v4228 = vunpack.c.h.b16 %v3838
    %v4229 = vunpack.c.l.b16 %v3839
    %v4230 = vunpack.c.h.b16 %v3839
    %v4231 = vunpack.c.l.b16 %v3840
    %v4232 = vunpack.c.h.b16 %v3840
    %v4233 = vunpack.c.l.b16 %v3841
    %v4234 = vunpack.c.h.b16 %v3841
    %v4235 = vunpack.c.l.b16 %v3842
    %v4236 = vunpack.c.h.b16 %v3842
    %v4237 = vunpack.c.l.b16 %v3843
    %v4238 = vunpack.c.h.b16 %v3843
    %v4239 = vunpack.c.l.b16 %v3844
    %v4240 = vunpack.c.h.b16 %v3844
    %v4241 = vunpack.c.l.b16 %v3845
    %v4242 = vunpack.c.h.b16 %v3845
    %v4243 = vunpack.c.l.b16 %v3846
    %v4244 = vunpack.c.h.b16 %v3846
    %v4245 = vunpack.c.l.b16 %v3847
    %v4246 = vunpack.c.h.b16 %v3847
    %v4247 = vunpack.c.l.b16 %v3848
    %v4248 = vunpack.c.h.b16 %v3848
    %v4249 = vunpack.c.l.b16 %v3849
    %v4250 = vunpack.c.h.b16 %v3849
    %v4251 = vunpack.c.l.b16 %v3850
    %v4252 = vunpack.c.h.b16 %v3850
    %v4253 = vunpack.c.l.b16 %v3851
    %v4254 = vunpack.c.h.b16 %v3851
    %v4255 = vunpack.c.l.b16 %v3852
    %v4256 = vunpack.c.h.b16 %v3852
    %v4257 = vunpack.c.l.b16 %v3853
    %v4258 = vunpack.c.h.b16 %v3853
    %v4259 = vunpack.c.l.b16 %v3854
    %v4260 = vunpack.c.h.b16 %v3854
    %v4261 = vpack.c.b16 %v4009, %v4005
    %v4262 = vpack.c.b16 %v4010, %v4006
    %v4263 = vpack.c.b16 %v4011, %v4007
    %v4264 = vpack.c.b16 %v4012, %v4008
    %v4265 = vpack.c.b16 %v4017, %v4013
    %v4266 = vpack.c.b16 %v4018, %v4014
    %v4267 = vpack.c.b16 %v4019, %v4015
    %v4268 = vpack.c.b16 %v4020, %v4016
    %v4269 = vpack.c.b16 %v4025, %v4021
    %v4270 = vpack.c.b16 %v4026, %v4022
    %v4271 = vpack.c.b16 %v4027, %v4023
    %v4272 = vpack.c.b16 %v4028, %v4024
    %v4273 = vpack.c.b16 %v4033, %v4029
    %v4274 = vpack.c.b16 %v4034, %v4030
    %v4275 = vpack.c.b16 %v4035, %v4031
    %v4276 = vpack.c.b16 %v4036, %v4032
    %v4277 = vpack.c.b16 %v4041, %v4037
    %v4278 = vpack.c.b16 %v4042, %v4038
    %v4279 = vpack.c.b16 %v4043, %v4039
    %v4280 = vpack.c.b16 %v4044, %v4040
    %v4281 = vpack.c.b16 %v4049, %v4045
    %v4282 = vpack.c.b16 %v4050, %v4046
    %v4283 = vpack.c.b16 %v4051, %v4047
    %v4284 = vpack.c.b16 %v4052, %v4048
    %v4285 = vpack.c.b16 %v4057, %v4053
    %v4286 = vpack.c.b16 %v4058, %v4054
    %v4287 = vpack.c.b16 %v4059, %v4055
    %v4288 = vpack.c.b16 %v4060, %v4056
    %v4289 = vpack.c.b16 %v4065, %v4061
    %v4290 = vpack.c.b16 %v4066, %v4062
    %v4291 = vpack.c.b16 %v4067, %v4063
    %v4292 = vpack.c.b16 %v4068, %v4064
    %v4293 = vpack.c.b16 %v4073, %v4069
    %v4294 = vpack.c.b16 %v4074, %v4070
    %v4295 = vpack.c.b16 %v4075, %v4071
    %v4296 = vpack.c.b16 %v4076, %v4072
    %v4297 = vpack.c.b16 %v4081, %v4077
    %v4298 = vpack.c.b16 %v4082, %v4078
    %v4299 = vpack.c.b16 %v4083, %v4079
    %v4300 = vpack.c.b16 %v4084, %v4080
    %v4301 = vpack.c.b16 %v4089, %v4085
    %v4302 = vpack.c.b16 %v4090, %v4086
    %v4303 = vpack.c.b16 %v4091, %v4087
    %v4304 = vpack.c.b16 %v4092, %v4088
    %v4305 = vpack.c.b16 %v4097, %v4093
    %v4306 = vpack.c.b16 %v4098, %v4094
    %v4307 = vpack.c.b16 %v4099, %v4095
    %v4308 = vpack.c.b16 %v4100, %v4096
    %v4309 = vpack.c.b16 %v4105, %v4101
    %v4310 = vpack.c.b16 %v4106, %v4102
    %v4311 = vpack.c.b16 %v4107, %v4103
    %v4312 = vpack.c.b16 %v4108, %v4104
    %v4313 = vpack.c.b16 %v4113, %v4109
    %v4314 = vpack.c.b16 %v4114, %v4110
    %v4315 = vpack.c.b16 %v4115, %v4111
    %v4316 = vpack.c.b16 %v4116, %v4112
    %v4317 = vpack.c.b16 %v4121, %v4117
    %v4318 = vpack.c.b16 %v4122, %v4118
    %v4319 = vpack.c.b16 %v4123, %v4119
    %v4320 = vpack.c.b16 %v4124, %v4120
    %v4321 = vpack.c.b16 %v4129, %v4125
    %v4322 = vpack.c.b16 %v4130, %v4126
    %v4323 = vpack.c.b16 %v4131, %v4127
    %v4324 = vpack.c.b16 %v4132, %v4128
    %v4325 = vpack.c.b16 %v4137, %v4133
    %v4326 = vpack.c.b16 %v4138, %v4134
    %v4327 = vpack.c.b16 %v4139, %v4135
    %v4328 = vpack.c.b16 %v4140, %v4136
    %v4329 = vpack.c.b16 %v4145, %v4141
    %v4330 = vpack.c.b16 %v4146, %v4142
    %v4331 = vpack.c.b16 %v4147, %v4143
    %v4332 = vpack.c.b16 %v4148, %v4144
    %v4333 = vpack.c.b16 %v4153, %v4149
    %v4334 = vpack.c.b16 %v4154, %v4150
    %v4335 = vpack.c.b16 %v4155, %v4151
    %v4336 = vpack.c.b16 %v4156, %v4152
    %v4337 = vpack.c.b16 %v4161, %v4157
    %v4338 = vpack.c.b16 %v4162, %v4158
    %v4339 = vpack.c.b16 %v4163, %v4159
    %v4340 = vpack.c.b16 %v4164, %v4160
    %v4341 = vpack.c.b16 %v4169, %v4165
    %v4342 = vpack.c.b16 %v4170, %v4166
    %v4343 = vpack.c.b16 %v4171, %v4167
    %v4344 = vpack.c.b16 %v4172, %v4168
    %v4345 = vpack.c.b16 %v4177, %v4173
    %v4346 = vpack.c.b16 %v4178, %v4174
    %v4347 = vpack.c.b16 %v4179, %v4175
    %v4348 = vpack.c.b16 %v4180, %v4176
    %v4349 = vpack.c.b16 %v4185, %v4181
    %v4350 = vpack.c.b16 %v4186, %v4182
    %v4351 = vpack.c.b16 %v4187, %v4183
    %v4352 = vpack.c.b16 %v4188, %v4184
    %v4353 = vpack.c.b16 %v4193, %v4189
    %v4354 = vpack.c.b16 %v4194, %v4190
    %v4355 = vpack.c.b16 %v4195, %v4191
    %v4356 = vpack.c.b16 %v4196, %v4192
    %v4357 = vpack.c.b16 %v4201, %v4197
    %v4358 = vpack.c.b16 %v4202, %v4198
    %v4359 = vpack.c.b16 %v4203, %v4199
    %v4360 = vpack.c.b16 %v4204, %v4200
    %v4361 = vpack.c.b16 %v4209, %v4205
    %v4362 = vpack.c.b16 %v4210, %v4206
    %v4363 = vpack.c.b16 %v4211, %v4207
    %v4364 = vpack.c.b16 %v4212, %v4208
    %v4365 = vpack.c.b16 %v4217, %v4213
    %v4366 = vpack.c.b16 %v4218, %v4214
    %v4367 = vpack.c.b16 %v4219, %v4215
    %v4368 = vpack.c.b16 %v4220, %v4216
    %v4369 = vpack.c.b16 %v4225, %v4221
    %v4370 = vpack.c.b16 %v4226, %v4222
    %v4371 = vpack.c.b16 %v4227, %v4223
    %v4372 = vpack.c.b16 %v4228, %v4224
    %v4373 = vpack.c.b16 %v4233, %v4229
    %v4374 = vpack.c.b16 %v4234, %v4230
    %v4375 = vpack.c.b16 %v4235, %v4231
    %v4376 = vpack.c.b16 %v4236, %v4232
    %v4377 = vpack.c.b16 %v4241, %v4237
    %v4378 = vpack.c.b16 %v4242, %v4238
    %v4379 = vpack.c.b16 %v4243, %v4239
    %v4380 = vpack.c.b16 %v4244, %v4240
    %v4381 = vpack.c.b16 %v4249, %v4245
    %v4382 = vpack.c.b16 %v4250, %v4246
    %v4383 = vpack.c.b16 %v4251, %v4247
    %v4384 = vpack.c.b16 %v4252, %v4248
    %v4385 = vpack.c.b16 %v4257, %v4253
    %v4386 = vpack.c.b16 %v4258, %v4254
    %v4387 = vpack.c.b16 %v4259, %v4255
    %v4388 = vpack.c.b16 %v4260, %v4256
    %4517 = vmatprep.subr.bf16.mxu0 %v4290
    %4518 = vmatpush1.bf16.msra.mxu0 %v4289
    %4519 = vmatprep.subr.bf16.mxu0 %v4286
    %4520 = vmatpush1.bf16.msra.mxu0 %v4285
    %4521 = vmatprep.subr.bf16.mxu0 %v4282
    %4522 = vmatpush1.bf16.msra.mxu0 %v4281
    %4523 = vmatprep.subr.bf16.mxu0 %v4278
    %4524 = vmatpush1.bf16.msra.mxu0 %v4277
    %4525 = vmatprep.subr.bf16.mxu0 %v4274
    %4526 = vmatpush1.bf16.msra.mxu0 %v4273
    %4527 = vmatprep.subr.bf16.mxu0 %v4270
    %4528 = vmatpush1.bf16.msra.mxu0 %v4269
    %4529 = vmatprep.subr.bf16.mxu0 %v4266
    %4530 = vmatpush1.bf16.msra.mxu0 %v4265
    %4531 = vmatprep.subr.bf16.mxu0 %v4262
    %4532 = vmatpush1.bf16.msra.mxu0 %v4261
    %4533 = vmatprep.subr.bf16.mxu0 %v4322
    %4534 = vmatpush2.bf16.msra.mxu0 %v4321
    %4535 = vmatprep.subr.bf16.mxu0 %v4318
    %4536 = vmatpush2.bf16.msra.mxu0 %v4317
    %4537 = vmatprep.subr.bf16.mxu0 %v4314
    %4538 = vmatpush2.bf16.msra.mxu0 %v4313
    %4539 = vmatprep.subr.bf16.mxu0 %v4310
    %4540 = vmatpush2.bf16.msra.mxu0 %v4309
    %4541 = vmatprep.subr.bf16.mxu0 %v4306
    %4542 = vmatpush2.bf16.msra.mxu0 %v4305
    %4543 = vmatprep.subr.bf16.mxu0 %v4302
    %4544 = vmatpush2.bf16.msra.mxu0 %v4301
    %4545 = vmatprep.subr.bf16.mxu0 %v4298
    %4546 = vmatpush2.bf16.msra.mxu0 %v4297
    %4547 = vmatprep.subr.bf16.mxu0 %v4294
    %4548 = vmatpush2.bf16.msra.mxu0 %v4293
    %4549 = vmatprep.mubr.bf16.mxu0 %v3664
    %4550 = vmatmul.mubr.bf16.gmra.mxu0 %v3663
    %v4551 = vpop.f32.mrf.mxu0
    %v4552 = vadd.f32 %v3860, %v4551
    %v4553 = vpop.f32.mrf.mxu0
    %v4554 = vadd.f32 %v3864, %v4553
    %v4555 = vpop.f32.mrf.mxu0
    %v4556 = vadd.f32 %v3860, %v4555
    %v4557 = vpop.f32.mrf.mxu0
    %v4558 = vadd.f32 %v3864, %v4557
    %4559 = vmatprep.mubr.bf16.mxu0 %v3668
    %4560 = vmatmul.mubr.bf16.gmra.mxu0 %v3667
    %v4561 = vpop.f32.mrf.mxu0
    %v4562 = vadd.f32 %v3860, %v4561
    %v4563 = vpop.f32.mrf.mxu0
    %v4564 = vadd.f32 %v3864, %v4563
    %v4565 = vpop.f32.mrf.mxu0
    %v4566 = vadd.f32 %v3860, %v4565
    %v4567 = vpop.f32.mrf.mxu0
    %v4568 = vadd.f32 %v3864, %v4567
    %4569 = vmatprep.mubr.bf16.mxu0 %v3672
    %4570 = vmatmul.mubr.bf16.gmra.mxu0 %v3671
    %v4571 = vpop.f32.mrf.mxu0
    %v4572 = vadd.f32 %v3860, %v4571
    %v4573 = vpop.f32.mrf.mxu0
    %v4574 = vadd.f32 %v3864, %v4573
    %v4575 = vpop.f32.mrf.mxu0
    %v4576 = vadd.f32 %v3860, %v4575
    %v4577 = vpop.f32.mrf.mxu0
    %v4578 = vadd.f32 %v3864, %v4577
    %4579 = vmatprep.mubr.bf16.mxu0 %v3676
    %4580 = vmatmul.mubr.bf16.gmra.mxu0 %v3675
    %v4581 = vpop.f32.mrf.mxu0
    %v4582 = vadd.f32 %v3860, %v4581
    %v4583 = vpop.f32.mrf.mxu0
    %v4584 = vadd.f32 %v3864, %v4583
    %v4585 = vpop.f32.mrf.mxu0
    %v4586 = vadd.f32 %v3860, %v4585
    %v4587 = vpop.f32.mrf.mxu0
    %v4588 = vadd.f32 %v3864, %v4587
    %4589 = vmatprep.mubr.bf16.mxu0 %v3680
    %4590 = vmatmul.mubr.bf16.gmra.mxu0 %v3679
    %v4591 = vpop.f32.mrf.mxu0
    %v4592 = vadd.f32 %v3860, %v4591
    %v4593 = vpop.f32.mrf.mxu0
    %v4594 = vadd.f32 %v3864, %v4593
    %v4595 = vpop.f32.mrf.mxu0
    %v4596 = vadd.f32 %v3860, %v4595
    %v4597 = vpop.f32.mrf.mxu0
    %v4598 = vadd.f32 %v3864, %v4597
    %4599 = vmatprep.mubr.bf16.mxu0 %v3684
    %4600 = vmatmul.mubr.bf16.gmra.mxu0 %v3683
    %v4601 = vpop.f32.mrf.mxu0
    %v4602 = vadd.f32 %v3860, %v4601
    %v4603 = vpop.f32.mrf.mxu0
    %v4604 = vadd.f32 %v3864, %v4603
    %v4605 = vpop.f32.mrf.mxu0
    %v4606 = vadd.f32 %v3860, %v4605
    %v4607 = vpop.f32.mrf.mxu0
    %v4608 = vadd.f32 %v3864, %v4607
    %4609 = vmatprep.mubr.bf16.mxu0 %v3688
    %4610 = vmatmul.mubr.bf16.gmra.mxu0 %v3687
    %v4611 = vpop.f32.mrf.mxu0
    %v4612 = vadd.f32 %v3860, %v4611
    %v4613 = vpop.f32.mrf.mxu0
    %v4614 = vadd.f32 %v3864, %v4613
    %v4615 = vpop.f32.mrf.mxu0
    %v4616 = vadd.f32 %v3860, %v4615
    %v4617 = vpop.f32.mrf.mxu0
    %v4618 = vadd.f32 %v3864, %v4617
    %4619 = vmatprep.mubr.bf16.mxu0 %v3692
    %4620 = vmatmul.mubr.bf16.gmra.mxu0 %v3691
    %v4621 = vpop.f32.mrf.mxu0
    %v4622 = vadd.f32 %v3860, %v4621
    %v4623 = vpop.f32.mrf.mxu0
    %v4624 = vadd.f32 %v3864, %v4623
    %v4625 = vpop.f32.mrf.mxu0
    %v4626 = vadd.f32 %v3860, %v4625
    %v4627 = vpop.f32.mrf.mxu0
    %v4628 = vadd.f32 %v3864, %v4627
    %4629 = vmatprep.mubr.bf16.mxu0 %v3696
    %4630 = vmatmul.mubr.bf16.gmra.mxu0 %v3695
    %v4631 = vpop.f32.mrf.mxu0
    %v4632 = vadd.f32 %v3860, %v4631
    %v4633 = vpop.f32.mrf.mxu0
    %v4634 = vadd.f32 %v3864, %v4633
    %v4635 = vpop.f32.mrf.mxu0
    %v4636 = vadd.f32 %v3860, %v4635
    %v4637 = vpop.f32.mrf.mxu0
    %v4638 = vadd.f32 %v3864, %v4637
    %4639 = vmatprep.mubr.bf16.mxu0 %v3700
    %4640 = vmatmul.mubr.bf16.gmra.mxu0 %v3699
    %v4641 = vpop.f32.mrf.mxu0
    %v4642 = vadd.f32 %v3860, %v4641
    %v4643 = vpop.f32.mrf.mxu0
    %v4644 = vadd.f32 %v3864, %v4643
    %v4645 = vpop.f32.mrf.mxu0
    %v4646 = vadd.f32 %v3860, %v4645
    %v4647 = vpop.f32.mrf.mxu0
    %v4648 = vadd.f32 %v3864, %v4647
    %4649 = vmatprep.mubr.bf16.mxu0 %v3704
    %4650 = vmatmul.mubr.bf16.gmra.mxu0 %v3703
    %v4651 = vpop.f32.mrf.mxu0
    %v4652 = vadd.f32 %v3860, %v4651
    %v4653 = vpop.f32.mrf.mxu0
    %v4654 = vadd.f32 %v3864, %v4653
    %v4655 = vpop.f32.mrf.mxu0
    %v4656 = vadd.f32 %v3860, %v4655
    %v4657 = vpop.f32.mrf.mxu0
    %v4658 = vadd.f32 %v3864, %v4657
    %4659 = vmatprep.mubr.bf16.mxu0 %v3708
    %4660 = vmatmul.mubr.bf16.gmra.mxu0 %v3707
    %v4661 = vpop.f32.mrf.mxu0
    %v4662 = vadd.f32 %v3860, %v4661
    %v4663 = vpop.f32.mrf.mxu0
    %v4664 = vadd.f32 %v3864, %v4663
    %v4665 = vpop.f32.mrf.mxu0
    %v4666 = vadd.f32 %v3860, %v4665
    %v4667 = vpop.f32.mrf.mxu0
    %v4668 = vadd.f32 %v3864, %v4667
    %4669 = vmatprep.mubr.bf16.mxu0 %v3712
    %4670 = vmatmul.mubr.bf16.gmra.mxu0 %v3711
    %v4671 = vpop.f32.mrf.mxu0
    %v4672 = vadd.f32 %v3860, %v4671
    %v4673 = vpop.f32.mrf.mxu0
    %v4674 = vadd.f32 %v3864, %v4673
    %v4675 = vpop.f32.mrf.mxu0
    %v4676 = vadd.f32 %v3860, %v4675
    %v4677 = vpop.f32.mrf.mxu0
    %v4678 = vadd.f32 %v3864, %v4677
    %4679 = vmatprep.mubr.bf16.mxu0 %v3716
    %4680 = vmatmul.mubr.bf16.gmra.mxu0 %v3715
    %v4681 = vpop.f32.mrf.mxu0
    %v4682 = vadd.f32 %v3860, %v4681
    %v4683 = vpop.f32.mrf.mxu0
    %v4684 = vadd.f32 %v3864, %v4683
    %v4685 = vpop.f32.mrf.mxu0
    %v4686 = vadd.f32 %v3860, %v4685
    %v4687 = vpop.f32.mrf.mxu0
    %v4688 = vadd.f32 %v3864, %v4687
    %4689 = vmatprep.mubr.bf16.mxu0 %v3720
    %4690 = vmatmul.mubr.bf16.gmra.mxu0 %v3719
    %v4691 = vpop.f32.mrf.mxu0
    %v4692 = vadd.f32 %v3860, %v4691
    %v4693 = vpop.f32.mrf.mxu0
    %v4694 = vadd.f32 %v3864, %v4693
    %v4695 = vpop.f32.mrf.mxu0
    %v4696 = vadd.f32 %v3860, %v4695
    %v4697 = vpop.f32.mrf.mxu0
    %v4698 = vadd.f32 %v3864, %v4697
    %4699 = vmatprep.mubr.bf16.mxu0 %v3724
    %4700 = vmatmul.mubr.bf16.gmra.mxu0 %v3723
    %v4701 = vpop.f32.mrf.mxu0
    %v4702 = vadd.f32 %v3860, %v4701
    %v4703 = vpop.f32.mrf.mxu0
    %v4704 = vadd.f32 %v3864, %v4703
    %v4705 = vpop.f32.mrf.mxu0
    %v4706 = vadd.f32 %v3860, %v4705
    %v4707 = vpop.f32.mrf.mxu0
    %v4708 = vadd.f32 %v3864, %v4707
    %4709 = vdwg.mxu0
    %4710 = vmatprep.subr.bf16.mxu0 %v4354
    %4711 = vmatpush1.bf16.msra.mxu0 %v4353
    %4712 = vmatprep.subr.bf16.mxu0 %v4350
    %4713 = vmatpush1.bf16.msra.mxu0 %v4349
    %4714 = vmatprep.subr.bf16.mxu0 %v4346
    %4715 = vmatpush1.bf16.msra.mxu0 %v4345
    %4716 = vmatprep.subr.bf16.mxu0 %v4342
    %4717 = vmatpush1.bf16.msra.mxu0 %v4341
    %4718 = vmatprep.subr.bf16.mxu0 %v4338
    %4719 = vmatpush1.bf16.msra.mxu0 %v4337
    %4720 = vmatprep.subr.bf16.mxu0 %v4334
    %4721 = vmatpush1.bf16.msra.mxu0 %v4333
    %4722 = vmatprep.subr.bf16.mxu0 %v4330
    %4723 = vmatpush1.bf16.msra.mxu0 %v4329
    %4724 = vmatprep.subr.bf16.mxu0 %v4326
    %4725 = vmatpush1.bf16.msra.mxu0 %v4325
    %4726 = vmatprep.subr.bf16.mxu0 %v4386
    %4727 = vmatpush2.bf16.msra.mxu0 %v4385
    %4728 = vmatprep.subr.bf16.mxu0 %v4382
    %4729 = vmatpush2.bf16.msra.mxu0 %v4381
    %4730 = vmatprep.subr.bf16.mxu0 %v4378
    %4731 = vmatpush2.bf16.msra.mxu0 %v4377
    %4732 = vmatprep.subr.bf16.mxu0 %v4374
    %4733 = vmatpush2.bf16.msra.mxu0 %v4373
    %4734 = vmatprep.subr.bf16.mxu0 %v4370
    %4735 = vmatpush2.bf16.msra.mxu0 %v4369
    %4736 = vmatprep.subr.bf16.mxu0 %v4366
    %4737 = vmatpush2.bf16.msra.mxu0 %v4365
    %4738 = vmatprep.subr.bf16.mxu0 %v4362
    %4739 = vmatpush2.bf16.msra.mxu0 %v4361
    %4740 = vmatprep.subr.bf16.mxu0 %v4358
    %4741 = vmatpush2.bf16.msra.mxu0 %v4357
    %4742 = vmatprep.mubr.bf16.mxu0 %v3666
    %4743 = vmatmul.mubr.bf16.gmra.mxu0 %v3665
    %v4744 = vpop.f32.mrf.mxu0
    %v4745 = vadd.f32 %v4552, %v4744
    %v4746 = vpop.f32.mrf.mxu0
    %v4747 = vadd.f32 %v4554, %v4746
    %v4748 = vpop.f32.mrf.mxu0
    %v4749 = vadd.f32 %v4556, %v4748
    %v4750 = vpop.f32.mrf.mxu0
    %v4751 = vadd.f32 %v4558, %v4750
    %4752 = vmatprep.mubr.bf16.mxu0 %v3670
    %4753 = vmatmul.mubr.bf16.gmra.mxu0 %v3669
    %v4754 = vpop.f32.mrf.mxu0
    %v4755 = vadd.f32 %v4562, %v4754
    %v4756 = vpop.f32.mrf.mxu0
    %v4757 = vadd.f32 %v4564, %v4756
    %v4758 = vpop.f32.mrf.mxu0
    %v4759 = vadd.f32 %v4566, %v4758
    %v4760 = vpop.f32.mrf.mxu0
    %v4761 = vadd.f32 %v4568, %v4760
    %4762 = vmatprep.mubr.bf16.mxu0 %v3674
    %4763 = vmatmul.mubr.bf16.gmra.mxu0 %v3673
    %v4764 = vpop.f32.mrf.mxu0
    %v4765 = vadd.f32 %v4572, %v4764
    %v4766 = vpop.f32.mrf.mxu0
    %v4767 = vadd.f32 %v4574, %v4766
    %v4768 = vpop.f32.mrf.mxu0
    %v4769 = vadd.f32 %v4576, %v4768
    %v4770 = vpop.f32.mrf.mxu0
    %v4771 = vadd.f32 %v4578, %v4770
    %4772 = vmatprep.mubr.bf16.mxu0 %v3678
    %4773 = vmatmul.mubr.bf16.gmra.mxu0 %v3677
    %v4774 = vpop.f32.mrf.mxu0
    %v4775 = vadd.f32 %v4582, %v4774
    %v4776 = vpop.f32.mrf.mxu0
    %v4777 = vadd.f32 %v4584, %v4776
    %v4778 = vpop.f32.mrf.mxu0
    %v4779 = vadd.f32 %v4586, %v4778
    %v4780 = vpop.f32.mrf.mxu0
    %v4781 = vadd.f32 %v4588, %v4780
    %4782 = vmatprep.mubr.bf16.mxu0 %v3682
    %4783 = vmatmul.mubr.bf16.gmra.mxu0 %v3681
    %v4784 = vpop.f32.mrf.mxu0
    %v4785 = vadd.f32 %v4592, %v4784
    %v4786 = vpop.f32.mrf.mxu0
    %v4787 = vadd.f32 %v4594, %v4786
    %v4788 = vpop.f32.mrf.mxu0
    %v4789 = vadd.f32 %v4596, %v4788
    %v4790 = vpop.f32.mrf.mxu0
    %v4791 = vadd.f32 %v4598, %v4790
    %4792 = vmatprep.mubr.bf16.mxu0 %v3686
    %4793 = vmatmul.mubr.bf16.gmra.mxu0 %v3685
    %v4794 = vpop.f32.mrf.mxu0
    %v4795 = vadd.f32 %v4602, %v4794
    %v4796 = vpop.f32.mrf.mxu0
    %v4797 = vadd.f32 %v4604, %v4796
    %v4798 = vpop.f32.mrf.mxu0
    %v4799 = vadd.f32 %v4606, %v4798
    %v4800 = vpop.f32.mrf.mxu0
    %v4801 = vadd.f32 %v4608, %v4800
    %4802 = vmatprep.mubr.bf16.mxu0 %v3690
    %4803 = vmatmul.mubr.bf16.gmra.mxu0 %v3689
    %v4804 = vpop.f32.mrf.mxu0
    %v4805 = vadd.f32 %v4612, %v4804
    %v4806 = vpop.f32.mrf.mxu0
    %v4807 = vadd.f32 %v4614, %v4806
    %v4808 = vpop.f32.mrf.mxu0
    %v4809 = vadd.f32 %v4616, %v4808
    %v4810 = vpop.f32.mrf.mxu0
    %v4811 = vadd.f32 %v4618, %v4810
    %4812 = vmatprep.mubr.bf16.mxu0 %v3694
    %4813 = vmatmul.mubr.bf16.gmra.mxu0 %v3693
    %v4814 = vpop.f32.mrf.mxu0
    %v4815 = vadd.f32 %v4622, %v4814
    %v4816 = vpop.f32.mrf.mxu0
    %v4817 = vadd.f32 %v4624, %v4816
    %v4818 = vpop.f32.mrf.mxu0
    %v4819 = vadd.f32 %v4626, %v4818
    %v4820 = vpop.f32.mrf.mxu0
    %v4821 = vadd.f32 %v4628, %v4820
    %4822 = vmatprep.mubr.bf16.mxu0 %v3698
    %4823 = vmatmul.mubr.bf16.gmra.mxu0 %v3697
    %v4824 = vpop.f32.mrf.mxu0
    %v4825 = vadd.f32 %v4632, %v4824
    %v4826 = vpop.f32.mrf.mxu0
    %v4827 = vadd.f32 %v4634, %v4826
    %v4828 = vpop.f32.mrf.mxu0
    %v4829 = vadd.f32 %v4636, %v4828
    %v4830 = vpop.f32.mrf.mxu0
    %v4831 = vadd.f32 %v4638, %v4830
    %4832 = vmatprep.mubr.bf16.mxu0 %v3702
    %4833 = vmatmul.mubr.bf16.gmra.mxu0 %v3701
    %v4834 = vpop.f32.mrf.mxu0
    %v4835 = vadd.f32 %v4642, %v4834
    %v4836 = vpop.f32.mrf.mxu0
    %v4837 = vadd.f32 %v4644, %v4836
    %v4838 = vpop.f32.mrf.mxu0
    %v4839 = vadd.f32 %v4646, %v4838
    %v4840 = vpop.f32.mrf.mxu0
    %v4841 = vadd.f32 %v4648, %v4840
    %4842 = vmatprep.mubr.bf16.mxu0 %v3706
    %4843 = vmatmul.mubr.bf16.gmra.mxu0 %v3705
    %v4844 = vpop.f32.mrf.mxu0
    %v4845 = vadd.f32 %v4652, %v4844
    %v4846 = vpop.f32.mrf.mxu0
    %v4847 = vadd.f32 %v4654, %v4846
    %v4848 = vpop.f32.mrf.mxu0
    %v4849 = vadd.f32 %v4656, %v4848
    %v4850 = vpop.f32.mrf.mxu0
    %v4851 = vadd.f32 %v4658, %v4850
    %4852 = vmatprep.mubr.bf16.mxu0 %v3710
    %4853 = vmatmul.mubr.bf16.gmra.mxu0 %v3709
    %v4854 = vpop.f32.mrf.mxu0
    %v4855 = vadd.f32 %v4662, %v4854
    %v4856 = vpop.f32.mrf.mxu0
    %v4857 = vadd.f32 %v4664, %v4856
    %v4858 = vpop.f32.mrf.mxu0
    %v4859 = vadd.f32 %v4666, %v4858
    %v4860 = vpop.f32.mrf.mxu0
    %v4861 = vadd.f32 %v4668, %v4860
    %4862 = vmatprep.mubr.bf16.mxu0 %v3714
    %4863 = vmatmul.mubr.bf16.gmra.mxu0 %v3713
    %v4864 = vpop.f32.mrf.mxu0
    %v4865 = vadd.f32 %v4672, %v4864
    %v4866 = vpop.f32.mrf.mxu0
    %v4867 = vadd.f32 %v4674, %v4866
    %v4868 = vpop.f32.mrf.mxu0
    %v4869 = vadd.f32 %v4676, %v4868
    %v4870 = vpop.f32.mrf.mxu0
    %v4871 = vadd.f32 %v4678, %v4870
    %4872 = vmatprep.mubr.bf16.mxu0 %v3718
    %4873 = vmatmul.mubr.bf16.gmra.mxu0 %v3717
    %v4874 = vpop.f32.mrf.mxu0
    %v4875 = vadd.f32 %v4682, %v4874
    %v4876 = vpop.f32.mrf.mxu0
    %v4877 = vadd.f32 %v4684, %v4876
    %v4878 = vpop.f32.mrf.mxu0
    %v4879 = vadd.f32 %v4686, %v4878
    %v4880 = vpop.f32.mrf.mxu0
    %v4881 = vadd.f32 %v4688, %v4880
    %4882 = vmatprep.mubr.bf16.mxu0 %v3722
    %4883 = vmatmul.mubr.bf16.gmra.mxu0 %v3721
    %v4884 = vpop.f32.mrf.mxu0
    %v4885 = vadd.f32 %v4692, %v4884
    %v4886 = vpop.f32.mrf.mxu0
    %v4887 = vadd.f32 %v4694, %v4886
    %v4888 = vpop.f32.mrf.mxu0
    %v4889 = vadd.f32 %v4696, %v4888
    %v4890 = vpop.f32.mrf.mxu0
    %v4891 = vadd.f32 %v4698, %v4890
    %4892 = vmatprep.mubr.bf16.mxu0 %v3726
    %4893 = vmatmul.mubr.bf16.gmra.mxu0 %v3725
    %v4894 = vpop.f32.mrf.mxu0
    %v4895 = vadd.f32 %v4702, %v4894
    %v4896 = vpop.f32.mrf.mxu0
    %v4897 = vadd.f32 %v4704, %v4896
    %v4898 = vpop.f32.mrf.mxu0
    %v4899 = vadd.f32 %v4706, %v4898
    %v4900 = vpop.f32.mrf.mxu0
    %v4901 = vadd.f32 %v4708, %v4900
    %4902 = vdwg.mxu0
    %4903 = vmatprep.subr.bf16.mxu0 %v4292
    %4904 = vmatpush1.bf16.msra.mxu0 %v4291
    %4905 = vmatprep.subr.bf16.mxu0 %v4288
    %4906 = vmatpush1.bf16.msra.mxu0 %v4287
    %4907 = vmatprep.subr.bf16.mxu0 %v4284
    %4908 = vmatpush1.bf16.msra.mxu0 %v4283
    %4909 = vmatprep.subr.bf16.mxu0 %v4280
    %4910 = vmatpush1.bf16.msra.mxu0 %v4279
    %4911 = vmatprep.subr.bf16.mxu0 %v4276
    %4912 = vmatpush1.bf16.msra.mxu0 %v4275
    %4913 = vmatprep.subr.bf16.mxu0 %v4272
    %4914 = vmatpush1.bf16.msra.mxu0 %v4271
    %4915 = vmatprep.subr.bf16.mxu0 %v4268
    %4916 = vmatpush1.bf16.msra.mxu0 %v4267
    %4917 = vmatprep.subr.bf16.mxu0 %v4264
    %4918 = vmatpush1.bf16.msra.mxu0 %v4263
    %4919 = vmatprep.subr.bf16.mxu0 %v4324
    %4920 = vmatpush2.bf16.msra.mxu0 %v4323
    %4921 = vmatprep.subr.bf16.mxu0 %v4320
    %4922 = vmatpush2.bf16.msra.mxu0 %v4319
    %4923 = vmatprep.subr.bf16.mxu0 %v4316
    %4924 = vmatpush2.bf16.msra.mxu0 %v4315
    %4925 = vmatprep.subr.bf16.mxu0 %v4312
    %4926 = vmatpush2.bf16.msra.mxu0 %v4311
    %4927 = vmatprep.subr.bf16.mxu0 %v4308
    %4928 = vmatpush2.bf16.msra.mxu0 %v4307
    %4929 = vmatprep.subr.bf16.mxu0 %v4304
    %4930 = vmatpush2.bf16.msra.mxu0 %v4303
    %4931 = vmatprep.subr.bf16.mxu0 %v4300
    %4932 = vmatpush2.bf16.msra.mxu0 %v4299
    %4933 = vmatprep.subr.bf16.mxu0 %v4296
    %4934 = vmatpush2.bf16.msra.mxu0 %v4295
    %4935 = vmatprep.mubr.bf16.mxu0 %v3664
    %4936 = vmatmul.mubr.bf16.gmra.mxu0 %v3663
    %v4937 = vpop.f32.mrf.mxu0
    %v4938 = vadd.f32 %v3868, %v4937
    %v4939 = vpop.f32.mrf.mxu0
    %v4940 = vadd.f32 %v3872, %v4939
    %v4941 = vpop.f32.mrf.mxu0
    %v4942 = vadd.f32 %v3868, %v4941
    %v4943 = vpop.f32.mrf.mxu0
    %v4944 = vadd.f32 %v3872, %v4943
    %4945 = vmatprep.mubr.bf16.mxu0 %v3668
    %4946 = vmatmul.mubr.bf16.gmra.mxu0 %v3667
    %v4947 = vpop.f32.mrf.mxu0
    %v4948 = vadd.f32 %v3868, %v4947
    %v4949 = vpop.f32.mrf.mxu0
    %v4950 = vadd.f32 %v3872, %v4949
    %v4951 = vpop.f32.mrf.mxu0
    %v4952 = vadd.f32 %v3868, %v4951
    %v4953 = vpop.f32.mrf.mxu0
    %v4954 = vadd.f32 %v3872, %v4953
    %4955 = vmatprep.mubr.bf16.mxu0 %v3672
    %4956 = vmatmul.mubr.bf16.gmra.mxu0 %v3671
    %v4957 = vpop.f32.mrf.mxu0
    %v4958 = vadd.f32 %v3868, %v4957
    %v4959 = vpop.f32.mrf.mxu0
    %v4960 = vadd.f32 %v3872, %v4959
    %v4961 = vpop.f32.mrf.mxu0
    %v4962 = vadd.f32 %v3868, %v4961
    %v4963 = vpop.f32.mrf.mxu0
    %v4964 = vadd.f32 %v3872, %v4963
    %4965 = vmatprep.mubr.bf16.mxu0 %v3676
    %4966 = vmatmul.mubr.bf16.gmra.mxu0 %v3675
    %v4967 = vpop.f32.mrf.mxu0
    %v4968 = vadd.f32 %v3868, %v4967
    %v4969 = vpop.f32.mrf.mxu0
    %v4970 = vadd.f32 %v3872, %v4969
    %v4971 = vpop.f32.mrf.mxu0
    %v4972 = vadd.f32 %v3868, %v4971
    %v4973 = vpop.f32.mrf.mxu0
    %v4974 = vadd.f32 %v3872, %v4973
    %4975 = vmatprep.mubr.bf16.mxu0 %v3680
    %4976 = vmatmul.mubr.bf16.gmra.mxu0 %v3679
    %v4977 = vpop.f32.mrf.mxu0
    %v4978 = vadd.f32 %v3868, %v4977
    %v4979 = vpop.f32.mrf.mxu0
    %v4980 = vadd.f32 %v3872, %v4979
    %v4981 = vpop.f32.mrf.mxu0
    %v4982 = vadd.f32 %v3868, %v4981
    %v4983 = vpop.f32.mrf.mxu0
    %v4984 = vadd.f32 %v3872, %v4983
    %4985 = vmatprep.mubr.bf16.mxu0 %v3684
    %4986 = vmatmul.mubr.bf16.gmra.mxu0 %v3683
    %v4987 = vpop.f32.mrf.mxu0
    %v4988 = vadd.f32 %v3868, %v4987
    %v4989 = vpop.f32.mrf.mxu0
    %v4990 = vadd.f32 %v3872, %v4989
    %v4991 = vpop.f32.mrf.mxu0
    %v4992 = vadd.f32 %v3868, %v4991
    %v4993 = vpop.f32.mrf.mxu0
    %v4994 = vadd.f32 %v3872, %v4993
    %4995 = vmatprep.mubr.bf16.mxu0 %v3688
    %4996 = vmatmul.mubr.bf16.gmra.mxu0 %v3687
    %v4997 = vpop.f32.mrf.mxu0
    %v4998 = vadd.f32 %v3868, %v4997
    %v4999 = vpop.f32.mrf.mxu0
    %v5000 = vadd.f32 %v3872, %v4999
    %v5001 = vpop.f32.mrf.mxu0
    %v5002 = vadd.f32 %v3868, %v5001
    %v5003 = vpop.f32.mrf.mxu0
    %v5004 = vadd.f32 %v3872, %v5003
    %5005 = vmatprep.mubr.bf16.mxu0 %v3692
    %5006 = vmatmul.mubr.bf16.gmra.mxu0 %v3691
    %v5007 = vpop.f32.mrf.mxu0
    %v5008 = vadd.f32 %v3868, %v5007
    %v5009 = vpop.f32.mrf.mxu0
    %v5010 = vadd.f32 %v3872, %v5009
    %v5011 = vpop.f32.mrf.mxu0
    %v5012 = vadd.f32 %v3868, %v5011
    %v5013 = vpop.f32.mrf.mxu0
    %v5014 = vadd.f32 %v3872, %v5013
    %5015 = vmatprep.mubr.bf16.mxu0 %v3696
    %5016 = vmatmul.mubr.bf16.gmra.mxu0 %v3695
    %v5017 = vpop.f32.mrf.mxu0
    %v5018 = vadd.f32 %v3868, %v5017
    %v5019 = vpop.f32.mrf.mxu0
    %v5020 = vadd.f32 %v3872, %v5019
    %v5021 = vpop.f32.mrf.mxu0
    %v5022 = vadd.f32 %v3868, %v5021
    %v5023 = vpop.f32.mrf.mxu0
    %v5024 = vadd.f32 %v3872, %v5023
    %5025 = vmatprep.mubr.bf16.mxu0 %v3700
    %5026 = vmatmul.mubr.bf16.gmra.mxu0 %v3699
    %v5027 = vpop.f32.mrf.mxu0
    %v5028 = vadd.f32 %v3868, %v5027
    %v5029 = vpop.f32.mrf.mxu0
    %v5030 = vadd.f32 %v3872, %v5029
    %v5031 = vpop.f32.mrf.mxu0
    %v5032 = vadd.f32 %v3868, %v5031
    %v5033 = vpop.f32.mrf.mxu0
    %v5034 = vadd.f32 %v3872, %v5033
    %5035 = vmatprep.mubr.bf16.mxu0 %v3704
    %5036 = vmatmul.mubr.bf16.gmra.mxu0 %v3703
    %v5037 = vpop.f32.mrf.mxu0
    %v5038 = vadd.f32 %v3868, %v5037
    %v5039 = vpop.f32.mrf.mxu0
    %v5040 = vadd.f32 %v3872, %v5039
    %v5041 = vpop.f32.mrf.mxu0
    %v5042 = vadd.f32 %v3868, %v5041
    %v5043 = vpop.f32.mrf.mxu0
    %v5044 = vadd.f32 %v3872, %v5043
    %5045 = vmatprep.mubr.bf16.mxu0 %v3708
    %5046 = vmatmul.mubr.bf16.gmra.mxu0 %v3707
    %v5047 = vpop.f32.mrf.mxu0
    %v5048 = vadd.f32 %v3868, %v5047
    %v5049 = vpop.f32.mrf.mxu0
    %v5050 = vadd.f32 %v3872, %v5049
    %v5051 = vpop.f32.mrf.mxu0
    %v5052 = vadd.f32 %v3868, %v5051
    %v5053 = vpop.f32.mrf.mxu0
    %v5054 = vadd.f32 %v3872, %v5053
    %5055 = vmatprep.mubr.bf16.mxu0 %v3712
    %5056 = vmatmul.mubr.bf16.gmra.mxu0 %v3711
    %v5057 = vpop.f32.mrf.mxu0
    %v5058 = vadd.f32 %v3868, %v5057
    %v5059 = vpop.f32.mrf.mxu0
    %v5060 = vadd.f32 %v3872, %v5059
    %v5061 = vpop.f32.mrf.mxu0
    %v5062 = vadd.f32 %v3868, %v5061
    %v5063 = vpop.f32.mrf.mxu0
    %v5064 = vadd.f32 %v3872, %v5063
    %5065 = vmatprep.mubr.bf16.mxu0 %v3716
    %5066 = vmatmul.mubr.bf16.gmra.mxu0 %v3715
    %v5067 = vpop.f32.mrf.mxu0
    %v5068 = vadd.f32 %v3868, %v5067
    %v5069 = vpop.f32.mrf.mxu0
    %v5070 = vadd.f32 %v3872, %v5069
    %v5071 = vpop.f32.mrf.mxu0
    %v5072 = vadd.f32 %v3868, %v5071
    %v5073 = vpop.f32.mrf.mxu0
    %v5074 = vadd.f32 %v3872, %v5073
    %5075 = vmatprep.mubr.bf16.mxu0 %v3720
    %5076 = vmatmul.mubr.bf16.gmra.mxu0 %v3719
    %v5077 = vpop.f32.mrf.mxu0
    %v5078 = vadd.f32 %v3868, %v5077
    %v5079 = vpop.f32.mrf.mxu0
    %v5080 = vadd.f32 %v3872, %v5079
    %v5081 = vpop.f32.mrf.mxu0
    %v5082 = vadd.f32 %v3868, %v5081
    %v5083 = vpop.f32.mrf.mxu0
    %v5084 = vadd.f32 %v3872, %v5083
    %5085 = vmatprep.mubr.bf16.mxu0 %v3724
    %5086 = vmatmul.mubr.bf16.gmra.mxu0 %v3723
    %v5087 = vpop.f32.mrf.mxu0
    %v5088 = vadd.f32 %v3868, %v5087
    %v5089 = vpop.f32.mrf.mxu0
    %v5090 = vadd.f32 %v3872, %v5089
    %v5091 = vpop.f32.mrf.mxu0
    %v5092 = vadd.f32 %v3868, %v5091
    %v5093 = vpop.f32.mrf.mxu0
    %v5094 = vadd.f32 %v3872, %v5093
    %5095 = vdwg.mxu0
    %5096 = vmatprep.subr.bf16.mxu0 %v4356
    %5097 = vmatpush1.bf16.msra.mxu0 %v4355
    %5098 = vmatprep.subr.bf16.mxu0 %v4352
    %5099 = vmatpush1.bf16.msra.mxu0 %v4351
    %5100 = vmatprep.subr.bf16.mxu0 %v4348
    %5101 = vmatpush1.bf16.msra.mxu0 %v4347
    %5102 = vmatprep.subr.bf16.mxu0 %v4344
    %5103 = vmatpush1.bf16.msra.mxu0 %v4343
    %5104 = vmatprep.subr.bf16.mxu0 %v4340
    %5105 = vmatpush1.bf16.msra.mxu0 %v4339
    %5106 = vmatprep.subr.bf16.mxu0 %v4336
    %5107 = vmatpush1.bf16.msra.mxu0 %v4335
    %5108 = vmatprep.subr.bf16.mxu0 %v4332
    %5109 = vmatpush1.bf16.msra.mxu0 %v4331
    %5110 = vmatprep.subr.bf16.mxu0 %v4328
    %5111 = vmatpush1.bf16.msra.mxu0 %v4327
    %5112 = vmatprep.subr.bf16.mxu0 %v4388
    %5113 = vmatpush2.bf16.msra.mxu0 %v4387
    %5114 = vmatprep.subr.bf16.mxu0 %v4384
    %5115 = vmatpush2.bf16.msra.mxu0 %v4383
    %5116 = vmatprep.subr.bf16.mxu0 %v4380
    %5117 = vmatpush2.bf16.msra.mxu0 %v4379
    %5118 = vmatprep.subr.bf16.mxu0 %v4376
    %5119 = vmatpush2.bf16.msra.mxu0 %v4375
    %5120 = vmatprep.subr.bf16.mxu0 %v4372
    %5121 = vmatpush2.bf16.msra.mxu0 %v4371
    %5122 = vmatprep.subr.bf16.mxu0 %v4368
    %5123 = vmatpush2.bf16.msra.mxu0 %v4367
    %5124 = vmatprep.subr.bf16.mxu0 %v4364
    %5125 = vmatpush2.bf16.msra.mxu0 %v4363
    %5126 = vmatprep.subr.bf16.mxu0 %v4360
    %5127 = vmatpush2.bf16.msra.mxu0 %v4359
    %5128 = vmatprep.mubr.bf16.mxu0 %v3666
    %5129 = vmatmul.mubr.bf16.gmra.mxu0 %v3665
    %v5130 = vpop.f32.mrf.mxu0
    %v5131 = vadd.f32 %v4938, %v5130
    %v5132 = vpop.f32.mrf.mxu0
    %v5133 = vadd.f32 %v4940, %v5132
    %v5134 = vpop.f32.mrf.mxu0
    %v5135 = vadd.f32 %v4942, %v5134
    %v5136 = vpop.f32.mrf.mxu0
    %v5137 = vadd.f32 %v4944, %v5136
    %5138 = vmatprep.mubr.bf16.mxu0 %v3670
    %5139 = vmatmul.mubr.bf16.gmra.mxu0 %v3669
    %v5140 = vpop.f32.mrf.mxu0
    %v5141 = vadd.f32 %v4948, %v5140
    %v5142 = vpop.f32.mrf.mxu0
    %v5143 = vadd.f32 %v4950, %v5142
    %v5144 = vpop.f32.mrf.mxu0
    %v5145 = vadd.f32 %v4952, %v5144
    %v5146 = vpop.f32.mrf.mxu0
    %v5147 = vadd.f32 %v4954, %v5146
    %5148 = vmatprep.mubr.bf16.mxu0 %v3674
    %5149 = vmatmul.mubr.bf16.gmra.mxu0 %v3673
    %v5150 = vpop.f32.mrf.mxu0
    %v5151 = vadd.f32 %v4958, %v5150
    %v5152 = vpop.f32.mrf.mxu0
    %v5153 = vadd.f32 %v4960, %v5152
    %v5154 = vpop.f32.mrf.mxu0
    %v5155 = vadd.f32 %v4962, %v5154
    %v5156 = vpop.f32.mrf.mxu0
    %v5157 = vadd.f32 %v4964, %v5156
    %5158 = vmatprep.mubr.bf16.mxu0 %v3678
    %5159 = vmatmul.mubr.bf16.gmra.mxu0 %v3677
    %v5160 = vpop.f32.mrf.mxu0
    %v5161 = vadd.f32 %v4968, %v5160
    %v5162 = vpop.f32.mrf.mxu0
    %v5163 = vadd.f32 %v4970, %v5162
    %v5164 = vpop.f32.mrf.mxu0
    %v5165 = vadd.f32 %v4972, %v5164
    %v5166 = vpop.f32.mrf.mxu0
    %v5167 = vadd.f32 %v4974, %v5166
    %5168 = vmatprep.mubr.bf16.mxu0 %v3682
    %5169 = vmatmul.mubr.bf16.gmra.mxu0 %v3681
    %v5170 = vpop.f32.mrf.mxu0
    %v5171 = vadd.f32 %v4978, %v5170
    %v5172 = vpop.f32.mrf.mxu0
    %v5173 = vadd.f32 %v4980, %v5172
    %v5174 = vpop.f32.mrf.mxu0
    %v5175 = vadd.f32 %v4982, %v5174
    %v5176 = vpop.f32.mrf.mxu0
    %v5177 = vadd.f32 %v4984, %v5176
    %5178 = vmatprep.mubr.bf16.mxu0 %v3686
    %5179 = vmatmul.mubr.bf16.gmra.mxu0 %v3685
    %v5180 = vpop.f32.mrf.mxu0
    %v5181 = vadd.f32 %v4988, %v5180
    %v5182 = vpop.f32.mrf.mxu0
    %v5183 = vadd.f32 %v4990, %v5182
    %v5184 = vpop.f32.mrf.mxu0
    %v5185 = vadd.f32 %v4992, %v5184
    %v5186 = vpop.f32.mrf.mxu0
    %v5187 = vadd.f32 %v4994, %v5186
    %5188 = vmatprep.mubr.bf16.mxu0 %v3690
    %5189 = vmatmul.mubr.bf16.gmra.mxu0 %v3689
    %v5190 = vpop.f32.mrf.mxu0
    %v5191 = vadd.f32 %v4998, %v5190
    %v5192 = vpop.f32.mrf.mxu0
    %v5193 = vadd.f32 %v5000, %v5192
    %v5194 = vpop.f32.mrf.mxu0
    %v5195 = vadd.f32 %v5002, %v5194
    %v5196 = vpop.f32.mrf.mxu0
    %v5197 = vadd.f32 %v5004, %v5196
    %5198 = vmatprep.mubr.bf16.mxu0 %v3694
    %5199 = vmatmul.mubr.bf16.gmra.mxu0 %v3693
    %v5200 = vpop.f32.mrf.mxu0
    %v5201 = vadd.f32 %v5008, %v5200
    %v5202 = vpop.f32.mrf.mxu0
    %v5203 = vadd.f32 %v5010, %v5202
    %v5204 = vpop.f32.mrf.mxu0
    %v5205 = vadd.f32 %v5012, %v5204
    %v5206 = vpop.f32.mrf.mxu0
    %v5207 = vadd.f32 %v5014, %v5206
    %5208 = vmatprep.mubr.bf16.mxu0 %v3698
    %5209 = vmatmul.mubr.bf16.gmra.mxu0 %v3697
    %v5210 = vpop.f32.mrf.mxu0
    %v5211 = vadd.f32 %v5018, %v5210
    %v5212 = vpop.f32.mrf.mxu0
    %v5213 = vadd.f32 %v5020, %v5212
    %v5214 = vpop.f32.mrf.mxu0
    %v5215 = vadd.f32 %v5022, %v5214
    %v5216 = vpop.f32.mrf.mxu0
    %v5217 = vadd.f32 %v5024, %v5216
    %5218 = vmatprep.mubr.bf16.mxu0 %v3702
    %5219 = vmatmul.mubr.bf16.gmra.mxu0 %v3701
    %v5220 = vpop.f32.mrf.mxu0
    %v5221 = vadd.f32 %v5028, %v5220
    %v5222 = vpop.f32.mrf.mxu0
    %v5223 = vadd.f32 %v5030, %v5222
    %v5224 = vpop.f32.mrf.mxu0
    %v5225 = vadd.f32 %v5032, %v5224
    %v5226 = vpop.f32.mrf.mxu0
    %v5227 = vadd.f32 %v5034, %v5226
    %5228 = vmatprep.mubr.bf16.mxu0 %v3706
    %5229 = vmatmul.mubr.bf16.gmra.mxu0 %v3705
    %v5230 = vpop.f32.mrf.mxu0
    %v5231 = vadd.f32 %v5038, %v5230
    %v5232 = vpop.f32.mrf.mxu0
    %v5233 = vadd.f32 %v5040, %v5232
    %v5234 = vpop.f32.mrf.mxu0
    %v5235 = vadd.f32 %v5042, %v5234
    %v5236 = vpop.f32.mrf.mxu0
    %v5237 = vadd.f32 %v5044, %v5236
    %5238 = vmatprep.mubr.bf16.mxu0 %v3710
    %5239 = vmatmul.mubr.bf16.gmra.mxu0 %v3709
    %v5240 = vpop.f32.mrf.mxu0
    %v5241 = vadd.f32 %v5048, %v5240
    %v5242 = vpop.f32.mrf.mxu0
    %v5243 = vadd.f32 %v5050, %v5242
    %v5244 = vpop.f32.mrf.mxu0
    %v5245 = vadd.f32 %v5052, %v5244
    %v5246 = vpop.f32.mrf.mxu0
    %v5247 = vadd.f32 %v5054, %v5246
    %5248 = vmatprep.mubr.bf16.mxu0 %v3714
    %5249 = vmatmul.mubr.bf16.gmra.mxu0 %v3713
    %v5250 = vpop.f32.mrf.mxu0
    %v5251 = vadd.f32 %v5058, %v5250
    %v5252 = vpop.f32.mrf.mxu0
    %v5253 = vadd.f32 %v5060, %v5252
    %v5254 = vpop.f32.mrf.mxu0
    %v5255 = vadd.f32 %v5062, %v5254
    %v5256 = vpop.f32.mrf.mxu0
    %v5257 = vadd.f32 %v5064, %v5256
    %5258 = vmatprep.mubr.bf16.mxu0 %v3718
    %5259 = vmatmul.mubr.bf16.gmra.mxu0 %v3717
    %v5260 = vpop.f32.mrf.mxu0
    %v5261 = vadd.f32 %v5068, %v5260
    %v5262 = vpop.f32.mrf.mxu0
    %v5263 = vadd.f32 %v5070, %v5262
    %v5264 = vpop.f32.mrf.mxu0
    %v5265 = vadd.f32 %v5072, %v5264
    %v5266 = vpop.f32.mrf.mxu0
    %v5267 = vadd.f32 %v5074, %v5266
    %5268 = vmatprep.mubr.bf16.mxu0 %v3722
    %5269 = vmatmul.mubr.bf16.gmra.mxu0 %v3721
    %v5270 = vpop.f32.mrf.mxu0
    %v5271 = vadd.f32 %v5078, %v5270
    %v5272 = vpop.f32.mrf.mxu0
    %v5273 = vadd.f32 %v5080, %v5272
    %v5274 = vpop.f32.mrf.mxu0
    %v5275 = vadd.f32 %v5082, %v5274
    %v5276 = vpop.f32.mrf.mxu0
    %v5277 = vadd.f32 %v5084, %v5276
    %5278 = vmatprep.mubr.bf16.mxu0 %v3726
    %5279 = vmatmul.mubr.bf16.gmra.mxu0 %v3725
    %v5280 = vpop.f32.mrf.mxu0
    %v5281 = vadd.f32 %v5088, %v5280
    %v5282 = vpop.f32.mrf.mxu0
    %v5283 = vadd.f32 %v5090, %v5282
    %v5284 = vpop.f32.mrf.mxu0
    %v5285 = vadd.f32 %v5092, %v5284
    %v5286 = vpop.f32.mrf.mxu0
    %v5287 = vadd.f32 %v5094, %v5286
    %5288 = vdwg.mxu0
    %v5289 = vmax.f32 %v4745, 0.0
    %v5290 = vmax.f32 %v4747, 0.0
    %v5291 = vmax.f32 %v5131, 0.0
    %v5292 = vmax.f32 %v5133, 0.0
    %v5293 = vmax.f32 %v4749, 0.0
    %v5294 = vmax.f32 %v4751, 0.0
    %v5295 = vmax.f32 %v5135, 0.0
    %v5296 = vmax.f32 %v5137, 0.0
    %v5297 = vmax.f32 %v4755, 0.0
    %v5298 = vmax.f32 %v4757, 0.0
    %v5299 = vmax.f32 %v5141, 0.0
    %v5300 = vmax.f32 %v5143, 0.0
    %v5301 = vmax.f32 %v4759, 0.0
    %v5302 = vmax.f32 %v4761, 0.0
    %v5303 = vmax.f32 %v5145, 0.0
    %v5304 = vmax.f32 %v5147, 0.0
    %v5305 = vmax.f32 %v4765, 0.0
    %v5306 = vmax.f32 %v4767, 0.0
    %v5307 = vmax.f32 %v5151, 0.0
    %v5308 = vmax.f32 %v5153, 0.0
    %v5309 = vmax.f32 %v4769, 0.0
    %v5310 = vmax.f32 %v4771, 0.0
    %v5311 = vmax.f32 %v5155, 0.0
    %v5312 = vmax.f32 %v5157, 0.0
    %v5313 = vmax.f32 %v4775, 0.0
    %v5314 = vmax.f32 %v4777, 0.0
    %v5315 = vmax.f32 %v5161, 0.0
    %v5316 = vmax.f32 %v5163, 0.0
    %v5317 = vmax.f32 %v4779, 0.0
    %v5318 = vmax.f32 %v4781, 0.0
    %v5319 = vmax.f32 %v5165, 0.0
    %v5320 = vmax.f32 %v5167, 0.0
    %v5321 = vmax.f32 %v4785, 0.0
    %v5322 = vmax.f32 %v4787, 0.0
    %v5323 = vmax.f32 %v5171, 0.0
    %v5324 = vmax.f32 %v5173, 0.0
    %v5325 = vmax.f32 %v4789, 0.0
    %v5326 = vmax.f32 %v4791, 0.0
    %v5327 = vmax.f32 %v5175, 0.0
    %v5328 = vmax.f32 %v5177, 0.0
    %v5329 = vmax.f32 %v4795, 0.0
    %v5330 = vmax.f32 %v4797, 0.0
    %v5331 = vmax.f32 %v5181, 0.0
    %v5332 = vmax.f32 %v5183, 0.0
    %v5333 = vmax.f32 %v4799, 0.0
    %v5334 = vmax.f32 %v4801, 0.0
    %v5335 = vmax.f32 %v5185, 0.0
    %v5336 = vmax.f32 %v5187, 0.0
    %v5337 = vmax.f32 %v4805, 0.0
    %v5338 = vmax.f32 %v4807, 0.0
    %v5339 = vmax.f32 %v5191, 0.0
    %v5340 = vmax.f32 %v5193, 0.0
    %v5341 = vmax.f32 %v4809, 0.0
    %v5342 = vmax.f32 %v4811, 0.0
    %v5343 = vmax.f32 %v5195, 0.0
    %v5344 = vmax.f32 %v5197, 0.0
    %v5345 = vmax.f32 %v4815, 0.0
    %v5346 = vmax.f32 %v4817, 0.0
    %v5347 = vmax.f32 %v5201, 0.0
    %v5348 = vmax.f32 %v5203, 0.0
    %v5349 = vmax.f32 %v4819, 0.0
    %v5350 = vmax.f32 %v4821, 0.0
    %v5351 = vmax.f32 %v5205, 0.0
    %v5352 = vmax.f32 %v5207, 0.0
    %v5353 = vmax.f32 %v4825, 0.0
    %v5354 = vmax.f32 %v4827, 0.0
    %v5355 = vmax.f32 %v5211, 0.0
    %v5356 = vmax.f32 %v5213, 0.0
    %v5357 = vmax.f32 %v4829, 0.0
    %v5358 = vmax.f32 %v4831, 0.0
    %v5359 = vmax.f32 %v5215, 0.0
    %v5360 = vmax.f32 %v5217, 0.0
    %v5361 = vmax.f32 %v4835, 0.0
    %v5362 = vmax.f32 %v4837, 0.0
    %v5363 = vmax.f32 %v5221, 0.0
    %v5364 = vmax.f32 %v5223, 0.0
    %v5365 = vmax.f32 %v4839, 0.0
    %v5366 = vmax.f32 %v4841, 0.0
    %v5367 = vmax.f32 %v5225, 0.0
    %v5368 = vmax.f32 %v5227, 0.0
    %v5369 = vmax.f32 %v4845, 0.0
    %v5370 = vmax.f32 %v4847, 0.0
    %v5371 = vmax.f32 %v5231, 0.0
    %v5372 = vmax.f32 %v5233, 0.0
    %v5373 = vmax.f32 %v4849, 0.0
    %v5374 = vmax.f32 %v4851, 0.0
    %v5375 = vmax.f32 %v5235, 0.0
    %v5376 = vmax.f32 %v5237, 0.0
    %v5377 = vmax.f32 %v4855, 0.0
    %v5378 = vmax.f32 %v4857, 0.0
    %v5379 = vmax.f32 %v5241, 0.0
    %v5380 = vmax.f32 %v5243, 0.0
    %v5381 = vmax.f32 %v4859, 0.0
    %v5382 = vmax.f32 %v4861, 0.0
    %v5383 = vmax.f32 %v5245, 0.0
    %v5384 = vmax.f32 %v5247, 0.0
    %v5385 = vmax.f32 %v4865, 0.0
    %v5386 = vmax.f32 %v4867, 0.0
    %v5387 = vmax.f32 %v5251, 0.0
    %v5388 = vmax.f32 %v5253, 0.0
    %v5389 = vmax.f32 %v4869, 0.0
    %v5390 = vmax.f32 %v4871, 0.0
    %v5391 = vmax.f32 %v5255, 0.0
    %v5392 = vmax.f32 %v5257, 0.0
    %v5393 = vmax.f32 %v4875, 0.0
    %v5394 = vmax.f32 %v4877, 0.0
    %v5395 = vmax.f32 %v5261, 0.0
    %v5396 = vmax.f32 %v5263, 0.0
    %v5397 = vmax.f32 %v4879, 0.0
    %v5398 = vmax.f32 %v4881, 0.0
    %v5399 = vmax.f32 %v5265, 0.0
    %v5400 = vmax.f32 %v5267, 0.0
    %v5401 = vmax.f32 %v4885, 0.0
    %v5402 = vmax.f32 %v4887, 0.0
    %v5403 = vmax.f32 %v5271, 0.0
    %v5404 = vmax.f32 %v5273, 0.0
    %v5405 = vmax.f32 %v4889, 0.0
    %v5406 = vmax.f32 %v4891, 0.0
    %v5407 = vmax.f32 %v5275, 0.0
    %v5408 = vmax.f32 %v5277, 0.0
    %v5409 = vmax.f32 %v4895, 0.0
    %v5410 = vmax.f32 %v4897, 0.0
    %v5411 = vmax.f32 %v5281, 0.0
    %v5412 = vmax.f32 %v5283, 0.0
    %v5413 = vmax.f32 %v4899, 0.0
    %v5414 = vmax.f32 %v4901, 0.0
    %v5415 = vmax.f32 %v5285, 0.0
    %v5416 = vmax.f32 %v5287, 0.0
    %v5417 = vpack.c.bf16 %v5293, %v5289
    %v5418 = vpack.c.bf16 %v5294, %v5290
    %v5419 = vpack.c.bf16 %v5295, %v5291
    %v5420 = vpack.c.bf16 %v5296, %v5292
    %v5421 = vpack.c.bf16 %v5301, %v5297
    %v5422 = vpack.c.bf16 %v5302, %v5298
    %v5423 = vpack.c.bf16 %v5303, %v5299
    %v5424 = vpack.c.bf16 %v5304, %v5300
    %v5425 = vpack.c.bf16 %v5309, %v5305
    %v5426 = vpack.c.bf16 %v5310, %v5306
    %v5427 = vpack.c.bf16 %v5311, %v5307
    %v5428 = vpack.c.bf16 %v5312, %v5308
    %v5429 = vpack.c.bf16 %v5317, %v5313
    %v5430 = vpack.c.bf16 %v5318, %v5314
    %v5431 = vpack.c.bf16 %v5319, %v5315
    %v5432 = vpack.c.bf16 %v5320, %v5316
    %v5433 = vpack.c.bf16 %v5325, %v5321
    %v5434 = vpack.c.bf16 %v5326, %v5322
    %v5435 = vpack.c.bf16 %v5327, %v5323
    %v5436 = vpack.c.bf16 %v5328, %v5324
    %v5437 = vpack.c.bf16 %v5333, %v5329
    %v5438 = vpack.c.bf16 %v5334, %v5330
    %v5439 = vpack.c.bf16 %v5335, %v5331
    %v5440 = vpack.c.bf16 %v5336, %v5332
    %v5441 = vpack.c.bf16 %v5341, %v5337
    %v5442 = vpack.c.bf16 %v5342, %v5338
    %v5443 = vpack.c.bf16 %v5343, %v5339
    %v5444 = vpack.c.bf16 %v5344, %v5340
    %v5445 = vpack.c.bf16 %v5349, %v5345
    %v5446 = vpack.c.bf16 %v5350, %v5346
    %v5447 = vpack.c.bf16 %v5351, %v5347
    %v5448 = vpack.c.bf16 %v5352, %v5348
    %v5449 = vpack.c.bf16 %v5357, %v5353
    %v5450 = vpack.c.bf16 %v5358, %v5354
    %v5451 = vpack.c.bf16 %v5359, %v5355
    %v5452 = vpack.c.bf16 %v5360, %v5356
    %v5453 = vpack.c.bf16 %v5365, %v5361
    %v5454 = vpack.c.bf16 %v5366, %v5362
    %v5455 = vpack.c.bf16 %v5367, %v5363
    %v5456 = vpack.c.bf16 %v5368, %v5364
    %v5457 = vpack.c.bf16 %v5373, %v5369
    %v5458 = vpack.c.bf16 %v5374, %v5370
    %v5459 = vpack.c.bf16 %v5375, %v5371
    %v5460 = vpack.c.bf16 %v5376, %v5372
    %v5461 = vpack.c.bf16 %v5381, %v5377
    %v5462 = vpack.c.bf16 %v5382, %v5378
    %v5463 = vpack.c.bf16 %v5383, %v5379
    %v5464 = vpack.c.bf16 %v5384, %v5380
    %v5465 = vpack.c.bf16 %v5389, %v5385
    %v5466 = vpack.c.bf16 %v5390, %v5386
    %v5467 = vpack.c.bf16 %v5391, %v5387
    %v5468 = vpack.c.bf16 %v5392, %v5388
    %v5469 = vpack.c.bf16 %v5397, %v5393
    %v5470 = vpack.c.bf16 %v5398, %v5394
    %v5471 = vpack.c.bf16 %v5399, %v5395
    %v5472 = vpack.c.bf16 %v5400, %v5396
    %v5473 = vpack.c.bf16 %v5405, %v5401
    %v5474 = vpack.c.bf16 %v5406, %v5402
    %v5475 = vpack.c.bf16 %v5407, %v5403
    %v5476 = vpack.c.bf16 %v5408, %v5404
    %v5477 = vpack.c.bf16 %v5413, %v5409
    %v5478 = vpack.c.bf16 %v5414, %v5410
    %v5479 = vpack.c.bf16 %v5415, %v5411
    %v5480 = vpack.c.bf16 %v5416, %v5412
    %v5481 = vld [vmem:[#allocation5] sm:$0xf]
    %v5482 = vld [vmem:[#allocation5 + $0x4] sm:$0xf]
    %v5483 = vld [vmem:[#allocation5 + $0x8] sm:$0xf]
    %v5484 = vld [vmem:[#allocation5 + $0xc] sm:$0xf]
    %v5485 = vld [vmem:[#allocation5 + $0x10] sm:$0xf]
    %v5486 = vld [vmem:[#allocation5 + $0x14] sm:$0xf]
    %v5487 = vld [vmem:[#allocation5 + $0x18] sm:$0xf]
    %v5488 = vld [vmem:[#allocation5 + $0x1c] sm:$0xf]
    %v5489 = vld [vmem:[#allocation5 + $0x20] sm:$0xf]
    %v5490 = vld [vmem:[#allocation5 + $0x24] sm:$0xf]
    %v5491 = vld [vmem:[#allocation5 + $0x28] sm:$0xf]
    %v5492 = vld [vmem:[#allocation5 + $0x2c] sm:$0xf]
    %v5493 = vld [vmem:[#allocation5 + $0x30] sm:$0xf]
    %v5494 = vld [vmem:[#allocation5 + $0x34] sm:$0xf]
    %v5495 = vld [vmem:[#allocation5 + $0x38] sm:$0xf]
    %v5496 = vld [vmem:[#allocation5 + $0x3c] sm:$0xf]
    %v5497 = vld [vmem:[#allocation5 + $0x40] sm:$0xf]
    %v5498 = vld [vmem:[#allocation5 + $0x44] sm:$0xf]
    %v5499 = vld [vmem:[#allocation5 + $0x48] sm:$0xf]
    %v5500 = vld [vmem:[#allocation5 + $0x4c] sm:$0xf]
    %v5501 = vld [vmem:[#allocation5 + $0x50] sm:$0xf]
    %v5502 = vld [vmem:[#allocation5 + $0x54] sm:$0xf]
    %v5503 = vld [vmem:[#allocation5 + $0x58] sm:$0xf]
    %v5504 = vld [vmem:[#allocation5 + $0x5c] sm:$0xf]
    %v5505 = vld [vmem:[#allocation5 + $0x60] sm:$0xf]
    %v5506 = vld [vmem:[#allocation5 + $0x64] sm:$0xf]
    %v5507 = vld [vmem:[#allocation5 + $0x68] sm:$0xf]
    %v5508 = vld [vmem:[#allocation5 + $0x6c] sm:$0xf]
    %v5509 = vld [vmem:[#allocation5 + $0x70] sm:$0xf]
    %v5510 = vld [vmem:[#allocation5 + $0x74] sm:$0xf]
    %v5511 = vld [vmem:[#allocation5 + $0x78] sm:$0xf]
    %v5512 = vld [vmem:[#allocation5 + $0x7c] sm:$0xf]
    %v5513 = vld [vmem:[#allocation5 + $0x80] sm:$0xf]
    %v5514 = vld [vmem:[#allocation5 + $0x84] sm:$0xf]
    %v5515 = vld [vmem:[#allocation5 + $0x88] sm:$0xf]
    %v5516 = vld [vmem:[#allocation5 + $0x8c] sm:$0xf]
    %v5517 = vld [vmem:[#allocation5 + $0x90] sm:$0xf]
    %v5518 = vld [vmem:[#allocation5 + $0x94] sm:$0xf]
    %v5519 = vld [vmem:[#allocation5 + $0x98] sm:$0xf]
    %v5520 = vld [vmem:[#allocation5 + $0x9c] sm:$0xf]
    %v5521 = vld [vmem:[#allocation5 + $0xa0] sm:$0xf]
    %v5522 = vld [vmem:[#allocation5 + $0xa4] sm:$0xf]
    %v5523 = vld [vmem:[#allocation5 + $0xa8] sm:$0xf]
    %v5524 = vld [vmem:[#allocation5 + $0xac] sm:$0xf]
    %v5525 = vld [vmem:[#allocation5 + $0xb0] sm:$0xf]
    %v5526 = vld [vmem:[#allocation5 + $0xb4] sm:$0xf]
    %v5527 = vld [vmem:[#allocation5 + $0xb8] sm:$0xf]
    %v5528 = vld [vmem:[#allocation5 + $0xbc] sm:$0xf]
    %v5529 = vld [vmem:[#allocation5 + $0xc0] sm:$0xf]
    %v5530 = vld [vmem:[#allocation5 + $0xc4] sm:$0xf]
    %v5531 = vld [vmem:[#allocation5 + $0xc8] sm:$0xf]
    %v5532 = vld [vmem:[#allocation5 + $0xcc] sm:$0xf]
    %v5533 = vld [vmem:[#allocation5 + $0xd0] sm:$0xf]
    %v5534 = vld [vmem:[#allocation5 + $0xd4] sm:$0xf]
    %v5535 = vld [vmem:[#allocation5 + $0xd8] sm:$0xf]
    %v5536 = vld [vmem:[#allocation5 + $0xdc] sm:$0xf]
    %v5537 = vld [vmem:[#allocation5 + $0xe0] sm:$0xf]
    %v5538 = vld [vmem:[#allocation5 + $0xe4] sm:$0xf]
    %v5539 = vld [vmem:[#allocation5 + $0xe8] sm:$0xf]
    %v5540 = vld [vmem:[#allocation5 + $0xec] sm:$0xf]
    %v5541 = vld [vmem:[#allocation5 + $0xf0] sm:$0xf]
    %v5542 = vld [vmem:[#allocation5 + $0xf4] sm:$0xf]
    %v5543 = vld [vmem:[#allocation5 + $0xf8] sm:$0xf]
    %v5544 = vld [vmem:[#allocation5 + $0xfc] sm:$0xf]
    %v5545 = vld [vmem:[%s6] sm:$0x1]
    %v5547 = vlaneseq
    %v5548 = vshrl.u32 %v5547, 7
    %v5549 = vsub.s32 0, %v5548
    %v5550 = vrot.slane %v5545, %v5549
    %v5616 = vunpack.c.l.b16 %v5481
    %v5617 = vunpack.c.l.b16 %v5482
    %v5618 = vunpack.c.l.b16 %v5483
    %v5619 = vunpack.c.l.b16 %v5484
    %v5620 = vunpack.c.l.b16 %v5485
    %v5621 = vunpack.c.l.b16 %v5486
    %v5622 = vunpack.c.l.b16 %v5487
    %v5623 = vunpack.c.l.b16 %v5488
    %v5624 = vunpack.c.l.b16 %v5489
    %v5625 = vunpack.c.l.b16 %v5490
    %v5626 = vunpack.c.l.b16 %v5491
    %v5627 = vunpack.c.l.b16 %v5492
    %v5628 = vunpack.c.l.b16 %v5493
    %v5629 = vunpack.c.l.b16 %v5494
    %v5630 = vunpack.c.l.b16 %v5495
    %v5631 = vunpack.c.l.b16 %v5496
    %v5632 = vunpack.c.l.b16 %v5497
    %v5633 = vunpack.c.l.b16 %v5498
    %v5634 = vunpack.c.l.b16 %v5499
    %v5635 = vunpack.c.l.b16 %v5500
    %v5636 = vunpack.c.l.b16 %v5501
    %v5637 = vunpack.c.l.b16 %v5502
    %v5638 = vunpack.c.l.b16 %v5503
    %v5639 = vunpack.c.l.b16 %v5504
    %v5640 = vunpack.c.l.b16 %v5505
    %v5641 = vunpack.c.l.b16 %v5506
    %v5642 = vunpack.c.l.b16 %v5507
    %v5643 = vunpack.c.l.b16 %v5508
    %v5644 = vunpack.c.l.b16 %v5509
    %v5645 = vunpack.c.l.b16 %v5510
    %v5646 = vunpack.c.l.b16 %v5511
    %v5647 = vunpack.c.l.b16 %v5512
    %v5648 = vunpack.c.l.b16 %v5513
    %v5649 = vunpack.c.l.b16 %v5514
    %v5650 = vunpack.c.l.b16 %v5515
    %v5651 = vunpack.c.l.b16 %v5516
    %v5652 = vunpack.c.l.b16 %v5517
    %v5653 = vunpack.c.l.b16 %v5518
    %v5654 = vunpack.c.l.b16 %v5519
    %v5655 = vunpack.c.l.b16 %v5520
    %v5656 = vunpack.c.l.b16 %v5521
    %v5657 = vunpack.c.l.b16 %v5522
    %v5658 = vunpack.c.l.b16 %v5523
    %v5659 = vunpack.c.l.b16 %v5524
    %v5660 = vunpack.c.l.b16 %v5525
    %v5661 = vunpack.c.l.b16 %v5526
    %v5662 = vunpack.c.l.b16 %v5527
    %v5663 = vunpack.c.l.b16 %v5528
    %v5664 = vunpack.c.l.b16 %v5529
    %v5665 = vunpack.c.l.b16 %v5530
    %v5666 = vunpack.c.l.b16 %v5531
    %v5667 = vunpack.c.l.b16 %v5532
    %v5668 = vunpack.c.l.b16 %v5533
    %v5669 = vunpack.c.l.b16 %v5534
    %v5670 = vunpack.c.l.b16 %v5535
    %v5671 = vunpack.c.l.b16 %v5536
    %v5672 = vunpack.c.l.b16 %v5537
    %v5673 = vunpack.c.l.b16 %v5538
    %v5674 = vunpack.c.l.b16 %v5539
    %v5675 = vunpack.c.l.b16 %v5540
    %v5676 = vunpack.c.l.b16 %v5541
    %v5677 = vunpack.c.l.b16 %v5542
    %v5678 = vunpack.c.l.b16 %v5543
    %v5679 = vunpack.c.l.b16 %v5544
    %v5680 = vpack.c.b16 %v5617, %v5616
    %v5681 = vpack.c.b16 %v5619, %v5618
    %v5682 = vpack.c.b16 %v5621, %v5620
    %v5683 = vpack.c.b16 %v5623, %v5622
    %v5684 = vpack.c.b16 %v5625, %v5624
    %v5685 = vpack.c.b16 %v5627, %v5626
    %v5686 = vpack.c.b16 %v5629, %v5628
    %v5687 = vpack.c.b16 %v5631, %v5630
    %v5688 = vpack.c.b16 %v5633, %v5632
    %v5689 = vpack.c.b16 %v5635, %v5634
    %v5690 = vpack.c.b16 %v5637, %v5636
    %v5691 = vpack.c.b16 %v5639, %v5638
    %v5692 = vpack.c.b16 %v5641, %v5640
    %v5693 = vpack.c.b16 %v5643, %v5642
    %v5694 = vpack.c.b16 %v5645, %v5644
    %v5695 = vpack.c.b16 %v5647, %v5646
    %v5696 = vpack.c.b16 %v5649, %v5648
    %v5697 = vpack.c.b16 %v5651, %v5650
    %v5698 = vpack.c.b16 %v5653, %v5652
    %v5699 = vpack.c.b16 %v5655, %v5654
    %v5700 = vpack.c.b16 %v5657, %v5656
    %v5701 = vpack.c.b16 %v5659, %v5658
    %v5702 = vpack.c.b16 %v5661, %v5660
    %v5703 = vpack.c.b16 %v5663, %v5662
    %v5704 = vpack.c.b16 %v5665, %v5664
    %v5705 = vpack.c.b16 %v5667, %v5666
    %v5706 = vpack.c.b16 %v5669, %v5668
    %v5707 = vpack.c.b16 %v5671, %v5670
    %v5708 = vpack.c.b16 %v5673, %v5672
    %v5709 = vpack.c.b16 %v5675, %v5674
    %v5710 = vpack.c.b16 %v5677, %v5676
    %v5711 = vpack.c.b16 %v5679, %v5678
    %5744 = vmatprep.subr.bf16.mxu0 0
    %5745 = vmatpush1.bf16.msra.mxu0 %v5687
    %5746 = vmatprep.subr.bf16.mxu0 0
    %5747 = vmatpush1.bf16.msra.mxu0 %v5686
    %5748 = vmatprep.subr.bf16.mxu0 0
    %5749 = vmatpush1.bf16.msra.mxu0 %v5685
    %5750 = vmatprep.subr.bf16.mxu0 0
    %5751 = vmatpush1.bf16.msra.mxu0 %v5684
    %5752 = vmatprep.subr.bf16.mxu0 0
    %5753 = vmatpush1.bf16.msra.mxu0 %v5683
    %5754 = vmatprep.subr.bf16.mxu0 0
    %5755 = vmatpush1.bf16.msra.mxu0 %v5682
    %5756 = vmatprep.subr.bf16.mxu0 0
    %5757 = vmatpush1.bf16.msra.mxu0 %v5681
    %5758 = vmatprep.subr.bf16.mxu0 0
    %5759 = vmatpush1.bf16.msra.mxu0 %v5680
    %5760 = vmatprep.subr.bf16.mxu0 0
    %5761 = vmatpush2.bf16.msra.mxu0 %v5695
    %5762 = vmatprep.subr.bf16.mxu0 0
    %5763 = vmatpush2.bf16.msra.mxu0 %v5694
    %5764 = vmatprep.subr.bf16.mxu0 0
    %5765 = vmatpush2.bf16.msra.mxu0 %v5693
    %5766 = vmatprep.subr.bf16.mxu0 0
    %5767 = vmatpush2.bf16.msra.mxu0 %v5692
    %5768 = vmatprep.subr.bf16.mxu0 0
    %5769 = vmatpush2.bf16.msra.mxu0 %v5691
    %5770 = vmatprep.subr.bf16.mxu0 0
    %5771 = vmatpush2.bf16.msra.mxu0 %v5690
    %5772 = vmatprep.subr.bf16.mxu0 0
    %5773 = vmatpush2.bf16.msra.mxu0 %v5689
    %5774 = vmatprep.subr.bf16.mxu0 0
    %5775 = vmatpush2.bf16.msra.mxu0 %v5688
    %5776 = vmatprep.mubr.bf16.mxu0 %v5418
    %5777 = vmatmul.mubr.bf16.gmra.mxu0 %v5417
    %v5778 = vpop.f32.mrf.mxu0
    %v5779 = vadd.f32 %v5550, %v5778
    %v5780 = vpop.f32.mrf.mxu0
    %v5781 = vpop.f32.mrf.mxu0
    %v5782 = vadd.f32 %v5550, %v5781
    %v5783 = vpop.f32.mrf.mxu0
    %5784 = vmatprep.mubr.bf16.mxu0 %v5422
    %5785 = vmatmul.mubr.bf16.gmra.mxu0 %v5421
    %v5786 = vpop.f32.mrf.mxu0
    %v5787 = vadd.f32 %v5550, %v5786
    %v5788 = vpop.f32.mrf.mxu0
    %v5789 = vpop.f32.mrf.mxu0
    %v5790 = vadd.f32 %v5550, %v5789
    %v5791 = vpop.f32.mrf.mxu0
    %5792 = vmatprep.mubr.bf16.mxu0 %v5426
    %5793 = vmatmul.mubr.bf16.gmra.mxu0 %v5425
    %v5794 = vpop.f32.mrf.mxu0
    %v5795 = vadd.f32 %v5550, %v5794
    %v5796 = vpop.f32.mrf.mxu0
    %v5797 = vpop.f32.mrf.mxu0
    %v5798 = vadd.f32 %v5550, %v5797
    %v5799 = vpop.f32.mrf.mxu0
    %5800 = vmatprep.mubr.bf16.mxu0 %v5430
    %5801 = vmatmul.mubr.bf16.gmra.mxu0 %v5429
    %v5802 = vpop.f32.mrf.mxu0
    %v5803 = vadd.f32 %v5550, %v5802
    %v5804 = vpop.f32.mrf.mxu0
    %v5805 = vpop.f32.mrf.mxu0
    %v5806 = vadd.f32 %v5550, %v5805
    %v5807 = vpop.f32.mrf.mxu0
    %5808 = vmatprep.mubr.bf16.mxu0 %v5434
    %5809 = vmatmul.mubr.bf16.gmra.mxu0 %v5433
    %v5810 = vpop.f32.mrf.mxu0
    %v5811 = vadd.f32 %v5550, %v5810
    %v5812 = vpop.f32.mrf.mxu0
    %v5813 = vpop.f32.mrf.mxu0
    %v5814 = vadd.f32 %v5550, %v5813
    %v5815 = vpop.f32.mrf.mxu0
    %5816 = vmatprep.mubr.bf16.mxu0 %v5438
    %5817 = vmatmul.mubr.bf16.gmra.mxu0 %v5437
    %v5818 = vpop.f32.mrf.mxu0
    %v5819 = vadd.f32 %v5550, %v5818
    %v5820 = vpop.f32.mrf.mxu0
    %v5821 = vpop.f32.mrf.mxu0
    %v5822 = vadd.f32 %v5550, %v5821
    %v5823 = vpop.f32.mrf.mxu0
    %5824 = vmatprep.mubr.bf16.mxu0 %v5442
    %5825 = vmatmul.mubr.bf16.gmra.mxu0 %v5441
    %v5826 = vpop.f32.mrf.mxu0
    %v5827 = vadd.f32 %v5550, %v5826
    %v5828 = vpop.f32.mrf.mxu0
    %v5829 = vpop.f32.mrf.mxu0
    %v5830 = vadd.f32 %v5550, %v5829
    %v5831 = vpop.f32.mrf.mxu0
    %5832 = vmatprep.mubr.bf16.mxu0 %v5446
    %5833 = vmatmul.mubr.bf16.gmra.mxu0 %v5445
    %v5834 = vpop.f32.mrf.mxu0
    %v5835 = vadd.f32 %v5550, %v5834
    %v5836 = vpop.f32.mrf.mxu0
    %v5837 = vpop.f32.mrf.mxu0
    %v5838 = vadd.f32 %v5550, %v5837
    %v5839 = vpop.f32.mrf.mxu0
    %5840 = vmatprep.mubr.bf16.mxu0 %v5450
    %5841 = vmatmul.mubr.bf16.gmra.mxu0 %v5449
    %v5842 = vpop.f32.mrf.mxu0
    %v5843 = vadd.f32 %v5550, %v5842
    %v5844 = vpop.f32.mrf.mxu0
    %v5845 = vpop.f32.mrf.mxu0
    %v5846 = vadd.f32 %v5550, %v5845
    %v5847 = vpop.f32.mrf.mxu0
    %5848 = vmatprep.mubr.bf16.mxu0 %v5454
    %5849 = vmatmul.mubr.bf16.gmra.mxu0 %v5453
    %v5850 = vpop.f32.mrf.mxu0
    %v5851 = vadd.f32 %v5550, %v5850
    %v5852 = vpop.f32.mrf.mxu0
    %v5853 = vpop.f32.mrf.mxu0
    %v5854 = vadd.f32 %v5550, %v5853
    %v5855 = vpop.f32.mrf.mxu0
    %5856 = vmatprep.mubr.bf16.mxu0 %v5458
    %5857 = vmatmul.mubr.bf16.gmra.mxu0 %v5457
    %v5858 = vpop.f32.mrf.mxu0
    %v5859 = vadd.f32 %v5550, %v5858
    %v5860 = vpop.f32.mrf.mxu0
    %v5861 = vpop.f32.mrf.mxu0
    %v5862 = vadd.f32 %v5550, %v5861
    %v5863 = vpop.f32.mrf.mxu0
    %5864 = vmatprep.mubr.bf16.mxu0 %v5462
    %5865 = vmatmul.mubr.bf16.gmra.mxu0 %v5461
    %v5866 = vpop.f32.mrf.mxu0
    %v5867 = vadd.f32 %v5550, %v5866
    %v5868 = vpop.f32.mrf.mxu0
    %v5869 = vpop.f32.mrf.mxu0
    %v5870 = vadd.f32 %v5550, %v5869
    %v5871 = vpop.f32.mrf.mxu0
    %5872 = vmatprep.mubr.bf16.mxu0 %v5466
    %5873 = vmatmul.mubr.bf16.gmra.mxu0 %v5465
    %v5874 = vpop.f32.mrf.mxu0
    %v5875 = vadd.f32 %v5550, %v5874
    %v5876 = vpop.f32.mrf.mxu0
    %v5877 = vpop.f32.mrf.mxu0
    %v5878 = vadd.f32 %v5550, %v5877
    %v5879 = vpop.f32.mrf.mxu0
    %5880 = vmatprep.mubr.bf16.mxu0 %v5470
    %5881 = vmatmul.mubr.bf16.gmra.mxu0 %v5469
    %v5882 = vpop.f32.mrf.mxu0
    %v5883 = vadd.f32 %v5550, %v5882
    %v5884 = vpop.f32.mrf.mxu0
    %v5885 = vpop.f32.mrf.mxu0
    %v5886 = vadd.f32 %v5550, %v5885
    %v5887 = vpop.f32.mrf.mxu0
    %5888 = vmatprep.mubr.bf16.mxu0 %v5474
    %5889 = vmatmul.mubr.bf16.gmra.mxu0 %v5473
    %v5890 = vpop.f32.mrf.mxu0
    %v5891 = vadd.f32 %v5550, %v5890
    %v5892 = vpop.f32.mrf.mxu0
    %v5893 = vpop.f32.mrf.mxu0
    %v5894 = vadd.f32 %v5550, %v5893
    %v5895 = vpop.f32.mrf.mxu0
    %5896 = vmatprep.mubr.bf16.mxu0 %v5478
    %5897 = vmatmul.mubr.bf16.gmra.mxu0 %v5477
    %v5898 = vpop.f32.mrf.mxu0
    %v5899 = vadd.f32 %v5550, %v5898
    %v5900 = vpop.f32.mrf.mxu0
    %v5901 = vpop.f32.mrf.mxu0
    %v5902 = vadd.f32 %v5550, %v5901
    %v5903 = vpop.f32.mrf.mxu0
    %5904 = vdwg.mxu0
    %5905 = vmatprep.subr.bf16.mxu0 0
    %5906 = vmatpush1.bf16.msra.mxu0 %v5703
    %5907 = vmatprep.subr.bf16.mxu0 0
    %5908 = vmatpush1.bf16.msra.mxu0 %v5702
    %5909 = vmatprep.subr.bf16.mxu0 0
    %5910 = vmatpush1.bf16.msra.mxu0 %v5701
    %5911 = vmatprep.subr.bf16.mxu0 0
    %5912 = vmatpush1.bf16.msra.mxu0 %v5700
    %5913 = vmatprep.subr.bf16.mxu0 0
    %5914 = vmatpush1.bf16.msra.mxu0 %v5699
    %5915 = vmatprep.subr.bf16.mxu0 0
    %5916 = vmatpush1.bf16.msra.mxu0 %v5698
    %5917 = vmatprep.subr.bf16.mxu0 0
    %5918 = vmatpush1.bf16.msra.mxu0 %v5697
    %5919 = vmatprep.subr.bf16.mxu0 0
    %5920 = vmatpush1.bf16.msra.mxu0 %v5696
    %5921 = vmatprep.subr.bf16.mxu0 0
    %5922 = vmatpush2.bf16.msra.mxu0 %v5711
    %5923 = vmatprep.subr.bf16.mxu0 0
    %5924 = vmatpush2.bf16.msra.mxu0 %v5710
    %5925 = vmatprep.subr.bf16.mxu0 0
    %5926 = vmatpush2.bf16.msra.mxu0 %v5709
    %5927 = vmatprep.subr.bf16.mxu0 0
    %5928 = vmatpush2.bf16.msra.mxu0 %v5708
    %5929 = vmatprep.subr.bf16.mxu0 0
    %5930 = vmatpush2.bf16.msra.mxu0 %v5707
    %5931 = vmatprep.subr.bf16.mxu0 0
    %5932 = vmatpush2.bf16.msra.mxu0 %v5706
    %5933 = vmatprep.subr.bf16.mxu0 0
    %5934 = vmatpush2.bf16.msra.mxu0 %v5705
    %5935 = vmatprep.subr.bf16.mxu0 0
    %5936 = vmatpush2.bf16.msra.mxu0 %v5704
    %5937 = vmatprep.mubr.bf16.mxu0 %v5420
    %5938 = vmatmul.mubr.bf16.gmra.mxu0 %v5419
    %v5939 = vpop.f32.mrf.mxu0
    %v5940 = vadd.f32 %v5779, %v5939
    %v5941 = vpop.f32.mrf.mxu0
    %v5942 = vpop.f32.mrf.mxu0
    %v5943 = vadd.f32 %v5782, %v5942
    %v5944 = vpop.f32.mrf.mxu0
    %5945 = vmatprep.mubr.bf16.mxu0 %v5424
    %5946 = vmatmul.mubr.bf16.gmra.mxu0 %v5423
    %v5947 = vpop.f32.mrf.mxu0
    %v5948 = vadd.f32 %v5787, %v5947
    %v5949 = vpop.f32.mrf.mxu0
    %v5950 = vpop.f32.mrf.mxu0
    %v5951 = vadd.f32 %v5790, %v5950
    %v5952 = vpop.f32.mrf.mxu0
    %5953 = vmatprep.mubr.bf16.mxu0 %v5428
    %5954 = vmatmul.mubr.bf16.gmra.mxu0 %v5427
    %v5955 = vpop.f32.mrf.mxu0
    %v5956 = vadd.f32 %v5795, %v5955
    %v5957 = vpop.f32.mrf.mxu0
    %v5958 = vpop.f32.mrf.mxu0
    %v5959 = vadd.f32 %v5798, %v5958
    %v5960 = vpop.f32.mrf.mxu0
    %5961 = vmatprep.mubr.bf16.mxu0 %v5432
    %5962 = vmatmul.mubr.bf16.gmra.mxu0 %v5431
    %v5963 = vpop.f32.mrf.mxu0
    %v5964 = vadd.f32 %v5803, %v5963
    %v5965 = vpop.f32.mrf.mxu0
    %v5966 = vpop.f32.mrf.mxu0
    %v5967 = vadd.f32 %v5806, %v5966
    %v5968 = vpop.f32.mrf.mxu0
    %5969 = vmatprep.mubr.bf16.mxu0 %v5436
    %5970 = vmatmul.mubr.bf16.gmra.mxu0 %v5435
    %v5971 = vpop.f32.mrf.mxu0
    %v5972 = vadd.f32 %v5811, %v5971
    %v5973 = vpop.f32.mrf.mxu0
    %v5974 = vpop.f32.mrf.mxu0
    %v5975 = vadd.f32 %v5814, %v5974
    %v5976 = vpop.f32.mrf.mxu0
    %5977 = vmatprep.mubr.bf16.mxu0 %v5440
    %5978 = vmatmul.mubr.bf16.gmra.mxu0 %v5439
    %v5979 = vpop.f32.mrf.mxu0
    %v5980 = vadd.f32 %v5819, %v5979
    %v5981 = vpop.f32.mrf.mxu0
    %v5982 = vpop.f32.mrf.mxu0
    %v5983 = vadd.f32 %v5822, %v5982
    %v5984 = vpop.f32.mrf.mxu0
    %5985 = vmatprep.mubr.bf16.mxu0 %v5444
    %5986 = vmatmul.mubr.bf16.gmra.mxu0 %v5443
    %v5987 = vpop.f32.mrf.mxu0
    %v5988 = vadd.f32 %v5827, %v5987
    %v5989 = vpop.f32.mrf.mxu0
    %v5990 = vpop.f32.mrf.mxu0
    %v5991 = vadd.f32 %v5830, %v5990
    %v5992 = vpop.f32.mrf.mxu0
    %5993 = vmatprep.mubr.bf16.mxu0 %v5448
    %5994 = vmatmul.mubr.bf16.gmra.mxu0 %v5447
    %v5995 = vpop.f32.mrf.mxu0
    %v5996 = vadd.f32 %v5835, %v5995
    %v5997 = vpop.f32.mrf.mxu0
    %v5998 = vpop.f32.mrf.mxu0
    %v5999 = vadd.f32 %v5838, %v5998
    %v6000 = vpop.f32.mrf.mxu0
    %6001 = vmatprep.mubr.bf16.mxu0 %v5452
    %6002 = vmatmul.mubr.bf16.gmra.mxu0 %v5451
    %v6003 = vpop.f32.mrf.mxu0
    %v6004 = vadd.f32 %v5843, %v6003
    %v6005 = vpop.f32.mrf.mxu0
    %v6006 = vpop.f32.mrf.mxu0
    %v6007 = vadd.f32 %v5846, %v6006
    %v6008 = vpop.f32.mrf.mxu0
    %6009 = vmatprep.mubr.bf16.mxu0 %v5456
    %6010 = vmatmul.mubr.bf16.gmra.mxu0 %v5455
    %v6011 = vpop.f32.mrf.mxu0
    %v6012 = vadd.f32 %v5851, %v6011
    %v6013 = vpop.f32.mrf.mxu0
    %v6014 = vpop.f32.mrf.mxu0
    %v6015 = vadd.f32 %v5854, %v6014
    %v6016 = vpop.f32.mrf.mxu0
    %6017 = vmatprep.mubr.bf16.mxu0 %v5460
    %6018 = vmatmul.mubr.bf16.gmra.mxu0 %v5459
    %v6019 = vpop.f32.mrf.mxu0
    %v6020 = vadd.f32 %v5859, %v6019
    %v6021 = vpop.f32.mrf.mxu0
    %v6022 = vpop.f32.mrf.mxu0
    %v6023 = vadd.f32 %v5862, %v6022
    %v6024 = vpop.f32.mrf.mxu0
    %6025 = vmatprep.mubr.bf16.mxu0 %v5464
    %6026 = vmatmul.mubr.bf16.gmra.mxu0 %v5463
    %v6027 = vpop.f32.mrf.mxu0
    %v6028 = vadd.f32 %v5867, %v6027
    %v6029 = vpop.f32.mrf.mxu0
    %v6030 = vpop.f32.mrf.mxu0
    %v6031 = vadd.f32 %v5870, %v6030
    %v6032 = vpop.f32.mrf.mxu0
    %6033 = vmatprep.mubr.bf16.mxu0 %v5468
    %6034 = vmatmul.mubr.bf16.gmra.mxu0 %v5467
    %v6035 = vpop.f32.mrf.mxu0
    %v6036 = vadd.f32 %v5875, %v6035
    %v6037 = vpop.f32.mrf.mxu0
    %v6038 = vpop.f32.mrf.mxu0
    %v6039 = vadd.f32 %v5878, %v6038
    %v6040 = vpop.f32.mrf.mxu0
    %6041 = vmatprep.mubr.bf16.mxu0 %v5472
    %6042 = vmatmul.mubr.bf16.gmra.mxu0 %v5471
    %v6043 = vpop.f32.mrf.mxu0
    %v6044 = vadd.f32 %v5883, %v6043
    %v6045 = vpop.f32.mrf.mxu0
    %v6046 = vpop.f32.mrf.mxu0
    %v6047 = vadd.f32 %v5886, %v6046
    %v6048 = vpop.f32.mrf.mxu0
    %6049 = vmatprep.mubr.bf16.mxu0 %v5476
    %6050 = vmatmul.mubr.bf16.gmra.mxu0 %v5475
    %v6051 = vpop.f32.mrf.mxu0
    %v6052 = vadd.f32 %v5891, %v6051
    %v6053 = vpop.f32.mrf.mxu0
    %v6054 = vpop.f32.mrf.mxu0
    %v6055 = vadd.f32 %v5894, %v6054
    %v6056 = vpop.f32.mrf.mxu0
    %6057 = vmatprep.mubr.bf16.mxu0 %v5480
    %6058 = vmatmul.mubr.bf16.gmra.mxu0 %v5479
    %v6059 = vpop.f32.mrf.mxu0
    %v6060 = vadd.f32 %v5899, %v6059
    %v6061 = vpop.f32.mrf.mxu0
    %v6062 = vpop.f32.mrf.mxu0
    %v6063 = vadd.f32 %v5902, %v6062
    %v6064 = vpop.f32.mrf.mxu0
    %6065 = vdwg.mxu0
    %6066 = vmax.xlane.f32.xlu0 %v5940
    %v6067 = vpop.xlane.xlu0 %6066
    %6068 = vmax.xlane.f32.xlu0 %v5943
    %v6069 = vpop.xlane.xlu0 %6068
    %6070 = vmax.xlane.f32.xlu0 %v5948
    %v6071 = vpop.xlane.xlu0 %6070
    %6072 = vmax.xlane.f32.xlu0 %v5951
    %v6073 = vpop.xlane.xlu0 %6072
    %6074 = vmax.xlane.f32.xlu0 %v5956
    %v6075 = vpop.xlane.xlu0 %6074
    %6076 = vmax.xlane.f32.xlu0 %v5959
    %v6077 = vpop.xlane.xlu0 %6076
    %6078 = vmax.xlane.f32.xlu0 %v5964
    %v6079 = vpop.xlane.xlu0 %6078
    %6080 = vmax.xlane.f32.xlu0 %v5967
    %v6081 = vpop.xlane.xlu0 %6080
    %6082 = vmax.xlane.f32.xlu0 %v5972
    %v6083 = vpop.xlane.xlu0 %6082
    %6084 = vmax.xlane.f32.xlu0 %v5975
    %v6085 = vpop.xlane.xlu0 %6084
    %6086 = vmax.xlane.f32.xlu0 %v5980
    %v6087 = vpop.xlane.xlu0 %6086
    %6088 = vmax.xlane.f32.xlu0 %v5983
    %v6089 = vpop.xlane.xlu0 %6088
    %6090 = vmax.xlane.f32.xlu0 %v5988
    %v6091 = vpop.xlane.xlu0 %6090
    %6092 = vmax.xlane.f32.xlu0 %v5991
    %v6093 = vpop.xlane.xlu0 %6092
    %6094 = vmax.xlane.f32.xlu0 %v5996
    %v6095 = vpop.xlane.xlu0 %6094
    %6096 = vmax.xlane.f32.xlu0 %v5999
    %v6097 = vpop.xlane.xlu0 %6096
    %6098 = vmax.xlane.f32.xlu0 %v6004
    %v6099 = vpop.xlane.xlu0 %6098
    %6100 = vmax.xlane.f32.xlu0 %v6007
    %v6101 = vpop.xlane.xlu0 %6100
    %6102 = vmax.xlane.f32.xlu0 %v6012
    %v6103 = vpop.xlane.xlu0 %6102
    %6104 = vmax.xlane.f32.xlu0 %v6015
    %v6105 = vpop.xlane.xlu0 %6104
    %6106 = vmax.xlane.f32.xlu0 %v6020
    %v6107 = vpop.xlane.xlu0 %6106
    %6108 = vmax.xlane.f32.xlu0 %v6023
    %v6109 = vpop.xlane.xlu0 %6108
    %6110 = vmax.xlane.f32.xlu0 %v6028
    %v6111 = vpop.xlane.xlu0 %6110
    %6112 = vmax.xlane.f32.xlu0 %v6031
    %v6113 = vpop.xlane.xlu0 %6112
    %6114 = vmax.xlane.f32.xlu0 %v6036
    %v6115 = vpop.xlane.xlu0 %6114
    %6116 = vmax.xlane.f32.xlu0 %v6039
    %v6117 = vpop.xlane.xlu0 %6116
    %6118 = vmax.xlane.f32.xlu0 %v6044
    %v6119 = vpop.xlane.xlu0 %6118
    %6120 = vmax.xlane.f32.xlu0 %v6047
    %v6121 = vpop.xlane.xlu0 %6120
    %6122 = vmax.xlane.f32.xlu0 %v6052
    %v6123 = vpop.xlane.xlu0 %6122
    %6124 = vmax.xlane.f32.xlu0 %v6055
    %v6125 = vpop.xlane.xlu0 %6124
    %6126 = vmax.xlane.f32.xlu0 %v6060
    %v6127 = vpop.xlane.xlu0 %6126
    %6128 = vmax.xlane.f32.xlu0 %v6063
    %v6129 = vpop.xlane.xlu0 %6128
    %v6130 = vsub.f32 %v5940, %v6067
    %v6131 = vsub.f32 %v5943, %v6069
    %v6132 = vsub.f32 %v5948, %v6071
    %v6133 = vsub.f32 %v5951, %v6073
    %v6134 = vsub.f32 %v5956, %v6075
    %v6135 = vsub.f32 %v5959, %v6077
    %v6136 = vsub.f32 %v5964, %v6079
    %v6137 = vsub.f32 %v5967, %v6081
    %v6138 = vsub.f32 %v5972, %v6083
    %v6139 = vsub.f32 %v5975, %v6085
    %v6140 = vsub.f32 %v5980, %v6087
    %v6141 = vsub.f32 %v5983, %v6089
    %v6142 = vsub.f32 %v5988, %v6091
    %v6143 = vsub.f32 %v5991, %v6093
    %v6144 = vsub.f32 %v5996, %v6095
    %v6145 = vsub.f32 %v5999, %v6097
    %v6146 = vsub.f32 %v6004, %v6099
    %v6147 = vsub.f32 %v6007, %v6101
    %v6148 = vsub.f32 %v6012, %v6103
    %v6149 = vsub.f32 %v6015, %v6105
    %v6150 = vsub.f32 %v6020, %v6107
    %v6151 = vsub.f32 %v6023, %v6109
    %v6152 = vsub.f32 %v6028, %v6111
    %v6153 = vsub.f32 %v6031, %v6113
    %v6154 = vsub.f32 %v6036, %v6115
    %v6155 = vsub.f32 %v6039, %v6117
    %v6156 = vsub.f32 %v6044, %v6119
    %v6157 = vsub.f32 %v6047, %v6121
    %v6158 = vsub.f32 %v6052, %v6123
    %v6159 = vsub.f32 %v6055, %v6125
    %v6160 = vsub.f32 %v6060, %v6127
    %v6161 = vsub.f32 %v6063, %v6129
    %v6162 = vmul.f32 %v6130, 1.442695
    %v6163 = vpow.pop %v6162
    %v6164 = vmul.f32 %v6131, 1.442695
    %v6165 = vpow.pop %v6164
    %v6166 = vmul.f32 %v6132, 1.442695
    %v6167 = vpow.pop %v6166
    %v6168 = vmul.f32 %v6133, 1.442695
    %v6169 = vpow.pop %v6168
    %v6170 = vmul.f32 %v6134, 1.442695
    %v6171 = vpow.pop %v6170
    %v6172 = vmul.f32 %v6135, 1.442695
    %v6173 = vpow.pop %v6172
    %v6174 = vmul.f32 %v6136, 1.442695
    %v6175 = vpow.pop %v6174
    %v6176 = vmul.f32 %v6137, 1.442695
    %v6177 = vpow.pop %v6176
    %v6178 = vmul.f32 %v6138, 1.442695
    %v6179 = vpow.pop %v6178
    %v6180 = vmul.f32 %v6139, 1.442695
    %v6181 = vpow.pop %v6180
    %v6182 = vmul.f32 %v6140, 1.442695
    %v6183 = vpow.pop %v6182
    %v6184 = vmul.f32 %v6141, 1.442695
    %v6185 = vpow.pop %v6184
    %v6186 = vmul.f32 %v6142, 1.442695
    %v6187 = vpow.pop %v6186
    %v6188 = vmul.f32 %v6143, 1.442695
    %v6189 = vpow.pop %v6188
    %v6190 = vmul.f32 %v6144, 1.442695
    %v6191 = vpow.pop %v6190
    %v6192 = vmul.f32 %v6145, 1.442695
    %v6193 = vpow.pop %v6192
    %v6194 = vmul.f32 %v6146, 1.442695
    %v6195 = vpow.pop %v6194
    %v6196 = vmul.f32 %v6147, 1.442695
    %v6197 = vpow.pop %v6196
    %v6198 = vmul.f32 %v6148, 1.442695
    %v6199 = vpow.pop %v6198
    %v6200 = vmul.f32 %v6149, 1.442695
    %v6201 = vpow.pop %v6200
    %v6202 = vmul.f32 %v6150, 1.442695
    %v6203 = vpow.pop %v6202
    %v6204 = vmul.f32 %v6151, 1.442695
    %v6205 = vpow.pop %v6204
    %v6206 = vmul.f32 %v6152, 1.442695
    %v6207 = vpow.pop %v6206
    %v6208 = vmul.f32 %v6153, 1.442695
    %v6209 = vpow.pop %v6208
    %v6210 = vmul.f32 %v6154, 1.442695
    %v6211 = vpow.pop %v6210
    %v6212 = vmul.f32 %v6155, 1.442695
    %v6213 = vpow.pop %v6212
    %v6214 = vmul.f32 %v6156, 1.442695
    %v6215 = vpow.pop %v6214
    %v6216 = vmul.f32 %v6157, 1.442695
    %v6217 = vpow.pop %v6216
    %v6218 = vmul.f32 %v6158, 1.442695
    %v6219 = vpow.pop %v6218
    %v6220 = vmul.f32 %v6159, 1.442695
    %v6221 = vpow.pop %v6220
    %v6222 = vmul.f32 %v6160, 1.442695
    %v6223 = vpow.pop %v6222
    %v6224 = vmul.f32 %v6161, 1.442695
    %v6225 = vpow.pop %v6224
    %6226 = vadd.xlane.f32.xlu0 %v6163
    %v6227 = vpop.xlane.xlu0 %6226
    %6228 = vadd.xlane.f32.xlu0 %v6165
    %v6229 = vpop.xlane.xlu0 %6228
    %6230 = vadd.xlane.f32.xlu0 %v6167
    %v6231 = vpop.xlane.xlu0 %6230
    %6232 = vadd.xlane.f32.xlu0 %v6169
    %v6233 = vpop.xlane.xlu0 %6232
    %6234 = vadd.xlane.f32.xlu0 %v6171
    %v6235 = vpop.xlane.xlu0 %6234
    %6236 = vadd.xlane.f32.xlu0 %v6173
    %v6237 = vpop.xlane.xlu0 %6236
    %6238 = vadd.xlane.f32.xlu0 %v6175
    %v6239 = vpop.xlane.xlu0 %6238
    %6240 = vadd.xlane.f32.xlu0 %v6177
    %v6241 = vpop.xlane.xlu0 %6240
    %6242 = vadd.xlane.f32.xlu0 %v6179
    %v6243 = vpop.xlane.xlu0 %6242
    %6244 = vadd.xlane.f32.xlu0 %v6181
    %v6245 = vpop.xlane.xlu0 %6244
    %6246 = vadd.xlane.f32.xlu0 %v6183
    %v6247 = vpop.xlane.xlu0 %6246
    %6248 = vadd.xlane.f32.xlu0 %v6185
    %v6249 = vpop.xlane.xlu0 %6248
    %6250 = vadd.xlane.f32.xlu0 %v6187
    %v6251 = vpop.xlane.xlu0 %6250
    %6252 = vadd.xlane.f32.xlu0 %v6189
    %v6253 = vpop.xlane.xlu0 %6252
    %6254 = vadd.xlane.f32.xlu0 %v6191
    %v6255 = vpop.xlane.xlu0 %6254
    %6256 = vadd.xlane.f32.xlu0 %v6193
    %v6257 = vpop.xlane.xlu0 %6256
    %6258 = vadd.xlane.f32.xlu0 %v6195
    %v6259 = vpop.xlane.xlu0 %6258
    %6260 = vadd.xlane.f32.xlu0 %v6197
    %v6261 = vpop.xlane.xlu0 %6260
    %6262 = vadd.xlane.f32.xlu0 %v6199
    %v6263 = vpop.xlane.xlu0 %6262
    %6264 = vadd.xlane.f32.xlu0 %v6201
    %v6265 = vpop.xlane.xlu0 %6264
    %6266 = vadd.xlane.f32.xlu0 %v6203
    %v6267 = vpop.xlane.xlu0 %6266
    %6268 = vadd.xlane.f32.xlu0 %v6205
    %v6269 = vpop.xlane.xlu0 %6268
    %6270 = vadd.xlane.f32.xlu0 %v6207
    %v6271 = vpop.xlane.xlu0 %6270
    %6272 = vadd.xlane.f32.xlu0 %v6209
    %v6273 = vpop.xlane.xlu0 %6272
    %6274 = vadd.xlane.f32.xlu0 %v6211
    %v6275 = vpop.xlane.xlu0 %6274
    %6276 = vadd.xlane.f32.xlu0 %v6213
    %v6277 = vpop.xlane.xlu0 %6276
    %6278 = vadd.xlane.f32.xlu0 %v6215
    %v6279 = vpop.xlane.xlu0 %6278
    %6280 = vadd.xlane.f32.xlu0 %v6217
    %v6281 = vpop.xlane.xlu0 %6280
    %6282 = vadd.xlane.f32.xlu0 %v6219
    %v6283 = vpop.xlane.xlu0 %6282
    %6284 = vadd.xlane.f32.xlu0 %v6221
    %v6285 = vpop.xlane.xlu0 %6284
    %6286 = vadd.xlane.f32.xlu0 %v6223
    %v6287 = vpop.xlane.xlu0 %6286
    %6288 = vadd.xlane.f32.xlu0 %v6225
    %v6289 = vpop.xlane.xlu0 %6288
    %v6290 = vrcp.pop %v6227
    %v6291 = vrcp.pop %v6229
    %v6292 = vrcp.pop %v6231
    %v6293 = vrcp.pop %v6233
    %v6294 = vrcp.pop %v6235
    %v6295 = vrcp.pop %v6237
    %v6296 = vrcp.pop %v6239
    %v6297 = vrcp.pop %v6241
    %v6298 = vrcp.pop %v6243
    %v6299 = vrcp.pop %v6245
    %v6300 = vrcp.pop %v6247
    %v6301 = vrcp.pop %v6249
    %v6302 = vrcp.pop %v6251
    %v6303 = vrcp.pop %v6253
    %v6304 = vrcp.pop %v6255
    %v6305 = vrcp.pop %v6257
    %v6306 = vrcp.pop %v6259
    %v6307 = vrcp.pop %v6261
    %v6308 = vrcp.pop %v6263
    %v6309 = vrcp.pop %v6265
    %v6310 = vrcp.pop %v6267
    %v6311 = vrcp.pop %v6269
    %v6312 = vrcp.pop %v6271
    %v6313 = vrcp.pop %v6273
    %v6314 = vrcp.pop %v6275
    %v6315 = vrcp.pop %v6277
    %v6316 = vrcp.pop %v6279
    %v6317 = vrcp.pop %v6281
    %v6318 = vrcp.pop %v6283
    %v6319 = vrcp.pop %v6285
    %v6320 = vrcp.pop %v6287
    %v6321 = vrcp.pop %v6289
    %v6322 = vmul.f32 %v6163, %v6290
    %v6323 = vmul.f32 %v6165, %v6291
    %v6324 = vmul.f32 %v6167, %v6292
    %v6325 = vmul.f32 %v6169, %v6293
    %v6326 = vmul.f32 %v6171, %v6294
    %v6327 = vmul.f32 %v6173, %v6295
    %v6328 = vmul.f32 %v6175, %v6296
    %v6329 = vmul.f32 %v6177, %v6297
    %v6330 = vmul.f32 %v6179, %v6298
    %v6331 = vmul.f32 %v6181, %v6299
    %v6332 = vmul.f32 %v6183, %v6300
    %v6333 = vmul.f32 %v6185, %v6301
    %v6334 = vmul.f32 %v6187, %v6302
    %v6335 = vmul.f32 %v6189, %v6303
    %v6336 = vmul.f32 %v6191, %v6304
    %v6337 = vmul.f32 %v6193, %v6305
    %v6338 = vmul.f32 %v6195, %v6306
    %v6339 = vmul.f32 %v6197, %v6307
    %v6340 = vmul.f32 %v6199, %v6308
    %v6341 = vmul.f32 %v6201, %v6309
    %v6342 = vmul.f32 %v6203, %v6310
    %v6343 = vmul.f32 %v6205, %v6311
    %v6344 = vmul.f32 %v6207, %v6312
    %v6345 = vmul.f32 %v6209, %v6313
    %v6346 = vmul.f32 %v6211, %v6314
    %v6347 = vmul.f32 %v6213, %v6315
    %v6348 = vmul.f32 %v6215, %v6316
    %v6349 = vmul.f32 %v6217, %v6317
    %v6350 = vmul.f32 %v6219, %v6318
    %v6351 = vmul.f32 %v6221, %v6319
    %v6352 = vmul.f32 %v6223, %v6320
    %v6353 = vmul.f32 %v6225, %v6321
    %6354 = vst [vmem:[#allocation7] sm:$0xff] %v6322
    %6355 = vst [vmem:[#allocation7 + $0x8] sm:$0xff] %v6323
    %6356 = vst [vmem:[#allocation7 + $0x10] sm:$0xff] %v6324
    %6357 = vst [vmem:[#allocation7 + $0x18] sm:$0xff] %v6325
    %6358 = vst [vmem:[#allocation7 + $0x20] sm:$0xff] %v6326
    %6359 = vst [vmem:[#allocation7 + $0x28] sm:$0xff] %v6327
    %6360 = vst [vmem:[#allocation7 + $0x30] sm:$0xff] %v6328
    %6361 = vst [vmem:[#allocation7 + $0x38] sm:$0xff] %v6329
    %6362 = vst [vmem:[#allocation7 + $0x40] sm:$0xff] %v6330
    %6363 = vst [vmem:[#allocation7 + $0x48] sm:$0xff] %v6331
    %6364 = vst [vmem:[#allocation7 + $0x50] sm:$0xff] %v6332
    %6365 = vst [vmem:[#allocation7 + $0x58] sm:$0xff] %v6333
    %6366 = vst [vmem:[#allocation7 + $0x60] sm:$0xff] %v6334
    %6367 = vst [vmem:[#allocation7 + $0x68] sm:$0xff] %v6335
    %6368 = vst [vmem:[#allocation7 + $0x70] sm:$0xff] %v6336
    %6369 = vst [vmem:[#allocation7 + $0x78] sm:$0xff] %v6337
    %6370 = vst [vmem:[#allocation7 + $0x80] sm:$0xff] %v6338
    %6371 = vst [vmem:[#allocation7 + $0x88] sm:$0xff] %v6339
    %6372 = vst [vmem:[#allocation7 + $0x90] sm:$0xff] %v6340
    %6373 = vst [vmem:[#allocation7 + $0x98] sm:$0xff] %v6341
    %6374 = vst [vmem:[#allocation7 + $0xa0] sm:$0xff] %v6342
    %6375 = vst [vmem:[#allocation7 + $0xa8] sm:$0xff] %v6343
    %6376 = vst [vmem:[#allocation7 + $0xb0] sm:$0xff] %v6344
    %6377 = vst [vmem:[#allocation7 + $0xb8] sm:$0xff] %v6345
    %6378 = vst [vmem:[#allocation7 + $0xc0] sm:$0xff] %v6346
    %6379 = vst [vmem:[#allocation7 + $0xc8] sm:$0xff] %v6347
    %6380 = vst [vmem:[#allocation7 + $0xd0] sm:$0xff] %v6348
    %6381 = vst [vmem:[#allocation7 + $0xd8] sm:$0xff] %v6349
    %6382 = vst [vmem:[#allocation7 + $0xe0] sm:$0xff] %v6350
    %6383 = vst [vmem:[#allocation7 + $0xe8] sm:$0xff] %v6351
    %6384 = vst [vmem:[#allocation7 + $0xf0] sm:$0xff] %v6352
    %6385 = vst [vmem:[#allocation7 + $0xf8] sm:$0xff] %v6353
    // Predicated region
    $region38: #{tpu_custom_call.1} parent=1 // pred_check
      _
    $region39: #{tpu_custom_call.1} parent=1 // pred_check_branch
      %6387 = sbr.rel (0) target = $region41
    $region40: #{tpu_custom_call.1} parent=1 // pred_region
      %s6389 = ssub.s32 4096, 4096
      %6390 = vsyncadd [#allocation4], %s6389
      %s6391 = sshll.u32 [#allocation7], 4
      %s6392 = int_to_ptr.vmem [resolvable:$true] %s6391
      %6397 = dma.vmem_to_hbm [thread:$0]  %s6392, 4096, %s7, [#allocation4], 128, 128, 8
    $region41: #{tpu_custom_call.1} parent=1 // pred_fallthru
      _
    // Predicated region
    $region42: #{tpu_custom_call.1} parent=1 // pred_check
      _
    $region43: #{tpu_custom_call.1} parent=1 // pred_check_branch
      %6399 = sbr.rel (0) target = $region45
    $region44: #{tpu_custom_call.1} parent=1 // pred_region
      %6400 = dma.done [#allocation4], 4096
    $region45: #{tpu_custom_call.1} parent=1 // pred_fallthru
      _
    %6401 = vsyncpa [#allocation3], 1
    %6402 = vsyncpa [#allocation6], 1
    %6403 = vsyncpa [#allocation4], 1

</llo_original>
